<compile_context>
chip_gen: v7x
topology: tpu7x:2x2x1
jax: 0.10.0
libtpu: 0.0.40
codegen_flags: <defaults>
</compile_context>

<pallas_src>
import jax
import jax.numpy as jnp
from jax.experimental import pallas as pl
from jax.experimental.pallas import tpu as pltpu

# ----------------------------- model sizes ---------------------------------
INPUT_DIM = 20      # source vocab
OUTPUT_DIM = 18     # target vocab  (decoder.output_dim)
EMB_DIM = 16
ENC_HID = 16        # per direction (bidirectional -> 32)
DEC_HID = 32

_VMEM = pl.BlockSpec(memory_space=pltpu.MemorySpace.VMEM)
_SMEM = pl.BlockSpec(memory_space=pltpu.MemorySpace.SMEM)


# ----------------------------- fused kernel --------------------------------
def seq2seq_kernel(tf_ref, len_ref, gi_ref, ewhh_ref, ebhh_ref, fcw_ref,
                   fcb_ref, tgt_ref, embd_ref, we_ref, ab_ref, v_ref,
                   whid_ref, wih_e_ref, wih_c_ref, bih_ref, bhh_ref,
                   woh_ref, woc_ref, woe_ref, bo_ref,
                   out_ref, enc_ref, eproj_ref):
    """Whole seq2seq forward in one kernel.

    tf_ref   : (T,) int32 SMEM     teacher-forcing flags (one coin per step)
    len_ref  : (B,1) int32         source sequence lengths
    gi_ref   : (S,B,6*ENC_HID)     enc input projection (+bih), both directions
                                   gate layout [r_f r_b | z_f z_b | n_f n_b]
    ewhh_ref : (2*ENC_HID,6*ENC_HID) block-diag enc recurrent weights
    whid_ref : (DEC_HID, 4*DEC_HID)  [attn_Wh | dec_Whh]  (fused hidden matmul)
    out_ref  : (T,B,OUTPUT_DIM)    outputs (row 0 stays zero, like the ref)
    enc_ref  : (B,S,2*ENC_HID)     VMEM scratch: encoder outputs, batch-major
    eproj_ref: (B,S,DEC_HID)       VMEM scratch: hoisted attention projection
    """
    S, B, G = gi_ref.shape
    H2 = G // 3                       # 2*ENC_HID (both directions)
    H = H2 // 2                       # ENC_HID
    T, _, V = out_ref.shape
    Hd = fcw_ref.shape[1]             # DEC_HID

    lens = len_ref[...]                                   # (B,1) int32

    # ---------------- encoder: fused bidirectional GRU ----------------
    ewhh = ewhh_ref[...]
    ebhh = ebhh_ref[...]
    lane = jax.lax.broadcasted_iota(jnp.int32, (B, H2), 1)
    is_fwd = lane < H                                      # fwd half of state

    h = jnp.zeros((B, H2), jnp.float32)                    # [h_fwd | h_bwd]
    for i in range(S):                # static unroll; live set is tiny
        gi = gi_ref[i]                                     # (B, 3*H2)
        gh = jnp.dot(h, ewhh, preferred_element_type=jnp.float32) + ebhh
        r = jax.nn.sigmoid(gi[:, :H2] + gh[:, :H2])
        z = jax.nn.sigmoid(gi[:, H2:2 * H2] + gh[:, H2:2 * H2])
        n = jnp.tanh(gi[:, 2 * H2:] + r * gh[:, 2 * H2:])
        h_new = (1.0 - z) * n + z * h
        # per-direction valid-time mask built in-kernel from lengths
        t_idx = jnp.where(is_fwd, i, S - 1 - i)
        m = t_idx < lens                                   # (B, H2)
        h = jnp.where(m, h_new, h)                         # carried state
        out = jnp.where(m, h_new, jnp.zeros_like(h_new))   # padded outputs = 0
        # TODO(synk): two half-width stores per step; a single full-width
        # store would require a one-time time-flip of the backward half, which
        # costs the same number of copies once the kernels are fused.
        enc_ref[:, i, :H] = out[:, :H]                     # fwd -> time i
        enc_ref[:, S - 1 - i, H:] = out[:, H:]             # bwd -> time S-1-i

    # bridge fc: decoder initial hidden = tanh([h_fwd, h_bwd] @ W + b)
    hidden = jnp.tanh(
        jnp.dot(h, fcw_ref[...], preferred_element_type=jnp.float32)
        + fcb_ref[...])                                    # (B, Hd)

    # ------------- decoder setup (once, off the serial chain) -------------
    # Hoisted encoder-side attention projection: plain 2-D MXU matmuls,
    # no broadcasted weight copy, no batched dot_general.
    we = we_ref[...]
    ab = ab_ref[...]
    for b in range(B):
        eproj_ref[b] = (jnp.dot(enc_ref[b], we,
                                preferred_element_type=jnp.float32) + ab)

    out_ref[...] = jnp.zeros(out_ref.shape, jnp.float32)   # outputs[0] = 0

    mask = (jax.lax.broadcasted_iota(jnp.int32, (B, 1, S), 2)
            < lens.reshape(B, 1, 1))                        # (B,1,S)
    v3 = jnp.broadcast_to(v_ref[...][None], (B, 1, Hd))     # hoisted broadcast
    vocab_iota = jax.lax.broadcasted_iota(jnp.int32, (B, V), 1)

    # ------------- decoder: T-1 serial steps (rolled fori_loop) -------------
    def step(t, carry):
        hidden, dec_oh = carry
        embedded = jnp.dot(dec_oh, embd_ref[...],
                           preferred_element_type=jnp.float32)       # (B,EMB)

        # ONE fused hidden-dependent matmul: hidden @ [Wh | Whh] -> (B,4*Hd)
        hq = jnp.dot(hidden, whid_ref[...],
                     preferred_element_type=jnp.float32)             # (B,128)
        h_proj = hq[:, :Hd]                                          # (B,Hd)
        gh = hq[:, Hd:] + bhh_ref[...]                               # (B,3Hd)

        # ---- attention: tanh(eproj + hWh) . v, masked softmax, context ----
        energy = jnp.tanh(eproj_ref[...] + h_proj[:, None, :])       # (B,S,Hd)
        scores = jnp.einsum('bqh,bsh->bqs', v3, energy,
                            preferred_element_type=jnp.float32)      # (B,1,S)
        scores = jnp.where(mask, scores, -1e10)
        scores = scores - jnp.max(scores, axis=-1, keepdims=True)
        e = jnp.exp(scores)
        a = e / jnp.sum(e, axis=-1, keepdims=True)                   # (B,1,S)
        ctx = jnp.einsum('bqs,bsh->bqh', a, enc_ref[...],
                         preferred_element_type=jnp.float32)[:, 0, :]  # (B,2H)

        # ---- GRU cell (PyTorch gate order r,z,n; split input weights) ----
        gi = (jnp.dot(embedded, wih_e_ref[...],
                      preferred_element_type=jnp.float32)
              + jnp.dot(ctx, wih_c_ref[...],
                        preferred_element_type=jnp.float32)
              + bih_ref[...])
        r = jax.nn.sigmoid(gi[:, :Hd] + gh[:, :Hd])
        z = jax.nn.sigmoid(gi[:, Hd:2 * Hd] + gh[:, Hd:2 * Hd])
        n = jnp.tanh(gi[:, 2 * Hd:] + r * gh[:, 2 * Hd:])
        hidden_new = (1.0 - z) * n + z * hidden

        # ---- output projection (split weights, no concatenate) ----
        pred = (jnp.dot(hidden_new, woh_ref[...],
                        preferred_element_type=jnp.float32)
                + jnp.dot(ctx, woc_ref[...],
                          preferred_element_type=jnp.float32)
                + jnp.dot(embedded, woe_ref[...],
                          preferred_element_type=jnp.float32)
                + bo_ref[...])
        out_ref[pl.ds(t, 1)] = pred[None]

        # ---- next decoder input: teacher forcing vs greedy argmax ----
        mx = jnp.max(pred, axis=-1, keepdims=True)
        first = jnp.min(jnp.where(pred >= mx, vocab_iota, V),
                        axis=-1, keepdims=True)                       # (B,1)
        oh_top1 = (vocab_iota == first).astype(jnp.float32)
        tf = (tf_ref[t] > 0).astype(jnp.float32)                      # SMEM
        dec_oh_new = tf * tgt_ref[t] + (1.0 - tf) * oh_top1
        return hidden_new, dec_oh_new

    jax.lax.fori_loop(1, T, step, (hidden, tgt_ref[0]))


# ----------------------------- parameters -----------------------------------
def init_params(key):
    def nrm(k, shape):
        return (0.1 * jax.random.normal(k, shape)).astype(jnp.float32)

    ks = iter(jax.random.split(key, 32))
    p = {
        "emb_enc": nrm(next(ks), (INPUT_DIM, EMB_DIM)),
        "emb_dec": nrm(next(ks), (OUTPUT_DIM, EMB_DIM)),
        # encoder bidirectional GRU
        "enc_wih_f": nrm(next(ks), (EMB_DIM, 3 * ENC_HID)),
        "enc_whh_f": nrm(next(ks), (ENC_HID, 3 * ENC_HID)),
        "enc_bih_f": nrm(next(ks), (1, 3 * ENC_HID)),
        "enc_bhh_f": nrm(next(ks), (1, 3 * ENC_HID)),
        "enc_wih_b": nrm(next(ks), (EMB_DIM, 3 * ENC_HID)),
        "enc_whh_b": nrm(next(ks), (ENC_HID, 3 * ENC_HID)),
        "enc_bih_b": nrm(next(ks), (1, 3 * ENC_HID)),
        "enc_bhh_b": nrm(next(ks), (1, 3 * ENC_HID)),
        # encoder hidden bridge fc: 2*ENC_HID -> DEC_HID
        "fc_w": nrm(next(ks), (2 * ENC_HID, DEC_HID)),
        "fc_b": nrm(next(ks), (1, DEC_HID)),
        # attention
        "attn_we": nrm(next(ks), (2 * ENC_HID, DEC_HID)),
        "attn_wh": nrm(next(ks), (DEC_HID, DEC_HID)),
        "attn_b": nrm(next(ks), (1, DEC_HID)),
        "attn_v": nrm(next(ks), (1, DEC_HID)),
        # decoder GRU: input = EMB_DIM + 2*ENC_HID
        "dec_wih": nrm(next(ks), (EMB_DIM + 2 * ENC_HID, 3 * DEC_HID)),
        "dec_whh": nrm(next(ks), (DEC_HID, 3 * DEC_HID)),
        "dec_bih": nrm(next(ks), (1, 3 * DEC_HID)),
        "dec_bhh": nrm(next(ks), (1, 3 * DEC_HID)),
        # fc_out: DEC_HID + 2*ENC_HID + EMB_DIM -> OUTPUT_DIM
        "fcout_w": nrm(next(ks), (DEC_HID + 2 * ENC_HID + EMB_DIM, OUTPUT_DIM)),
        "fcout_b": nrm(next(ks), (1, OUTPUT_DIM)),
    }
    return p


# --------------------- bidirectional weight stacking -------------------------
def _stack_bidir_w(wf, wb):
    """Block-diagonal stack of per-direction GRU weights with gate-interleaved
    columns: [r_f r_b | z_f z_b | n_f n_b].  (in_f+in_b, 6H)."""
    in_f, three_h = wf.shape
    in_b = wb.shape[0]
    H = three_h // 3
    zf = jnp.zeros((in_f, H), wf.dtype)
    zb = jnp.zeros((in_b, H), wb.dtype)
    cols = []
    for g in range(3):
        top = jnp.concatenate([wf[:, g * H:(g + 1) * H], zf], axis=1)
        bot = jnp.concatenate([zb, wb[:, g * H:(g + 1) * H]], axis=1)
        cols.append(jnp.concatenate([top, bot], axis=0))
    return jnp.concatenate(cols, axis=1)


def _stack_bidir_b(bf, bb):
    H = bf.shape[1] // 3
    return jnp.concatenate(
        [jnp.concatenate([bf[:, g * H:(g + 1) * H], bb[:, g * H:(g + 1) * H]],
                         axis=1) for g in range(3)], axis=1)


# ----------------------------- forward ---------------------------------------
@jax.jit
def seq2seq_forward(params, seq2seq_input, input_lengths, target,
                    teacher_forcing_ratio, rng):
    """Mirrors _Seq2Seq.forward. Returns outputs (trg_len, batch, OUTPUT_DIM)."""
    S, B = seq2seq_input.shape
    T = target.shape[0]

    # ---------- encoder-side precompute (off the serial chain) ----------
    emb = params["emb_enc"][seq2seq_input]                        # (S,B,EMB)
    emb_fb = jnp.concatenate([emb, emb[::-1]], axis=-1)           # (S,B,2*EMB)
    wih_fb = _stack_bidir_w(params["enc_wih_f"], params["enc_wih_b"])
    whh_fb = _stack_bidir_w(params["enc_whh_f"], params["enc_whh_b"])
    bih_fb = _stack_bidir_b(params["enc_bih_f"], params["enc_bih_b"])
    bhh_fb = _stack_bidir_b(params["enc_bhh_f"], params["enc_bhh_b"])
    # input projection for all timesteps & both directions in one matmul
    gi_all = jnp.einsum('sbe,eg->sbg', emb_fb, wih_fb) + bih_fb[None]

    lens = input_lengths.astype(jnp.int32).reshape(B, 1)          # in-kernel masks

    # ---------- decoder-side precompute ----------
    tgt_oh = jax.nn.one_hot(target, OUTPUT_DIM, dtype=jnp.float32)   # (T,B,V)
    # TODO(synk): torch uses host np.random per step; replaced with T
    # precomputed jax.random coin flips for the single fused kernel.
    tf_flags = (jax.random.uniform(rng, (T,)) <
                teacher_forcing_ratio).astype(jnp.int32)

    # fused hidden-dependent weight  [attn_Wh | dec_Whh]  -> (DEC_HID, 128)
    whid = jnp.concatenate([params["attn_wh"], params["dec_whh"]], axis=1)
    # row-splits so the kernel never concatenates activations
    wih_emb = params["dec_wih"][:EMB_DIM]
    wih_ctx = params["dec_wih"][EMB_DIM:]
    wo_h = params["fcout_w"][:DEC_HID]
    wo_ctx = params["fcout_w"][DEC_HID:DEC_HID + 2 * ENC_HID]
    wo_emb = params["fcout_w"][DEC_HID + 2 * ENC_HID:]

    outputs = pl.pallas_call(
        seq2seq_kernel,
        out_shape=jax.ShapeDtypeStruct((T, B, OUTPUT_DIM), jnp.float32),
        in_specs=[_SMEM] + [_VMEM] * 20,
        out_specs=_VMEM,
        scratch_shapes=[
            pltpu.VMEM((B, S, 2 * ENC_HID), jnp.float32),   # encoder outputs
            pltpu.VMEM((B, S, DEC_HID), jnp.float32),       # hoisted attn proj
        ],
    )(tf_flags, lens, gi_all, whh_fb, bhh_fb,
      params["fc_w"], params["fc_b"],
      tgt_oh, params["emb_dec"],
      params["attn_we"], params["attn_b"], params["attn_v"],
      whid, wih_emb, wih_ctx, params["dec_bih"], params["dec_bhh"],
      wo_h, wo_ctx, wo_emb, params["fcout_b"])
    return outputs


# ----------------------------- demo ------------------------------------------
if __name__ == "__main__":
    key = jax.random.PRNGKey(0)
    kp, ksrc, ktrg, krun = jax.random.split(key, 4)

    params = init_params(kp)

    SRC_LEN, TRG_LEN, BATCH = 10, 6, 2
    seq2seq_input = jax.random.randint(ksrc, (SRC_LEN, BATCH), 1, INPUT_DIM,
                                       dtype=jnp.int32)           # (S, B) tokens
    input_lengths = jnp.array([SRC_LEN, 7], dtype=jnp.int32)      # max == S
    target = jax.random.randint(ktrg, (TRG_LEN, BATCH), 0, OUTPUT_DIM,
                                dtype=jnp.int32)                  # (T, B) tokens

    outputs = seq2seq_forward(params, seq2seq_input, input_lengths, target,
                              0.5, krun)
    outputs = jax.block_until_ready(outputs)

    assert outputs.shape == (TRG_LEN, BATCH, OUTPUT_DIM)
    assert bool(jnp.all(jnp.isfinite(outputs)))
    print("KERNEL_OK")
</pallas_src>

<mosaic_0001>
module attributes {stable_mosaic.version = 11 : i64} {
  func.func @seq2seq_kernel(%arg0: memref<6xi32, #tpu.memory_space<smem>>, %arg1: memref<2x1xi32, #tpu.memory_space<vmem>>, %arg2: memref<10x2x96xf32, #tpu.memory_space<vmem>>, %arg3: memref<32x96xf32, #tpu.memory_space<vmem>>, %arg4: memref<1x96xf32, #tpu.memory_space<vmem>>, %arg5: memref<32x32xf32, #tpu.memory_space<vmem>>, %arg6: memref<1x32xf32, #tpu.memory_space<vmem>>, %arg7: memref<6x2x18xf32, #tpu.memory_space<vmem>>, %arg8: memref<18x16xf32, #tpu.memory_space<vmem>>, %arg9: memref<32x32xf32, #tpu.memory_space<vmem>>, %arg10: memref<1x32xf32, #tpu.memory_space<vmem>>, %arg11: memref<1x32xf32, #tpu.memory_space<vmem>>, %arg12: memref<32x128xf32, #tpu.memory_space<vmem>>, %arg13: memref<16x96xf32, #tpu.memory_space<vmem>>, %arg14: memref<32x96xf32, #tpu.memory_space<vmem>>, %arg15: memref<1x96xf32, #tpu.memory_space<vmem>>, %arg16: memref<1x96xf32, #tpu.memory_space<vmem>>, %arg17: memref<32x18xf32, #tpu.memory_space<vmem>>, %arg18: memref<32x18xf32, #tpu.memory_space<vmem>>, %arg19: memref<16x18xf32, #tpu.memory_space<vmem>>, %arg20: memref<1x18xf32, #tpu.memory_space<vmem>>, %arg21: memref<6x2x18xf32, #tpu.memory_space<vmem>>, %arg22: memref<2x10x32xf32, #tpu.memory_space<vmem>>, %arg23: memref<2x10x32xf32, #tpu.memory_space<vmem>>) attributes {dimension_semantics = [], scalar_prefetch = 0 : i64, scratch_operands = 2 : i64, tpu.core_type = #tpu.core_type<tc>} {
    %c0 = arith.constant 0 : index
    %c0_0 = arith.constant 0 : index
    %0 = vector.load %arg1[%c0, %c0_0] : memref<2x1xi32, #tpu.memory_space<vmem>>, vector<2x1xi32>
    %c0_1 = arith.constant 0 : index
    %c0_2 = arith.constant 0 : index
    %1 = vector.load %arg3[%c0_1, %c0_2] : memref<32x96xf32, #tpu.memory_space<vmem>>, vector<32x96xf32>
    %c0_3 = arith.constant 0 : index
    %c0_4 = arith.constant 0 : index
    %2 = vector.load %arg4[%c0_3, %c0_4] : memref<1x96xf32, #tpu.memory_space<vmem>>, vector<1x96xf32>
    %3 = tpu.iota {dimensions = array<i32: 1>} : vector<2x32xi32>
    %c16_i32 = arith.constant 16 : i32
    %4 = vector.broadcast %c16_i32 : i32 to vector<2x32xi32>
    %5 = arith.cmpi slt, %3, %4 : vector<2x32xi32>
    %cst = arith.constant 0.000000e+00 : f32
    %6 = vector.broadcast %cst : f32 to vector<2x32xf32>
    %c0_5 = arith.constant 0 : index
    %c0_6 = arith.constant 0 : index
    %c0_7 = arith.constant 0 : index
    %7 = vector.load %arg2[%c0_5, %c0_6, %c0_7] : memref<10x2x96xf32, #tpu.memory_space<vmem>>, vector<1x2x96xf32>
    %8 = vector.shape_cast %7 : vector<1x2x96xf32> to vector<2x96xf32>
    %cst_8 = arith.constant dense<0.000000e+00> : vector<2x96xf32>
    %9 = tpu.matmul %6, %1, %cst_8 {dimension_numbers = #tpu.dot_dimension_numbers<[1], [0], [0], [1], [0, 0, 1, 1], [], []>} : vector<2x32xf32>, vector<32x96xf32>, vector<2x96xf32> -> vector<2x96xf32>
    %10 = vector.broadcast %2 : vector<1x96xf32> to vector<2x96xf32>
    %11 = arith.addf %9, %10 : vector<2x96xf32>
    %12 = vector.extract_strided_slice %8 {offsets = [0, 0], sizes = [2, 32], strides = [1, 1]} : vector<2x96xf32> to vector<2x32xf32>
    %13 = vector.extract_strided_slice %11 {offsets = [0, 0], sizes = [2, 32], strides = [1, 1]} : vector<2x96xf32> to vector<2x32xf32>
    %14 = arith.addf %12, %13 : vector<2x32xf32>
    %15 = arith.negf %14 : vector<2x32xf32>
    %16 = math.exp %15 : vector<2x32xf32>
    %cst_9 = arith.constant 1.000000e+00 : f32
    %17 = vector.broadcast %cst_9 : f32 to vector<2x32xf32>
    %18 = arith.addf %17, %16 : vector<2x32xf32>
    %19 = arith.divf %17, %18 : vector<2x32xf32>
    %20 = vector.extract_strided_slice %8 {offsets = [0, 32], sizes = [2, 32], strides = [1, 1]} : vector<2x96xf32> to vector<2x32xf32>
    %21 = vector.extract_strided_slice %11 {offsets = [0, 32], sizes = [2, 32], strides = [1, 1]} : vector<2x96xf32> to vector<2x32xf32>
    %22 = arith.addf %20, %21 : vector<2x32xf32>
    %23 = arith.negf %22 : vector<2x32xf32>
    %24 = math.exp %23 : vector<2x32xf32>
    %cst_10 = arith.constant 1.000000e+00 : f32
    %25 = vector.broadcast %cst_10 : f32 to vector<2x32xf32>
    %26 = arith.addf %25, %24 : vector<2x32xf32>
    %27 = arith.divf %25, %26 : vector<2x32xf32>
    %28 = vector.extract_strided_slice %8 {offsets = [0, 64], sizes = [2, 32], strides = [1, 1]} : vector<2x96xf32> to vector<2x32xf32>
    %29 = vector.extract_strided_slice %11 {offsets = [0, 64], sizes = [2, 32], strides = [1, 1]} : vector<2x96xf32> to vector<2x32xf32>
    %30 = arith.mulf %19, %29 : vector<2x32xf32>
    %31 = arith.addf %28, %30 : vector<2x32xf32>
    %32 = math.tanh %31 : vector<2x32xf32>
    %cst_11 = arith.constant 1.000000e+00 : f32
    %33 = vector.broadcast %cst_11 : f32 to vector<2x32xf32>
    %34 = arith.subf %33, %27 : vector<2x32xf32>
    %35 = arith.mulf %34, %32 : vector<2x32xf32>
    %36 = arith.mulf %27, %6 : vector<2x32xf32>
    %37 = arith.addf %35, %36 : vector<2x32xf32>
    %c0_i32 = arith.constant 0 : i32
    %c9_i32 = arith.constant 9 : i32
    %38 = vector.broadcast %c0_i32 : i32 to vector<2x32xi32>
    %39 = vector.broadcast %c9_i32 : i32 to vector<2x32xi32>
    %40 = arith.select %5, %38, %39 : vector<2x32xi1>, vector<2x32xi32>
    %41 = vector.broadcast %0 : vector<2x1xi32> to vector<2x32xi32>
    %42 = arith.cmpi slt, %40, %41 : vector<2x32xi32>
    %43 = arith.select %42, %37, %6 : vector<2x32xi1>, vector<2x32xf32>
    %cst_12 = arith.constant 0.000000e+00 : f32
    %44 = vector.broadcast %cst_12 : f32 to vector<2x32xf32>
    %45 = arith.select %42, %37, %44 : vector<2x32xi1>, vector<2x32xf32>
    %46 = vector.extract_strided_slice %45 {offsets = [0, 0], sizes = [2, 16], strides = [1, 1]} : vector<2x32xf32> to vector<2x16xf32>
    %c0_13 = arith.constant 0 : index
    %c0_14 = arith.constant 0 : index
    %c0_15 = arith.constant 0 : index
    %47 = vector.load %arg22[%c0_13, %c0_14, %c0_15] : memref<2x10x32xf32, #tpu.memory_space<vmem>>, vector<2x1x16xf32>
    %48 = vector.shape_cast %47 : vector<2x1x16xf32> to vector<2x16xf32>
    %49 = vector.shape_cast %46 : vector<2x16xf32> to vector<2x1x16xf32>
    tpu.vector_store %arg22[%c0_13, %c0_14, %c0_15], %49 {strides = array<i32>} : memref<2x10x32xf32, #tpu.memory_space<vmem>>, vector<2x1x16xf32>,
    %50 = vector.extract_strided_slice %45 {offsets = [0, 16], sizes = [2, 16], strides = [1, 1]} : vector<2x32xf32> to vector<2x16xf32>
    %c0_16 = arith.constant 0 : index
    %c9 = arith.constant 9 : index
    %c16 = arith.constant 16 : index
    %51 = vector.load %arg22[%c0_16, %c9, %c16] : memref<2x10x32xf32, #tpu.memory_space<vmem>>, vector<2x1x16xf32>
    %52 = vector.shape_cast %51 : vector<2x1x16xf32> to vector<2x16xf32>
    %53 = vector.shape_cast %50 : vector<2x16xf32> to vector<2x1x16xf32>
    tpu.vector_store %arg22[%c0_16, %c9, %c16], %53 {strides = array<i32>} : memref<2x10x32xf32, #tpu.memory_space<vmem>>, vector<2x1x16xf32>,
    %c1 = arith.constant 1 : index
    %c0_17 = arith.constant 0 : index
    %c0_18 = arith.constant 0 : index
    %54 = vector.load %arg2[%c1, %c0_17, %c0_18] : memref<10x2x96xf32, #tpu.memory_space<vmem>>, vector<1x2x96xf32>
    %55 = vector.shape_cast %54 : vector<1x2x96xf32> to vector<2x96xf32>
    %cst_19 = arith.constant dense<0.000000e+00> : vector<2x96xf32>
    %56 = tpu.matmul %43, %1, %cst_19 {dimension_numbers = #tpu.dot_dimension_numbers<[1], [0], [0], [1], [0, 0, 1, 1], [], []>} : vector<2x32xf32>, vector<32x96xf32>, vector<2x96xf32> -> vector<2x96xf32>
    %57 = vector.broadcast %2 : vector<1x96xf32> to vector<2x96xf32>
    %58 = arith.addf %56, %57 : vector<2x96xf32>
    %59 = vector.extract_strided_slice %55 {offsets = [0, 0], sizes = [2, 32], strides = [1, 1]} : vector<2x96xf32> to vector<2x32xf32>
    %60 = vector.extract_strided_slice %58 {offsets = [0, 0], sizes = [2, 32], strides = [1, 1]} : vector<2x96xf32> to vector<2x32xf32>
    %61 = arith.addf %59, %60 : vector<2x32xf32>
    %62 = arith.negf %61 : vector<2x32xf32>
    %63 = math.exp %62 : vector<2x32xf32>
    %cst_20 = arith.constant 1.000000e+00 : f32
    %64 = vector.broadcast %cst_20 : f32 to vector<2x32xf32>
    %65 = arith.addf %64, %63 : vector<2x32xf32>
    %66 = arith.divf %64, %65 : vector<2x32xf32>
    %67 = vector.extract_strided_slice %55 {offsets = [0, 32], sizes = [2, 32], strides = [1, 1]} : vector<2x96xf32> to vector<2x32xf32>
    %68 = vector.extract_strided_slice %58 {offsets = [0, 32], sizes = [2, 32], strides = [1, 1]} : vector<2x96xf32> to vector<2x32xf32>
    %69 = arith.addf %67, %68 : vector<2x32xf32>
    %70 = arith.negf %69 : vector<2x32xf32>
    %71 = math.exp %70 : vector<2x32xf32>
    %cst_21 = arith.constant 1.000000e+00 : f32
    %72 = vector.broadcast %cst_21 : f32 to vector<2x32xf32>
    %73 = arith.addf %72, %71 : vector<2x32xf32>
    %74 = arith.divf %72, %73 : vector<2x32xf32>
    %75 = vector.extract_strided_slice %55 {offsets = [0, 64], sizes = [2, 32], strides = [1, 1]} : vector<2x96xf32> to vector<2x32xf32>
    %76 = vector.extract_strided_slice %58 {offsets = [0, 64], sizes = [2, 32], strides = [1, 1]} : vector<2x96xf32> to vector<2x32xf32>
    %77 = arith.mulf %66, %76 : vector<2x32xf32>
    %78 = arith.addf %75, %77 : vector<2x32xf32>
    %79 = math.tanh %78 : vector<2x32xf32>
    %cst_22 = arith.constant 1.000000e+00 : f32
    %80 = vector.broadcast %cst_22 : f32 to vector<2x32xf32>
    %81 = arith.subf %80, %74 : vector<2x32xf32>
    %82 = arith.mulf %81, %79 : vector<2x32xf32>
    %83 = arith.mulf %74, %43 : vector<2x32xf32>
    %84 = arith.addf %82, %83 : vector<2x32xf32>
    %c1_i32 = arith.constant 1 : i32
    %c8_i32 = arith.constant 8 : i32
    %85 = vector.broadcast %c1_i32 : i32 to vector<2x32xi32>
    %86 = vector.broadcast %c8_i32 : i32 to vector<2x32xi32>
    %87 = arith.select %5, %85, %86 : vector<2x32xi1>, vector<2x32xi32>
    %88 = vector.broadcast %0 : vector<2x1xi32> to vector<2x32xi32>
    %89 = arith.cmpi slt, %87, %88 : vector<2x32xi32>
    %90 = arith.select %89, %84, %43 : vector<2x32xi1>, vector<2x32xf32>
    %cst_23 = arith.constant 0.000000e+00 : f32
    %91 = vector.broadcast %cst_23 : f32 to vector<2x32xf32>
    %92 = arith.select %89, %84, %91 : vector<2x32xi1>, vector<2x32xf32>
    %93 = vector.extract_strided_slice %92 {offsets = [0, 0], sizes = [2, 16], strides = [1, 1]} : vector<2x32xf32> to vector<2x16xf32>
    %c0_24 = arith.constant 0 : index
    %c1_25 = arith.constant 1 : index
    %c0_26 = arith.constant 0 : index
    %94 = vector.load %arg22[%c0_24, %c1_25, %c0_26] : memref<2x10x32xf32, #tpu.memory_space<vmem>>, vector<2x1x16xf32>
    %95 = vector.shape_cast %94 : vector<2x1x16xf32> to vector<2x16xf32>
    %96 = vector.shape_cast %93 : vector<2x16xf32> to vector<2x1x16xf32>
    tpu.vector_store %arg22[%c0_24, %c1_25, %c0_26], %96 {strides = array<i32>} : memref<2x10x32xf32, #tpu.memory_space<vmem>>, vector<2x1x16xf32>,
    %97 = vector.extract_strided_slice %92 {offsets = [0, 16], sizes = [2, 16], strides = [1, 1]} : vector<2x32xf32> to vector<2x16xf32>
    %c0_27 = arith.constant 0 : index
    %c8 = arith.constant 8 : index
    %c16_28 = arith.constant 16 : index
    %98 = vector.load %arg22[%c0_27, %c8, %c16_28] : memref<2x10x32xf32, #tpu.memory_space<vmem>>, vector<2x1x16xf32>
    %99 = vector.shape_cast %98 : vector<2x1x16xf32> to vector<2x16xf32>
    %100 = vector.shape_cast %97 : vector<2x16xf32> to vector<2x1x16xf32>
    tpu.vector_store %arg22[%c0_27, %c8, %c16_28], %100 {strides = array<i32>} : memref<2x10x32xf32, #tpu.memory_space<vmem>>, vector<2x1x16xf32>,
    %c2 = arith.constant 2 : index
    %c0_29 = arith.constant 0 : index
    %c0_30 = arith.constant 0 : index
    %101 = vector.load %arg2[%c2, %c0_29, %c0_30] : memref<10x2x96xf32, #tpu.memory_space<vmem>>, vector<1x2x96xf32>
    %102 = vector.shape_cast %101 : vector<1x2x96xf32> to vector<2x96xf32>
    %cst_31 = arith.constant dense<0.000000e+00> : vector<2x96xf32>
    %103 = tpu.matmul %90, %1, %cst_31 {dimension_numbers = #tpu.dot_dimension_numbers<[1], [0], [0], [1], [0, 0, 1, 1], [], []>} : vector<2x32xf32>, vector<32x96xf32>, vector<2x96xf32> -> vector<2x96xf32>
    %104 = vector.broadcast %2 : vector<1x96xf32> to vector<2x96xf32>
    %105 = arith.addf %103, %104 : vector<2x96xf32>
    %106 = vector.extract_strided_slice %102 {offsets = [0, 0], sizes = [2, 32], strides = [1, 1]} : vector<2x96xf32> to vector<2x32xf32>
    %107 = vector.extract_strided_slice %105 {offsets = [0, 0], sizes = [2, 32], strides = [1, 1]} : vector<2x96xf32> to vector<2x32xf32>
    %108 = arith.addf %106, %107 : vector<2x32xf32>
    %109 = arith.negf %108 : vector<2x32xf32>
    %110 = math.exp %109 : vector<2x32xf32>
    %cst_32 = arith.constant 1.000000e+00 : f32
    %111 = vector.broadcast %cst_32 : f32 to vector<2x32xf32>
    %112 = arith.addf %111, %110 : vector<2x32xf32>
    %113 = arith.divf %111, %112 : vector<2x32xf32>
    %114 = vector.extract_strided_slice %102 {offsets = [0, 32], sizes = [2, 32], strides = [1, 1]} : vector<2x96xf32> to vector<2x32xf32>
    %115 = vector.extract_strided_slice %105 {offsets = [0, 32], sizes = [2, 32], strides = [1, 1]} : vector<2x96xf32> to vector<2x32xf32>
    %116 = arith.addf %114, %115 : vector<2x32xf32>
    %117 = arith.negf %116 : vector<2x32xf32>
    %118 = math.exp %117 : vector<2x32xf32>
    %cst_33 = arith.constant 1.000000e+00 : f32
    %119 = vector.broadcast %cst_33 : f32 to vector<2x32xf32>
    %120 = arith.addf %119, %118 : vector<2x32xf32>
    %121 = arith.divf %119, %120 : vector<2x32xf32>
    %122 = vector.extract_strided_slice %102 {offsets = [0, 64], sizes = [2, 32], strides = [1, 1]} : vector<2x96xf32> to vector<2x32xf32>
    %123 = vector.extract_strided_slice %105 {offsets = [0, 64], sizes = [2, 32], strides = [1, 1]} : vector<2x96xf32> to vector<2x32xf32>
    %124 = arith.mulf %113, %123 : vector<2x32xf32>
    %125 = arith.addf %122, %124 : vector<2x32xf32>
    %126 = math.tanh %125 : vector<2x32xf32>
    %cst_34 = arith.constant 1.000000e+00 : f32
    %127 = vector.broadcast %cst_34 : f32 to vector<2x32xf32>
    %128 = arith.subf %127, %121 : vector<2x32xf32>
    %129 = arith.mulf %128, %126 : vector<2x32xf32>
    %130 = arith.mulf %121, %90 : vector<2x32xf32>
    %131 = arith.addf %129, %130 : vector<2x32xf32>
    %c2_i32 = arith.constant 2 : i32
    %c7_i32 = arith.constant 7 : i32
    %132 = vector.broadcast %c2_i32 : i32 to vector<2x32xi32>
    %133 = vector.broadcast %c7_i32 : i32 to vector<2x32xi32>
    %134 = arith.select %5, %132, %133 : vector<2x32xi1>, vector<2x32xi32>
    %135 = vector.broadcast %0 : vector<2x1xi32> to vector<2x32xi32>
    %136 = arith.cmpi slt, %134, %135 : vector<2x32xi32>
    %137 = arith.select %136, %131, %90 : vector<2x32xi1>, vector<2x32xf32>
    %cst_35 = arith.constant 0.000000e+00 : f32
    %138 = vector.broadcast %cst_35 : f32 to vector<2x32xf32>
    %139 = arith.select %136, %131, %138 : vector<2x32xi1>, vector<2x32xf32>
    %140 = vector.extract_strided_slice %139 {offsets = [0, 0], sizes = [2, 16], strides = [1, 1]} : vector<2x32xf32> to vector<2x16xf32>
    %c0_36 = arith.constant 0 : index
    %c2_37 = arith.constant 2 : index
    %c0_38 = arith.constant 0 : index
    %141 = vector.load %arg22[%c0_36, %c2_37, %c0_38] : memref<2x10x32xf32, #tpu.memory_space<vmem>>, vector<2x1x16xf32>
    %142 = vector.shape_cast %141 : vector<2x1x16xf32> to vector<2x16xf32>
    %143 = vector.shape_cast %140 : vector<2x16xf32> to vector<2x1x16xf32>
    tpu.vector_store %arg22[%c0_36, %c2_37, %c0_38], %143 {strides = array<i32>} : memref<2x10x32xf32, #tpu.memory_space<vmem>>, vector<2x1x16xf32>,
    %144 = vector.extract_strided_slice %139 {offsets = [0, 16], sizes = [2, 16], strides = [1, 1]} : vector<2x32xf32> to vector<2x16xf32>
    %c0_39 = arith.constant 0 : index
    %c7 = arith.constant 7 : index
    %c16_40 = arith.constant 16 : index
    %145 = vector.load %arg22[%c0_39, %c7, %c16_40] : memref<2x10x32xf32, #tpu.memory_space<vmem>>, vector<2x1x16xf32>
    %146 = vector.shape_cast %145 : vector<2x1x16xf32> to vector<2x16xf32>
    %147 = vector.shape_cast %144 : vector<2x16xf32> to vector<2x1x16xf32>
    tpu.vector_store %arg22[%c0_39, %c7, %c16_40], %147 {strides = array<i32>} : memref<2x10x32xf32, #tpu.memory_space<vmem>>, vector<2x1x16xf32>,
    %c3 = arith.constant 3 : index
    %c0_41 = arith.constant 0 : index
    %c0_42 = arith.constant 0 : index
    %148 = vector.load %arg2[%c3, %c0_41, %c0_42] : memref<10x2x96xf32, #tpu.memory_space<vmem>>, vector<1x2x96xf32>
    %149 = vector.shape_cast %148 : vector<1x2x96xf32> to vector<2x96xf32>
    %cst_43 = arith.constant dense<0.000000e+00> : vector<2x96xf32>
    %150 = tpu.matmul %137, %1, %cst_43 {dimension_numbers = #tpu.dot_dimension_numbers<[1], [0], [0], [1], [0, 0, 1, 1], [], []>} : vector<2x32xf32>, vector<32x96xf32>, vector<2x96xf32> -> vector<2x96xf32>
    %151 = vector.broadcast %2 : vector<1x96xf32> to vector<2x96xf32>
    %152 = arith.addf %150, %151 : vector<2x96xf32>
    %153 = vector.extract_strided_slice %149 {offsets = [0, 0], sizes = [2, 32], strides = [1, 1]} : vector<2x96xf32> to vector<2x32xf32>
    %154 = vector.extract_strided_slice %152 {offsets = [0, 0], sizes = [2, 32], strides = [1, 1]} : vector<2x96xf32> to vector<2x32xf32>
    %155 = arith.addf %153, %154 : vector<2x32xf32>
    %156 = arith.negf %155 : vector<2x32xf32>
    %157 = math.exp %156 : vector<2x32xf32>
    %cst_44 = arith.constant 1.000000e+00 : f32
    %158 = vector.broadcast %cst_44 : f32 to vector<2x32xf32>
    %159 = arith.addf %158, %157 : vector<2x32xf32>
    %160 = arith.divf %158, %159 : vector<2x32xf32>
    %161 = vector.extract_strided_slice %149 {offsets = [0, 32], sizes = [2, 32], strides = [1, 1]} : vector<2x96xf32> to vector<2x32xf32>
    %162 = vector.extract_strided_slice %152 {offsets = [0, 32], sizes = [2, 32], strides = [1, 1]} : vector<2x96xf32> to vector<2x32xf32>
    %163 = arith.addf %161, %162 : vector<2x32xf32>
    %164 = arith.negf %163 : vector<2x32xf32>
    %165 = math.exp %164 : vector<2x32xf32>
    %cst_45 = arith.constant 1.000000e+00 : f32
    %166 = vector.broadcast %cst_45 : f32 to vector<2x32xf32>
    %167 = arith.addf %166, %165 : vector<2x32xf32>
    %168 = arith.divf %166, %167 : vector<2x32xf32>
    %169 = vector.extract_strided_slice %149 {offsets = [0, 64], sizes = [2, 32], strides = [1, 1]} : vector<2x96xf32> to vector<2x32xf32>
    %170 = vector.extract_strided_slice %152 {offsets = [0, 64], sizes = [2, 32], strides = [1, 1]} : vector<2x96xf32> to vector<2x32xf32>
    %171 = arith.mulf %160, %170 : vector<2x32xf32>
    %172 = arith.addf %169, %171 : vector<2x32xf32>
    %173 = math.tanh %172 : vector<2x32xf32>
    %cst_46 = arith.constant 1.000000e+00 : f32
    %174 = vector.broadcast %cst_46 : f32 to vector<2x32xf32>
    %175 = arith.subf %174, %168 : vector<2x32xf32>
    %176 = arith.mulf %175, %173 : vector<2x32xf32>
    %177 = arith.mulf %168, %137 : vector<2x32xf32>
    %178 = arith.addf %176, %177 : vector<2x32xf32>
    %c3_i32 = arith.constant 3 : i32
    %c6_i32 = arith.constant 6 : i32
    %179 = vector.broadcast %c3_i32 : i32 to vector<2x32xi32>
    %180 = vector.broadcast %c6_i32 : i32 to vector<2x32xi32>
    %181 = arith.select %5, %179, %180 : vector<2x32xi1>, vector<2x32xi32>
    %182 = vector.broadcast %0 : vector<2x1xi32> to vector<2x32xi32>
    %183 = arith.cmpi slt, %181, %182 : vector<2x32xi32>
    %184 = arith.select %183, %178, %137 : vector<2x32xi1>, vector<2x32xf32>
    %cst_47 = arith.constant 0.000000e+00 : f32
    %185 = vector.broadcast %cst_47 : f32 to vector<2x32xf32>
    %186 = arith.select %183, %178, %185 : vector<2x32xi1>, vector<2x32xf32>
    %187 = vector.extract_strided_slice %186 {offsets = [0, 0], sizes = [2, 16], strides = [1, 1]} : vector<2x32xf32> to vector<2x16xf32>
    %c0_48 = arith.constant 0 : index
    %c3_49 = arith.constant 3 : index
    %c0_50 = arith.constant 0 : index
    %188 = vector.load %arg22[%c0_48, %c3_49, %c0_50] : memref<2x10x32xf32, #tpu.memory_space<vmem>>, vector<2x1x16xf32>
    %189 = vector.shape_cast %188 : vector<2x1x16xf32> to vector<2x16xf32>
    %190 = vector.shape_cast %187 : vector<2x16xf32> to vector<2x1x16xf32>
    tpu.vector_store %arg22[%c0_48, %c3_49, %c0_50], %190 {strides = array<i32>} : memref<2x10x32xf32, #tpu.memory_space<vmem>>, vector<2x1x16xf32>,
    %191 = vector.extract_strided_slice %186 {offsets = [0, 16], sizes = [2, 16], strides = [1, 1]} : vector<2x32xf32> to vector<2x16xf32>
    %c0_51 = arith.constant 0 : index
    %c6 = arith.constant 6 : index
    %c16_52 = arith.constant 16 : index
    %192 = vector.load %arg22[%c0_51, %c6, %c16_52] : memref<2x10x32xf32, #tpu.memory_space<vmem>>, vector<2x1x16xf32>
    %193 = vector.shape_cast %192 : vector<2x1x16xf32> to vector<2x16xf32>
    %194 = vector.shape_cast %191 : vector<2x16xf32> to vector<2x1x16xf32>
    tpu.vector_store %arg22[%c0_51, %c6, %c16_52], %194 {strides = array<i32>} : memref<2x10x32xf32, #tpu.memory_space<vmem>>, vector<2x1x16xf32>,
    %c4 = arith.constant 4 : index
    %c0_53 = arith.constant 0 : index
    %c0_54 = arith.constant 0 : index
    %195 = vector.load %arg2[%c4, %c0_53, %c0_54] : memref<10x2x96xf32, #tpu.memory_space<vmem>>, vector<1x2x96xf32>
    %196 = vector.shape_cast %195 : vector<1x2x96xf32> to vector<2x96xf32>
    %cst_55 = arith.constant dense<0.000000e+00> : vector<2x96xf32>
    %197 = tpu.matmul %184, %1, %cst_55 {dimension_numbers = #tpu.dot_dimension_numbers<[1], [0], [0], [1], [0, 0, 1, 1], [], []>} : vector<2x32xf32>, vector<32x96xf32>, vector<2x96xf32> -> vector<2x96xf32>
    %198 = vector.broadcast %2 : vector<1x96xf32> to vector<2x96xf32>
    %199 = arith.addf %197, %198 : vector<2x96xf32>
    %200 = vector.extract_strided_slice %196 {offsets = [0, 0], sizes = [2, 32], strides = [1, 1]} : vector<2x96xf32> to vector<2x32xf32>
    %201 = vector.extract_strided_slice %199 {offsets = [0, 0], sizes = [2, 32], strides = [1, 1]} : vector<2x96xf32> to vector<2x32xf32>
    %202 = arith.addf %200, %201 : vector<2x32xf32>
    %203 = arith.negf %202 : vector<2x32xf32>
    %204 = math.exp %203 : vector<2x32xf32>
    %cst_56 = arith.constant 1.000000e+00 : f32
    %205 = vector.broadcast %cst_56 : f32 to vector<2x32xf32>
    %206 = arith.addf %205, %204 : vector<2x32xf32>
    %207 = arith.divf %205, %206 : vector<2x32xf32>
    %208 = vector.extract_strided_slice %196 {offsets = [0, 32], sizes = [2, 32], strides = [1, 1]} : vector<2x96xf32> to vector<2x32xf32>
    %209 = vector.extract_strided_slice %199 {offsets = [0, 32], sizes = [2, 32], strides = [1, 1]} : vector<2x96xf32> to vector<2x32xf32>
    %210 = arith.addf %208, %209 : vector<2x32xf32>
    %211 = arith.negf %210 : vector<2x32xf32>
    %212 = math.exp %211 : vector<2x32xf32>
    %cst_57 = arith.constant 1.000000e+00 : f32
    %213 = vector.broadcast %cst_57 : f32 to vector<2x32xf32>
    %214 = arith.addf %213, %212 : vector<2x32xf32>
    %215 = arith.divf %213, %214 : vector<2x32xf32>
    %216 = vector.extract_strided_slice %196 {offsets = [0, 64], sizes = [2, 32], strides = [1, 1]} : vector<2x96xf32> to vector<2x32xf32>
    %217 = vector.extract_strided_slice %199 {offsets = [0, 64], sizes = [2, 32], strides = [1, 1]} : vector<2x96xf32> to vector<2x32xf32>
    %218 = arith.mulf %207, %217 : vector<2x32xf32>
    %219 = arith.addf %216, %218 : vector<2x32xf32>
    %220 = math.tanh %219 : vector<2x32xf32>
    %cst_58 = arith.constant 1.000000e+00 : f32
    %221 = vector.broadcast %cst_58 : f32 to vector<2x32xf32>
    %222 = arith.subf %221, %215 : vector<2x32xf32>
    %223 = arith.mulf %222, %220 : vector<2x32xf32>
    %224 = arith.mulf %215, %184 : vector<2x32xf32>
    %225 = arith.addf %223, %224 : vector<2x32xf32>
    %c4_i32 = arith.constant 4 : i32
    %c5_i32 = arith.constant 5 : i32
    %226 = vector.broadcast %c4_i32 : i32 to vector<2x32xi32>
    %227 = vector.broadcast %c5_i32 : i32 to vector<2x32xi32>
    %228 = arith.select %5, %226, %227 : vector<2x32xi1>, vector<2x32xi32>
    %229 = vector.broadcast %0 : vector<2x1xi32> to vector<2x32xi32>
    %230 = arith.cmpi slt, %228, %229 : vector<2x32xi32>
    %231 = arith.select %230, %225, %184 : vector<2x32xi1>, vector<2x32xf32>
    %cst_59 = arith.constant 0.000000e+00 : f32
    %232 = vector.broadcast %cst_59 : f32 to vector<2x32xf32>
    %233 = arith.select %230, %225, %232 : vector<2x32xi1>, vector<2x32xf32>
    %234 = vector.extract_strided_slice %233 {offsets = [0, 0], sizes = [2, 16], strides = [1, 1]} : vector<2x32xf32> to vector<2x16xf32>
    %c0_60 = arith.constant 0 : index
    %c4_61 = arith.constant 4 : index
    %c0_62 = arith.constant 0 : index
    %235 = vector.load %arg22[%c0_60, %c4_61, %c0_62] : memref<2x10x32xf32, #tpu.memory_space<vmem>>, vector<2x1x16xf32>
    %236 = vector.shape_cast %235 : vector<2x1x16xf32> to vector<2x16xf32>
    %237 = vector.shape_cast %234 : vector<2x16xf32> to vector<2x1x16xf32>
    tpu.vector_store %arg22[%c0_60, %c4_61, %c0_62], %237 {strides = array<i32>} : memref<2x10x32xf32, #tpu.memory_space<vmem>>, vector<2x1x16xf32>,
    %238 = vector.extract_strided_slice %233 {offsets = [0, 16], sizes = [2, 16], strides = [1, 1]} : vector<2x32xf32> to vector<2x16xf32>
    %c0_63 = arith.constant 0 : index
    %c5 = arith.constant 5 : index
    %c16_64 = arith.constant 16 : index
    %239 = vector.load %arg22[%c0_63, %c5, %c16_64] : memref<2x10x32xf32, #tpu.memory_space<vmem>>, vector<2x1x16xf32>
    %240 = vector.shape_cast %239 : vector<2x1x16xf32> to vector<2x16xf32>
    %241 = vector.shape_cast %238 : vector<2x16xf32> to vector<2x1x16xf32>
    tpu.vector_store %arg22[%c0_63, %c5, %c16_64], %241 {strides = array<i32>} : memref<2x10x32xf32, #tpu.memory_space<vmem>>, vector<2x1x16xf32>,
    %c5_65 = arith.constant 5 : index
    %c0_66 = arith.constant 0 : index
    %c0_67 = arith.constant 0 : index
    %242 = vector.load %arg2[%c5_65, %c0_66, %c0_67] : memref<10x2x96xf32, #tpu.memory_space<vmem>>, vector<1x2x96xf32>
    %243 = vector.shape_cast %242 : vector<1x2x96xf32> to vector<2x96xf32>
    %cst_68 = arith.constant dense<0.000000e+00> : vector<2x96xf32>
    %244 = tpu.matmul %231, %1, %cst_68 {dimension_numbers = #tpu.dot_dimension_numbers<[1], [0], [0], [1], [0, 0, 1, 1], [], []>} : vector<2x32xf32>, vector<32x96xf32>, vector<2x96xf32> -> vector<2x96xf32>
    %245 = vector.broadcast %2 : vector<1x96xf32> to vector<2x96xf32>
    %246 = arith.addf %244, %245 : vector<2x96xf32>
    %247 = vector.extract_strided_slice %243 {offsets = [0, 0], sizes = [2, 32], strides = [1, 1]} : vector<2x96xf32> to vector<2x32xf32>
    %248 = vector.extract_strided_slice %246 {offsets = [0, 0], sizes = [2, 32], strides = [1, 1]} : vector<2x96xf32> to vector<2x32xf32>
    %249 = arith.addf %247, %248 : vector<2x32xf32>
    %250 = arith.negf %249 : vector<2x32xf32>
    %251 = math.exp %250 : vector<2x32xf32>
    %cst_69 = arith.constant 1.000000e+00 : f32
    %252 = vector.broadcast %cst_69 : f32 to vector<2x32xf32>
    %253 = arith.addf %252, %251 : vector<2x32xf32>
    %254 = arith.divf %252, %253 : vector<2x32xf32>
    %255 = vector.extract_strided_slice %243 {offsets = [0, 32], sizes = [2, 32], strides = [1, 1]} : vector<2x96xf32> to vector<2x32xf32>
    %256 = vector.extract_strided_slice %246 {offsets = [0, 32], sizes = [2, 32], strides = [1, 1]} : vector<2x96xf32> to vector<2x32xf32>
    %257 = arith.addf %255, %256 : vector<2x32xf32>
    %258 = arith.negf %257 : vector<2x32xf32>
    %259 = math.exp %258 : vector<2x32xf32>
    %cst_70 = arith.constant 1.000000e+00 : f32
    %260 = vector.broadcast %cst_70 : f32 to vector<2x32xf32>
    %261 = arith.addf %260, %259 : vector<2x32xf32>
    %262 = arith.divf %260, %261 : vector<2x32xf32>
    %263 = vector.extract_strided_slice %243 {offsets = [0, 64], sizes = [2, 32], strides = [1, 1]} : vector<2x96xf32> to vector<2x32xf32>
    %264 = vector.extract_strided_slice %246 {offsets = [0, 64], sizes = [2, 32], strides = [1, 1]} : vector<2x96xf32> to vector<2x32xf32>
    %265 = arith.mulf %254, %264 : vector<2x32xf32>
    %266 = arith.addf %263, %265 : vector<2x32xf32>
    %267 = math.tanh %266 : vector<2x32xf32>
    %cst_71 = arith.constant 1.000000e+00 : f32
    %268 = vector.broadcast %cst_71 : f32 to vector<2x32xf32>
    %269 = arith.subf %268, %262 : vector<2x32xf32>
    %270 = arith.mulf %269, %267 : vector<2x32xf32>
    %271 = arith.mulf %262, %231 : vector<2x32xf32>
    %272 = arith.addf %270, %271 : vector<2x32xf32>
    %c5_i32_72 = arith.constant 5 : i32
    %c4_i32_73 = arith.constant 4 : i32
    %273 = vector.broadcast %c5_i32_72 : i32 to vector<2x32xi32>
    %274 = vector.broadcast %c4_i32_73 : i32 to vector<2x32xi32>
    %275 = arith.select %5, %273, %274 : vector<2x32xi1>, vector<2x32xi32>
    %276 = vector.broadcast %0 : vector<2x1xi32> to vector<2x32xi32>
    %277 = arith.cmpi slt, %275, %276 : vector<2x32xi32>
    %278 = arith.select %277, %272, %231 : vector<2x32xi1>, vector<2x32xf32>
    %cst_74 = arith.constant 0.000000e+00 : f32
    %279 = vector.broadcast %cst_74 : f32 to vector<2x32xf32>
    %280 = arith.select %277, %272, %279 : vector<2x32xi1>, vector<2x32xf32>
    %281 = vector.extract_strided_slice %280 {offsets = [0, 0], sizes = [2, 16], strides = [1, 1]} : vector<2x32xf32> to vector<2x16xf32>
    %c0_75 = arith.constant 0 : index
    %c5_76 = arith.constant 5 : index
    %c0_77 = arith.constant 0 : index
    %282 = vector.load %arg22[%c0_75, %c5_76, %c0_77] : memref<2x10x32xf32, #tpu.memory_space<vmem>>, vector<2x1x16xf32>
    %283 = vector.shape_cast %282 : vector<2x1x16xf32> to vector<2x16xf32>
    %284 = vector.shape_cast %281 : vector<2x16xf32> to vector<2x1x16xf32>
    tpu.vector_store %arg22[%c0_75, %c5_76, %c0_77], %284 {strides = array<i32>} : memref<2x10x32xf32, #tpu.memory_space<vmem>>, vector<2x1x16xf32>,
    %285 = vector.extract_strided_slice %280 {offsets = [0, 16], sizes = [2, 16], strides = [1, 1]} : vector<2x32xf32> to vector<2x16xf32>
    %c0_78 = arith.constant 0 : index
    %c4_79 = arith.constant 4 : index
    %c16_80 = arith.constant 16 : index
    %286 = vector.load %arg22[%c0_78, %c4_79, %c16_80] : memref<2x10x32xf32, #tpu.memory_space<vmem>>, vector<2x1x16xf32>
    %287 = vector.shape_cast %286 : vector<2x1x16xf32> to vector<2x16xf32>
    %288 = vector.shape_cast %285 : vector<2x16xf32> to vector<2x1x16xf32>
    tpu.vector_store %arg22[%c0_78, %c4_79, %c16_80], %288 {strides = array<i32>} : memref<2x10x32xf32, #tpu.memory_space<vmem>>, vector<2x1x16xf32>,
    %c6_81 = arith.constant 6 : index
    %c0_82 = arith.constant 0 : index
    %c0_83 = arith.constant 0 : index
    %289 = vector.load %arg2[%c6_81, %c0_82, %c0_83] : memref<10x2x96xf32, #tpu.memory_space<vmem>>, vector<1x2x96xf32>
    %290 = vector.shape_cast %289 : vector<1x2x96xf32> to vector<2x96xf32>
    %cst_84 = arith.constant dense<0.000000e+00> : vector<2x96xf32>
    %291 = tpu.matmul %278, %1, %cst_84 {dimension_numbers = #tpu.dot_dimension_numbers<[1], [0], [0], [1], [0, 0, 1, 1], [], []>} : vector<2x32xf32>, vector<32x96xf32>, vector<2x96xf32> -> vector<2x96xf32>
    %292 = vector.broadcast %2 : vector<1x96xf32> to vector<2x96xf32>
    %293 = arith.addf %291, %292 : vector<2x96xf32>
    %294 = vector.extract_strided_slice %290 {offsets = [0, 0], sizes = [2, 32], strides = [1, 1]} : vector<2x96xf32> to vector<2x32xf32>
    %295 = vector.extract_strided_slice %293 {offsets = [0, 0], sizes = [2, 32], strides = [1, 1]} : vector<2x96xf32> to vector<2x32xf32>
    %296 = arith.addf %294, %295 : vector<2x32xf32>
    %297 = arith.negf %296 : vector<2x32xf32>
    %298 = math.exp %297 : vector<2x32xf32>
    %cst_85 = arith.constant 1.000000e+00 : f32
    %299 = vector.broadcast %cst_85 : f32 to vector<2x32xf32>
    %300 = arith.addf %299, %298 : vector<2x32xf32>
    %301 = arith.divf %299, %300 : vector<2x32xf32>
    %302 = vector.extract_strided_slice %290 {offsets = [0, 32], sizes = [2, 32], strides = [1, 1]} : vector<2x96xf32> to vector<2x32xf32>
    %303 = vector.extract_strided_slice %293 {offsets = [0, 32], sizes = [2, 32], strides = [1, 1]} : vector<2x96xf32> to vector<2x32xf32>
    %304 = arith.addf %302, %303 : vector<2x32xf32>
    %305 = arith.negf %304 : vector<2x32xf32>
    %306 = math.exp %305 : vector<2x32xf32>
    %cst_86 = arith.constant 1.000000e+00 : f32
    %307 = vector.broadcast %cst_86 : f32 to vector<2x32xf32>
    %308 = arith.addf %307, %306 : vector<2x32xf32>
    %309 = arith.divf %307, %308 : vector<2x32xf32>
    %310 = vector.extract_strided_slice %290 {offsets = [0, 64], sizes = [2, 32], strides = [1, 1]} : vector<2x96xf32> to vector<2x32xf32>
    %311 = vector.extract_strided_slice %293 {offsets = [0, 64], sizes = [2, 32], strides = [1, 1]} : vector<2x96xf32> to vector<2x32xf32>
    %312 = arith.mulf %301, %311 : vector<2x32xf32>
    %313 = arith.addf %310, %312 : vector<2x32xf32>
    %314 = math.tanh %313 : vector<2x32xf32>
    %cst_87 = arith.constant 1.000000e+00 : f32
    %315 = vector.broadcast %cst_87 : f32 to vector<2x32xf32>
    %316 = arith.subf %315, %309 : vector<2x32xf32>
    %317 = arith.mulf %316, %314 : vector<2x32xf32>
    %318 = arith.mulf %309, %278 : vector<2x32xf32>
    %319 = arith.addf %317, %318 : vector<2x32xf32>
    %c6_i32_88 = arith.constant 6 : i32
    %c3_i32_89 = arith.constant 3 : i32
    %320 = vector.broadcast %c6_i32_88 : i32 to vector<2x32xi32>
    %321 = vector.broadcast %c3_i32_89 : i32 to vector<2x32xi32>
    %322 = arith.select %5, %320, %321 : vector<2x32xi1>, vector<2x32xi32>
    %323 = vector.broadcast %0 : vector<2x1xi32> to vector<2x32xi32>
    %324 = arith.cmpi slt, %322, %323 : vector<2x32xi32>
    %325 = arith.select %324, %319, %278 : vector<2x32xi1>, vector<2x32xf32>
    %cst_90 = arith.constant 0.000000e+00 : f32
    %326 = vector.broadcast %cst_90 : f32 to vector<2x32xf32>
    %327 = arith.select %324, %319, %326 : vector<2x32xi1>, vector<2x32xf32>
    %328 = vector.extract_strided_slice %327 {offsets = [0, 0], sizes = [2, 16], strides = [1, 1]} : vector<2x32xf32> to vector<2x16xf32>
    %c0_91 = arith.constant 0 : index
    %c6_92 = arith.constant 6 : index
    %c0_93 = arith.constant 0 : index
    %329 = vector.load %arg22[%c0_91, %c6_92, %c0_93] : memref<2x10x32xf32, #tpu.memory_space<vmem>>, vector<2x1x16xf32>
    %330 = vector.shape_cast %329 : vector<2x1x16xf32> to vector<2x16xf32>
    %331 = vector.shape_cast %328 : vector<2x16xf32> to vector<2x1x16xf32>
    tpu.vector_store %arg22[%c0_91, %c6_92, %c0_93], %331 {strides = array<i32>} : memref<2x10x32xf32, #tpu.memory_space<vmem>>, vector<2x1x16xf32>,
    %332 = vector.extract_strided_slice %327 {offsets = [0, 16], sizes = [2, 16], strides = [1, 1]} : vector<2x32xf32> to vector<2x16xf32>
    %c0_94 = arith.constant 0 : index
    %c3_95 = arith.constant 3 : index
    %c16_96 = arith.constant 16 : index
    %333 = vector.load %arg22[%c0_94, %c3_95, %c16_96] : memref<2x10x32xf32, #tpu.memory_space<vmem>>, vector<2x1x16xf32>
    %334 = vector.shape_cast %333 : vector<2x1x16xf32> to vector<2x16xf32>
    %335 = vector.shape_cast %332 : vector<2x16xf32> to vector<2x1x16xf32>
    tpu.vector_store %arg22[%c0_94, %c3_95, %c16_96], %335 {strides = array<i32>} : memref<2x10x32xf32, #tpu.memory_space<vmem>>, vector<2x1x16xf32>,
    %c7_97 = arith.constant 7 : index
    %c0_98 = arith.constant 0 : index
    %c0_99 = arith.constant 0 : index
    %336 = vector.load %arg2[%c7_97, %c0_98, %c0_99] : memref<10x2x96xf32, #tpu.memory_space<vmem>>, vector<1x2x96xf32>
    %337 = vector.shape_cast %336 : vector<1x2x96xf32> to vector<2x96xf32>
    %cst_100 = arith.constant dense<0.000000e+00> : vector<2x96xf32>
    %338 = tpu.matmul %325, %1, %cst_100 {dimension_numbers = #tpu.dot_dimension_numbers<[1], [0], [0], [1], [0, 0, 1, 1], [], []>} : vector<2x32xf32>, vector<32x96xf32>, vector<2x96xf32> -> vector<2x96xf32>
    %339 = vector.broadcast %2 : vector<1x96xf32> to vector<2x96xf32>
    %340 = arith.addf %338, %339 : vector<2x96xf32>
    %341 = vector.extract_strided_slice %337 {offsets = [0, 0], sizes = [2, 32], strides = [1, 1]} : vector<2x96xf32> to vector<2x32xf32>
    %342 = vector.extract_strided_slice %340 {offsets = [0, 0], sizes = [2, 32], strides = [1, 1]} : vector<2x96xf32> to vector<2x32xf32>
    %343 = arith.addf %341, %342 : vector<2x32xf32>
    %344 = arith.negf %343 : vector<2x32xf32>
    %345 = math.exp %344 : vector<2x32xf32>
    %cst_101 = arith.constant 1.000000e+00 : f32
    %346 = vector.broadcast %cst_101 : f32 to vector<2x32xf32>
    %347 = arith.addf %346, %345 : vector<2x32xf32>
    %348 = arith.divf %346, %347 : vector<2x32xf32>
    %349 = vector.extract_strided_slice %337 {offsets = [0, 32], sizes = [2, 32], strides = [1, 1]} : vector<2x96xf32> to vector<2x32xf32>
    %350 = vector.extract_strided_slice %340 {offsets = [0, 32], sizes = [2, 32], strides = [1, 1]} : vector<2x96xf32> to vector<2x32xf32>
    %351 = arith.addf %349, %350 : vector<2x32xf32>
    %352 = arith.negf %351 : vector<2x32xf32>
    %353 = math.exp %352 : vector<2x32xf32>
    %cst_102 = arith.constant 1.000000e+00 : f32
    %354 = vector.broadcast %cst_102 : f32 to vector<2x32xf32>
    %355 = arith.addf %354, %353 : vector<2x32xf32>
    %356 = arith.divf %354, %355 : vector<2x32xf32>
    %357 = vector.extract_strided_slice %337 {offsets = [0, 64], sizes = [2, 32], strides = [1, 1]} : vector<2x96xf32> to vector<2x32xf32>
    %358 = vector.extract_strided_slice %340 {offsets = [0, 64], sizes = [2, 32], strides = [1, 1]} : vector<2x96xf32> to vector<2x32xf32>
    %359 = arith.mulf %348, %358 : vector<2x32xf32>
    %360 = arith.addf %357, %359 : vector<2x32xf32>
    %361 = math.tanh %360 : vector<2x32xf32>
    %cst_103 = arith.constant 1.000000e+00 : f32
    %362 = vector.broadcast %cst_103 : f32 to vector<2x32xf32>
    %363 = arith.subf %362, %356 : vector<2x32xf32>
    %364 = arith.mulf %363, %361 : vector<2x32xf32>
    %365 = arith.mulf %356, %325 : vector<2x32xf32>
    %366 = arith.addf %364, %365 : vector<2x32xf32>
    %c7_i32_104 = arith.constant 7 : i32
    %c2_i32_105 = arith.constant 2 : i32
    %367 = vector.broadcast %c7_i32_104 : i32 to vector<2x32xi32>
    %368 = vector.broadcast %c2_i32_105 : i32 to vector<2x32xi32>
    %369 = arith.select %5, %367, %368 : vector<2x32xi1>, vector<2x32xi32>
    %370 = vector.broadcast %0 : vector<2x1xi32> to vector<2x32xi32>
    %371 = arith.cmpi slt, %369, %370 : vector<2x32xi32>
    %372 = arith.select %371, %366, %325 : vector<2x32xi1>, vector<2x32xf32>
    %cst_106 = arith.constant 0.000000e+00 : f32
    %373 = vector.broadcast %cst_106 : f32 to vector<2x32xf32>
    %374 = arith.select %371, %366, %373 : vector<2x32xi1>, vector<2x32xf32>
    %375 = vector.extract_strided_slice %374 {offsets = [0, 0], sizes = [2, 16], strides = [1, 1]} : vector<2x32xf32> to vector<2x16xf32>
    %c0_107 = arith.constant 0 : index
    %c7_108 = arith.constant 7 : index
    %c0_109 = arith.constant 0 : index
    %376 = vector.load %arg22[%c0_107, %c7_108, %c0_109] : memref<2x10x32xf32, #tpu.memory_space<vmem>>, vector<2x1x16xf32>
    %377 = vector.shape_cast %376 : vector<2x1x16xf32> to vector<2x16xf32>
    %378 = vector.shape_cast %375 : vector<2x16xf32> to vector<2x1x16xf32>
    tpu.vector_store %arg22[%c0_107, %c7_108, %c0_109], %378 {strides = array<i32>} : memref<2x10x32xf32, #tpu.memory_space<vmem>>, vector<2x1x16xf32>,
    %379 = vector.extract_strided_slice %374 {offsets = [0, 16], sizes = [2, 16], strides = [1, 1]} : vector<2x32xf32> to vector<2x16xf32>
    %c0_110 = arith.constant 0 : index
    %c2_111 = arith.constant 2 : index
    %c16_112 = arith.constant 16 : index
    %380 = vector.load %arg22[%c0_110, %c2_111, %c16_112] : memref<2x10x32xf32, #tpu.memory_space<vmem>>, vector<2x1x16xf32>
    %381 = vector.shape_cast %380 : vector<2x1x16xf32> to vector<2x16xf32>
    %382 = vector.shape_cast %379 : vector<2x16xf32> to vector<2x1x16xf32>
    tpu.vector_store %arg22[%c0_110, %c2_111, %c16_112], %382 {strides = array<i32>} : memref<2x10x32xf32, #tpu.memory_space<vmem>>, vector<2x1x16xf32>,
    %c8_113 = arith.constant 8 : index
    %c0_114 = arith.constant 0 : index
    %c0_115 = arith.constant 0 : index
    %383 = vector.load %arg2[%c8_113, %c0_114, %c0_115] : memref<10x2x96xf32, #tpu.memory_space<vmem>>, vector<1x2x96xf32>
    %384 = vector.shape_cast %383 : vector<1x2x96xf32> to vector<2x96xf32>
    %cst_116 = arith.constant dense<0.000000e+00> : vector<2x96xf32>
    %385 = tpu.matmul %372, %1, %cst_116 {dimension_numbers = #tpu.dot_dimension_numbers<[1], [0], [0], [1], [0, 0, 1, 1], [], []>} : vector<2x32xf32>, vector<32x96xf32>, vector<2x96xf32> -> vector<2x96xf32>
    %386 = vector.broadcast %2 : vector<1x96xf32> to vector<2x96xf32>
    %387 = arith.addf %385, %386 : vector<2x96xf32>
    %388 = vector.extract_strided_slice %384 {offsets = [0, 0], sizes = [2, 32], strides = [1, 1]} : vector<2x96xf32> to vector<2x32xf32>
    %389 = vector.extract_strided_slice %387 {offsets = [0, 0], sizes = [2, 32], strides = [1, 1]} : vector<2x96xf32> to vector<2x32xf32>
    %390 = arith.addf %388, %389 : vector<2x32xf32>
    %391 = arith.negf %390 : vector<2x32xf32>
    %392 = math.exp %391 : vector<2x32xf32>
    %cst_117 = arith.constant 1.000000e+00 : f32
    %393 = vector.broadcast %cst_117 : f32 to vector<2x32xf32>
    %394 = arith.addf %393, %392 : vector<2x32xf32>
    %395 = arith.divf %393, %394 : vector<2x32xf32>
    %396 = vector.extract_strided_slice %384 {offsets = [0, 32], sizes = [2, 32], strides = [1, 1]} : vector<2x96xf32> to vector<2x32xf32>
    %397 = vector.extract_strided_slice %387 {offsets = [0, 32], sizes = [2, 32], strides = [1, 1]} : vector<2x96xf32> to vector<2x32xf32>
    %398 = arith.addf %396, %397 : vector<2x32xf32>
    %399 = arith.negf %398 : vector<2x32xf32>
    %400 = math.exp %399 : vector<2x32xf32>
    %cst_118 = arith.constant 1.000000e+00 : f32
    %401 = vector.broadcast %cst_118 : f32 to vector<2x32xf32>
    %402 = arith.addf %401, %400 : vector<2x32xf32>
    %403 = arith.divf %401, %402 : vector<2x32xf32>
    %404 = vector.extract_strided_slice %384 {offsets = [0, 64], sizes = [2, 32], strides = [1, 1]} : vector<2x96xf32> to vector<2x32xf32>
    %405 = vector.extract_strided_slice %387 {offsets = [0, 64], sizes = [2, 32], strides = [1, 1]} : vector<2x96xf32> to vector<2x32xf32>
    %406 = arith.mulf %395, %405 : vector<2x32xf32>
    %407 = arith.addf %404, %406 : vector<2x32xf32>
    %408 = math.tanh %407 : vector<2x32xf32>
    %cst_119 = arith.constant 1.000000e+00 : f32
    %409 = vector.broadcast %cst_119 : f32 to vector<2x32xf32>
    %410 = arith.subf %409, %403 : vector<2x32xf32>
    %411 = arith.mulf %410, %408 : vector<2x32xf32>
    %412 = arith.mulf %403, %372 : vector<2x32xf32>
    %413 = arith.addf %411, %412 : vector<2x32xf32>
    %c8_i32_120 = arith.constant 8 : i32
    %c1_i32_121 = arith.constant 1 : i32
    %414 = vector.broadcast %c8_i32_120 : i32 to vector<2x32xi32>
    %415 = vector.broadcast %c1_i32_121 : i32 to vector<2x32xi32>
    %416 = arith.select %5, %414, %415 : vector<2x32xi1>, vector<2x32xi32>
    %417 = vector.broadcast %0 : vector<2x1xi32> to vector<2x32xi32>
    %418 = arith.cmpi slt, %416, %417 : vector<2x32xi32>
    %419 = arith.select %418, %413, %372 : vector<2x32xi1>, vector<2x32xf32>
    %cst_122 = arith.constant 0.000000e+00 : f32
    %420 = vector.broadcast %cst_122 : f32 to vector<2x32xf32>
    %421 = arith.select %418, %413, %420 : vector<2x32xi1>, vector<2x32xf32>
    %422 = vector.extract_strided_slice %421 {offsets = [0, 0], sizes = [2, 16], strides = [1, 1]} : vector<2x32xf32> to vector<2x16xf32>
    %c0_123 = arith.constant 0 : index
    %c8_124 = arith.constant 8 : index
    %c0_125 = arith.constant 0 : index
    %423 = vector.load %arg22[%c0_123, %c8_124, %c0_125] : memref<2x10x32xf32, #tpu.memory_space<vmem>>, vector<2x1x16xf32>
    %424 = vector.shape_cast %423 : vector<2x1x16xf32> to vector<2x16xf32>
    %425 = vector.shape_cast %422 : vector<2x16xf32> to vector<2x1x16xf32>
    tpu.vector_store %arg22[%c0_123, %c8_124, %c0_125], %425 {strides = array<i32>} : memref<2x10x32xf32, #tpu.memory_space<vmem>>, vector<2x1x16xf32>,
    %426 = vector.extract_strided_slice %421 {offsets = [0, 16], sizes = [2, 16], strides = [1, 1]} : vector<2x32xf32> to vector<2x16xf32>
    %c0_126 = arith.constant 0 : index
    %c1_127 = arith.constant 1 : index
    %c16_128 = arith.constant 16 : index
    %427 = vector.load %arg22[%c0_126, %c1_127, %c16_128] : memref<2x10x32xf32, #tpu.memory_space<vmem>>, vector<2x1x16xf32>
    %428 = vector.shape_cast %427 : vector<2x1x16xf32> to vector<2x16xf32>
    %429 = vector.shape_cast %426 : vector<2x16xf32> to vector<2x1x16xf32>
    tpu.vector_store %arg22[%c0_126, %c1_127, %c16_128], %429 {strides = array<i32>} : memref<2x10x32xf32, #tpu.memory_space<vmem>>, vector<2x1x16xf32>,
    %c9_129 = arith.constant 9 : index
    %c0_130 = arith.constant 0 : index
    %c0_131 = arith.constant 0 : index
    %430 = vector.load %arg2[%c9_129, %c0_130, %c0_131] : memref<10x2x96xf32, #tpu.memory_space<vmem>>, vector<1x2x96xf32>
    %431 = vector.shape_cast %430 : vector<1x2x96xf32> to vector<2x96xf32>
    %cst_132 = arith.constant dense<0.000000e+00> : vector<2x96xf32>
    %432 = tpu.matmul %419, %1, %cst_132 {dimension_numbers = #tpu.dot_dimension_numbers<[1], [0], [0], [1], [0, 0, 1, 1], [], []>} : vector<2x32xf32>, vector<32x96xf32>, vector<2x96xf32> -> vector<2x96xf32>
    %433 = vector.broadcast %2 : vector<1x96xf32> to vector<2x96xf32>
    %434 = arith.addf %432, %433 : vector<2x96xf32>
    %435 = vector.extract_strided_slice %431 {offsets = [0, 0], sizes = [2, 32], strides = [1, 1]} : vector<2x96xf32> to vector<2x32xf32>
    %436 = vector.extract_strided_slice %434 {offsets = [0, 0], sizes = [2, 32], strides = [1, 1]} : vector<2x96xf32> to vector<2x32xf32>
    %437 = arith.addf %435, %436 : vector<2x32xf32>
    %438 = arith.negf %437 : vector<2x32xf32>
    %439 = math.exp %438 : vector<2x32xf32>
    %cst_133 = arith.constant 1.000000e+00 : f32
    %440 = vector.broadcast %cst_133 : f32 to vector<2x32xf32>
    %441 = arith.addf %440, %439 : vector<2x32xf32>
    %442 = arith.divf %440, %441 : vector<2x32xf32>
    %443 = vector.extract_strided_slice %431 {offsets = [0, 32], sizes = [2, 32], strides = [1, 1]} : vector<2x96xf32> to vector<2x32xf32>
    %444 = vector.extract_strided_slice %434 {offsets = [0, 32], sizes = [2, 32], strides = [1, 1]} : vector<2x96xf32> to vector<2x32xf32>
    %445 = arith.addf %443, %444 : vector<2x32xf32>
    %446 = arith.negf %445 : vector<2x32xf32>
    %447 = math.exp %446 : vector<2x32xf32>
    %cst_134 = arith.constant 1.000000e+00 : f32
    %448 = vector.broadcast %cst_134 : f32 to vector<2x32xf32>
    %449 = arith.addf %448, %447 : vector<2x32xf32>
    %450 = arith.divf %448, %449 : vector<2x32xf32>
    %451 = vector.extract_strided_slice %431 {offsets = [0, 64], sizes = [2, 32], strides = [1, 1]} : vector<2x96xf32> to vector<2x32xf32>
    %452 = vector.extract_strided_slice %434 {offsets = [0, 64], sizes = [2, 32], strides = [1, 1]} : vector<2x96xf32> to vector<2x32xf32>
    %453 = arith.mulf %442, %452 : vector<2x32xf32>
    %454 = arith.addf %451, %453 : vector<2x32xf32>
    %455 = math.tanh %454 : vector<2x32xf32>
    %cst_135 = arith.constant 1.000000e+00 : f32
    %456 = vector.broadcast %cst_135 : f32 to vector<2x32xf32>
    %457 = arith.subf %456, %450 : vector<2x32xf32>
    %458 = arith.mulf %457, %455 : vector<2x32xf32>
    %459 = arith.mulf %450, %419 : vector<2x32xf32>
    %460 = arith.addf %458, %459 : vector<2x32xf32>
    %c9_i32_136 = arith.constant 9 : i32
    %c0_i32_137 = arith.constant 0 : i32
    %461 = vector.broadcast %c9_i32_136 : i32 to vector<2x32xi32>
    %462 = vector.broadcast %c0_i32_137 : i32 to vector<2x32xi32>
    %463 = arith.select %5, %461, %462 : vector<2x32xi1>, vector<2x32xi32>
    %464 = vector.broadcast %0 : vector<2x1xi32> to vector<2x32xi32>
    %465 = arith.cmpi slt, %463, %464 : vector<2x32xi32>
    %466 = arith.select %465, %460, %419 : vector<2x32xi1>, vector<2x32xf32>
    %cst_138 = arith.constant 0.000000e+00 : f32
    %467 = vector.broadcast %cst_138 : f32 to vector<2x32xf32>
    %468 = arith.select %465, %460, %467 : vector<2x32xi1>, vector<2x32xf32>
    %469 = vector.extract_strided_slice %468 {offsets = [0, 0], sizes = [2, 16], strides = [1, 1]} : vector<2x32xf32> to vector<2x16xf32>
    %c0_139 = arith.constant 0 : index
    %c9_140 = arith.constant 9 : index
    %c0_141 = arith.constant 0 : index
    %470 = vector.load %arg22[%c0_139, %c9_140, %c0_141] : memref<2x10x32xf32, #tpu.memory_space<vmem>>, vector<2x1x16xf32>
    %471 = vector.shape_cast %470 : vector<2x1x16xf32> to vector<2x16xf32>
    %472 = vector.shape_cast %469 : vector<2x16xf32> to vector<2x1x16xf32>
    tpu.vector_store %arg22[%c0_139, %c9_140, %c0_141], %472 {strides = array<i32>} : memref<2x10x32xf32, #tpu.memory_space<vmem>>, vector<2x1x16xf32>,
    %473 = vector.extract_strided_slice %468 {offsets = [0, 16], sizes = [2, 16], strides = [1, 1]} : vector<2x32xf32> to vector<2x16xf32>
    %c0_142 = arith.constant 0 : index
    %c0_143 = arith.constant 0 : index
    %c16_144 = arith.constant 16 : index
    %474 = vector.load %arg22[%c0_142, %c0_143, %c16_144] : memref<2x10x32xf32, #tpu.memory_space<vmem>>, vector<2x1x16xf32>
    %475 = vector.shape_cast %474 : vector<2x1x16xf32> to vector<2x16xf32>
    %476 = vector.shape_cast %473 : vector<2x16xf32> to vector<2x1x16xf32>
    tpu.vector_store %arg22[%c0_142, %c0_143, %c16_144], %476 {strides = array<i32>} : memref<2x10x32xf32, #tpu.memory_space<vmem>>, vector<2x1x16xf32>,
    %c0_145 = arith.constant 0 : index
    %c0_146 = arith.constant 0 : index
    %477 = vector.load %arg5[%c0_145, %c0_146] : memref<32x32xf32, #tpu.memory_space<vmem>>, vector<32x32xf32>
    %cst_147 = arith.constant dense<0.000000e+00> : vector<2x32xf32>
    %478 = tpu.matmul %466, %477, %cst_147 {dimension_numbers = #tpu.dot_dimension_numbers<[1], [0], [0], [1], [0, 0, 1, 1], [], []>} : vector<2x32xf32>, vector<32x32xf32>, vector<2x32xf32> -> vector<2x32xf32>
    %c0_148 = arith.constant 0 : index
    %c0_149 = arith.constant 0 : index
    %479 = vector.load %arg6[%c0_148, %c0_149] : memref<1x32xf32, #tpu.memory_space<vmem>>, vector<1x32xf32>
    %480 = vector.broadcast %479 : vector<1x32xf32> to vector<2x32xf32>
    %481 = arith.addf %478, %480 : vector<2x32xf32>
    %482 = math.tanh %481 : vector<2x32xf32>
    %c0_150 = arith.constant 0 : index
    %c0_151 = arith.constant 0 : index
    %483 = vector.load %arg9[%c0_150, %c0_151] : memref<32x32xf32, #tpu.memory_space<vmem>>, vector<32x32xf32>
    %c0_152 = arith.constant 0 : index
    %c0_153 = arith.constant 0 : index
    %484 = vector.load %arg10[%c0_152, %c0_153] : memref<1x32xf32, #tpu.memory_space<vmem>>, vector<1x32xf32>
    %c0_154 = arith.constant 0 : index
    %c0_155 = arith.constant 0 : index
    %c0_156 = arith.constant 0 : index
    %485 = vector.load %arg22[%c0_154, %c0_155, %c0_156] : memref<2x10x32xf32, #tpu.memory_space<vmem>>, vector<1x10x32xf32>
    %486 = vector.shape_cast %485 : vector<1x10x32xf32> to vector<10x32xf32>
    %cst_157 = arith.constant dense<0.000000e+00> : vector<10x32xf32>
    %487 = tpu.matmul %486, %483, %cst_157 {dimension_numbers = #tpu.dot_dimension_numbers<[1], [0], [0], [1], [0, 0, 1, 1], [], []>} : vector<10x32xf32>, vector<32x32xf32>, vector<10x32xf32> -> vector<10x32xf32>
    %488 = vector.broadcast %484 : vector<1x32xf32> to vector<10x32xf32>
    %489 = arith.addf %487, %488 : vector<10x32xf32>
    %c0_158 = arith.constant 0 : index
    %c0_159 = arith.constant 0 : index
    %c0_160 = arith.constant 0 : index
    %490 = vector.load %arg23[%c0_158, %c0_159, %c0_160] : memref<2x10x32xf32, #tpu.memory_space<vmem>>, vector<1x10x32xf32>
    %491 = vector.shape_cast %490 : vector<1x10x32xf32> to vector<10x32xf32>
    %492 = vector.shape_cast %489 : vector<10x32xf32> to vector<1x10x32xf32>
    tpu.vector_store %arg23[%c0_158, %c0_159, %c0_160], %492 {strides = array<i32>} : memref<2x10x32xf32, #tpu.memory_space<vmem>>, vector<1x10x32xf32>,
    %c1_161 = arith.constant 1 : index
    %c0_162 = arith.constant 0 : index
    %c0_163 = arith.constant 0 : index
    %493 = vector.load %arg22[%c1_161, %c0_162, %c0_163] : memref<2x10x32xf32, #tpu.memory_space<vmem>>, vector<1x10x32xf32>
    %494 = vector.shape_cast %493 : vector<1x10x32xf32> to vector<10x32xf32>
    %cst_164 = arith.constant dense<0.000000e+00> : vector<10x32xf32>
    %495 = tpu.matmul %494, %483, %cst_164 {dimension_numbers = #tpu.dot_dimension_numbers<[1], [0], [0], [1], [0, 0, 1, 1], [], []>} : vector<10x32xf32>, vector<32x32xf32>, vector<10x32xf32> -> vector<10x32xf32>
    %496 = vector.broadcast %484 : vector<1x32xf32> to vector<10x32xf32>
    %497 = arith.addf %495, %496 : vector<10x32xf32>
    %c1_165 = arith.constant 1 : index
    %c0_166 = arith.constant 0 : index
    %c0_167 = arith.constant 0 : index
    %498 = vector.load %arg23[%c1_165, %c0_166, %c0_167] : memref<2x10x32xf32, #tpu.memory_space<vmem>>, vector<1x10x32xf32>
    %499 = vector.shape_cast %498 : vector<1x10x32xf32> to vector<10x32xf32>
    %500 = vector.shape_cast %497 : vector<10x32xf32> to vector<1x10x32xf32>
    tpu.vector_store %arg23[%c1_165, %c0_166, %c0_167], %500 {strides = array<i32>} : memref<2x10x32xf32, #tpu.memory_space<vmem>>, vector<1x10x32xf32>,
    %cst_168 = arith.constant 0.000000e+00 : f32
    %501 = vector.broadcast %cst_168 : f32 to vector<6x2x18xf32>
    %c0_169 = arith.constant 0 : index
    %c0_170 = arith.constant 0 : index
    %c0_171 = arith.constant 0 : index
    %502 = vector.load %arg21[%c0_169, %c0_170, %c0_171] : memref<6x2x18xf32, #tpu.memory_space<vmem>>, vector<6x2x18xf32>
    tpu.vector_store %arg21[%c0_169, %c0_170, %c0_171], %501 {strides = array<i32>} : memref<6x2x18xf32, #tpu.memory_space<vmem>>, vector<6x2x18xf32>,
    %503 = tpu.iota {dimensions = array<i32: 2>} : vector<2x1x10xi32>
    %504 = vector.shape_cast %0 : vector<2x1xi32> to vector<2x1x1xi32>
    %505 = vector.broadcast %504 : vector<2x1x1xi32> to vector<2x1x10xi32>
    %506 = arith.cmpi slt, %503, %505 : vector<2x1x10xi32>
    %c0_172 = arith.constant 0 : index
    %c0_173 = arith.constant 0 : index
    %507 = vector.load %arg11[%c0_172, %c0_173] : memref<1x32xf32, #tpu.memory_space<vmem>>, vector<1x32xf32>
    %508 = vector.shape_cast %507 : vector<1x32xf32> to vector<1x1x32xf32>
    %509 = vector.shape_cast %508 : vector<1x1x32xf32> to vector<1x1x32xf32>
    %510 = vector.broadcast %509 : vector<1x1x32xf32> to vector<2x1x32xf32>
    %511 = tpu.iota {dimensions = array<i32: 1>} : vector<2x18xi32>
    %c0_174 = arith.constant 0 : index
    %c0_175 = arith.constant 0 : index
    %c0_176 = arith.constant 0 : index
    %512 = vector.load %arg7[%c0_174, %c0_175, %c0_176] : memref<6x2x18xf32, #tpu.memory_space<vmem>>, vector<1x2x18xf32>
    %513 = vector.shape_cast %512 : vector<1x2x18xf32> to vector<2x18xf32>
    %c1_i32_177 = arith.constant 1 : i32
    %c5_i32_178 = arith.constant 5 : i32
    %514 = arith.addi %c1_i32_177, %c5_i32_178 : i32
    %c1_i32_179 = arith.constant 1 : i32
    %515:2 = scf.for %arg24 = %c1_i32_177 to %514 step %c1_i32_179 iter_args(%arg25 = %482, %arg26 = %513) -> (vector<2x32xf32>, vector<2x18xf32>)  : i32 {
      %c0_181 = arith.constant 0 : index
      %c0_182 = arith.constant 0 : index
      %516 = vector.load %arg8[%c0_181, %c0_182] : memref<18x16xf32, #tpu.memory_space<vmem>>, vector<18x16xf32>
      %cst_183 = arith.constant dense<0.000000e+00> : vector<2x16xf32>
      %517 = tpu.matmul %arg26, %516, %cst_183 {dimension_numbers = #tpu.dot_dimension_numbers<[1], [0], [0], [1], [0, 0, 1, 1], [], []>} : vector<2x18xf32>, vector<18x16xf32>, vector<2x16xf32> -> vector<2x16xf32>
      %c0_184 = arith.constant 0 : index
      %c0_185 = arith.constant 0 : index
      %518 = vector.load %arg12[%c0_184, %c0_185] : memref<32x128xf32, #tpu.memory_space<vmem>>, vector<32x128xf32>
      %cst_186 = arith.constant dense<0.000000e+00> : vector<2x128xf32>
      %519 = tpu.matmul %arg25, %518, %cst_186 {dimension_numbers = #tpu.dot_dimension_numbers<[1], [0], [0], [1], [0, 0, 1, 1], [], []>} : vector<2x32xf32>, vector<32x128xf32>, vector<2x128xf32> -> vector<2x128xf32>
      %520 = vector.extract_strided_slice %519 {offsets = [0, 0], sizes = [2, 32], strides = [1, 1]} : vector<2x128xf32> to vector<2x32xf32>
      %521 = vector.extract_strided_slice %519 {offsets = [0, 32], sizes = [2, 96], strides = [1, 1]} : vector<2x128xf32> to vector<2x96xf32>
      %c0_187 = arith.constant 0 : index
      %c0_188 = arith.constant 0 : index
      %522 = vector.load %arg16[%c0_187, %c0_188] : memref<1x96xf32, #tpu.memory_space<vmem>>, vector<1x96xf32>
      %523 = vector.broadcast %522 : vector<1x96xf32> to vector<2x96xf32>
      %524 = arith.addf %521, %523 : vector<2x96xf32>
      %c0_189 = arith.constant 0 : index
      %c0_190 = arith.constant 0 : index
      %c0_191 = arith.constant 0 : index
      %525 = vector.load %arg23[%c0_189, %c0_190, %c0_191] : memref<2x10x32xf32, #tpu.memory_space<vmem>>, vector<2x10x32xf32>
      %526 = vector.shape_cast %520 : vector<2x32xf32> to vector<2x1x32xf32>
      %527 = vector.broadcast %526 : vector<2x1x32xf32> to vector<2x10x32xf32>
      %528 = arith.addf %525, %527 : vector<2x10x32xf32>
      %529 = math.tanh %528 : vector<2x10x32xf32>
      "tpu.trace_start"() <{level = 10 : i32, message = "bqh,bsh->bqs"}> : () -> ()
      %cst_192 = arith.constant dense<0.000000e+00> : vector<2x1x10xf32>
      %530 = tpu.matmul %510, %529, %cst_192 {dimension_numbers = #tpu.dot_dimension_numbers<[2], [2], [1], [1], [0, 0, 0, 1, 1, 1], [0], [0]>} : vector<2x1x32xf32>, vector<2x10x32xf32>, vector<2x1x10xf32> -> vector<2x1x10xf32>
      %cst_193 = arith.constant -1.000000e+10 : f32
      "tpu.trace_stop"() : () -> ()
      %531 = vector.broadcast %cst_193 : f32 to vector<2x1x10xf32>
      %532 = arith.select %506, %530, %531 : vector<2x1x10xi1>, vector<2x1x10xf32>
      %cst_194 = arith.constant dense<0xFF800000> : vector<2x1xf32>
      %533 = vector.multi_reduction <maximumf>, %532, %cst_194 [2] : vector<2x1x10xf32> to vector<2x1xf32>
      %534 = vector.shape_cast %533 : vector<2x1xf32> to vector<2x1x1xf32>
      %535 = vector.broadcast %534 : vector<2x1x1xf32> to vector<2x1x10xf32>
      %536 = arith.subf %532, %535 : vector<2x1x10xf32>
      %537 = math.exp %536 : vector<2x1x10xf32>
      %cst_195 = arith.constant dense<0.000000e+00> : vector<2x1xf32>
      %538 = vector.multi_reduction <add>, %537, %cst_195 [2] : vector<2x1x10xf32> to vector<2x1xf32>
      %539 = vector.shape_cast %538 : vector<2x1xf32> to vector<2x1x1xf32>
      %540 = vector.broadcast %539 : vector<2x1x1xf32> to vector<2x1x10xf32>
      %541 = arith.divf %537, %540 : vector<2x1x10xf32>
      %c0_196 = arith.constant 0 : index
      %c0_197 = arith.constant 0 : index
      %c0_198 = arith.constant 0 : index
      %542 = vector.load %arg22[%c0_196, %c0_197, %c0_198] : memref<2x10x32xf32, #tpu.memory_space<vmem>>, vector<2x10x32xf32>
      "tpu.trace_start"() <{level = 10 : i32, message = "bqs,bsh->bqh"}> : () -> ()
      %cst_199 = arith.constant dense<0.000000e+00> : vector<2x1x32xf32>
      %543 = tpu.matmul %541, %542, %cst_199 {dimension_numbers = #tpu.dot_dimension_numbers<[2], [1], [1], [2], [0, 0, 0, 1, 1, 2], [0], [0]>} : vector<2x1x10xf32>, vector<2x10x32xf32>, vector<2x1x32xf32> -> vector<2x1x32xf32>
      "tpu.trace_stop"() : () -> ()
      %544 = vector.shape_cast %543 : vector<2x1x32xf32> to vector<2x32xf32>
      %c0_200 = arith.constant 0 : index
      %c0_201 = arith.constant 0 : index
      %545 = vector.load %arg13[%c0_200, %c0_201] : memref<16x96xf32, #tpu.memory_space<vmem>>, vector<16x96xf32>
      %cst_202 = arith.constant dense<0.000000e+00> : vector<2x96xf32>
      %546 = tpu.matmul %517, %545, %cst_202 {dimension_numbers = #tpu.dot_dimension_numbers<[1], [0], [0], [1], [0, 0, 1, 1], [], []>} : vector<2x16xf32>, vector<16x96xf32>, vector<2x96xf32> -> vector<2x96xf32>
      %c0_203 = arith.constant 0 : index
      %c0_204 = arith.constant 0 : index
      %547 = vector.load %arg14[%c0_203, %c0_204] : memref<32x96xf32, #tpu.memory_space<vmem>>, vector<32x96xf32>
      %cst_205 = arith.constant dense<0.000000e+00> : vector<2x96xf32>
      %548 = tpu.matmul %544, %547, %cst_205 {dimension_numbers = #tpu.dot_dimension_numbers<[1], [0], [0], [1], [0, 0, 1, 1], [], []>} : vector<2x32xf32>, vector<32x96xf32>, vector<2x96xf32> -> vector<2x96xf32>
      %549 = arith.addf %546, %548 : vector<2x96xf32>
      %c0_206 = arith.constant 0 : index
      %c0_207 = arith.constant 0 : index
      %550 = vector.load %arg15[%c0_206, %c0_207] : memref<1x96xf32, #tpu.memory_space<vmem>>, vector<1x96xf32>
      %551 = vector.broadcast %550 : vector<1x96xf32> to vector<2x96xf32>
      %552 = arith.addf %549, %551 : vector<2x96xf32>
      %553 = vector.extract_strided_slice %552 {offsets = [0, 0], sizes = [2, 32], strides = [1, 1]} : vector<2x96xf32> to vector<2x32xf32>
      %554 = vector.extract_strided_slice %524 {offsets = [0, 0], sizes = [2, 32], strides = [1, 1]} : vector<2x96xf32> to vector<2x32xf32>
      %555 = arith.addf %553, %554 : vector<2x32xf32>
      %556 = arith.negf %555 : vector<2x32xf32>
      %557 = math.exp %556 : vector<2x32xf32>
      %cst_208 = arith.constant 1.000000e+00 : f32
      %558 = vector.broadcast %cst_208 : f32 to vector<2x32xf32>
      %559 = arith.addf %558, %557 : vector<2x32xf32>
      %560 = arith.divf %558, %559 : vector<2x32xf32>
      %561 = vector.extract_strided_slice %552 {offsets = [0, 32], sizes = [2, 32], strides = [1, 1]} : vector<2x96xf32> to vector<2x32xf32>
      %562 = vector.extract_strided_slice %524 {offsets = [0, 32], sizes = [2, 32], strides = [1, 1]} : vector<2x96xf32> to vector<2x32xf32>
      %563 = arith.addf %561, %562 : vector<2x32xf32>
      %564 = arith.negf %563 : vector<2x32xf32>
      %565 = math.exp %564 : vector<2x32xf32>
      %cst_209 = arith.constant 1.000000e+00 : f32
      %566 = vector.broadcast %cst_209 : f32 to vector<2x32xf32>
      %567 = arith.addf %566, %565 : vector<2x32xf32>
      %568 = arith.divf %566, %567 : vector<2x32xf32>
      %569 = vector.extract_strided_slice %552 {offsets = [0, 64], sizes = [2, 32], strides = [1, 1]} : vector<2x96xf32> to vector<2x32xf32>
      %570 = vector.extract_strided_slice %524 {offsets = [0, 64], sizes = [2, 32], strides = [1, 1]} : vector<2x96xf32> to vector<2x32xf32>
      %571 = arith.mulf %560, %570 : vector<2x32xf32>
      %572 = arith.addf %569, %571 : vector<2x32xf32>
      %573 = math.tanh %572 : vector<2x32xf32>
      %cst_210 = arith.constant 1.000000e+00 : f32
      %574 = vector.broadcast %cst_210 : f32 to vector<2x32xf32>
      %575 = arith.subf %574, %568 : vector<2x32xf32>
      %576 = arith.mulf %575, %573 : vector<2x32xf32>
      %577 = arith.mulf %568, %arg25 : vector<2x32xf32>
      %578 = arith.addf %576, %577 : vector<2x32xf32>
      %c0_211 = arith.constant 0 : index
      %c0_212 = arith.constant 0 : index
      %579 = vector.load %arg17[%c0_211, %c0_212] : memref<32x18xf32, #tpu.memory_space<vmem>>, vector<32x18xf32>
      %cst_213 = arith.constant dense<0.000000e+00> : vector<2x18xf32>
      %580 = tpu.matmul %578, %579, %cst_213 {dimension_numbers = #tpu.dot_dimension_numbers<[1], [0], [0], [1], [0, 0, 1, 1], [], []>} : vector<2x32xf32>, vector<32x18xf32>, vector<2x18xf32> -> vector<2x18xf32>
      %c0_214 = arith.constant 0 : index
      %c0_215 = arith.constant 0 : index
      %581 = vector.load %arg18[%c0_214, %c0_215] : memref<32x18xf32, #tpu.memory_space<vmem>>, vector<32x18xf32>
      %cst_216 = arith.constant dense<0.000000e+00> : vector<2x18xf32>
      %582 = tpu.matmul %544, %581, %cst_216 {dimension_numbers = #tpu.dot_dimension_numbers<[1], [0], [0], [1], [0, 0, 1, 1], [], []>} : vector<2x32xf32>, vector<32x18xf32>, vector<2x18xf32> -> vector<2x18xf32>
      %583 = arith.addf %580, %582 : vector<2x18xf32>
      %c0_217 = arith.constant 0 : index
      %c0_218 = arith.constant 0 : index
      %584 = vector.load %arg19[%c0_217, %c0_218] : memref<16x18xf32, #tpu.memory_space<vmem>>, vector<16x18xf32>
      %cst_219 = arith.constant dense<0.000000e+00> : vector<2x18xf32>
      %585 = tpu.matmul %517, %584, %cst_219 {dimension_numbers = #tpu.dot_dimension_numbers<[1], [0], [0], [1], [0, 0, 1, 1], [], []>} : vector<2x16xf32>, vector<16x18xf32>, vector<2x18xf32> -> vector<2x18xf32>
      %586 = arith.addf %583, %585 : vector<2x18xf32>
      %c0_220 = arith.constant 0 : index
      %c0_221 = arith.constant 0 : index
      %587 = vector.load %arg20[%c0_220, %c0_221] : memref<1x18xf32, #tpu.memory_space<vmem>>, vector<1x18xf32>
      %588 = vector.broadcast %587 : vector<1x18xf32> to vector<2x18xf32>
      %589 = arith.addf %586, %588 : vector<2x18xf32>
      %590 = vector.shape_cast %589 : vector<2x18xf32> to vector<1x2x18xf32>
      %591 = arith.index_cast %arg24 : i32 to index
      %c0_222 = arith.constant 0 : index
      %c0_223 = arith.constant 0 : index
      %592 = vector.load %arg21[%591, %c0_222, %c0_223] : memref<6x2x18xf32, #tpu.memory_space<vmem>>, vector<1x2x18xf32>
      tpu.vector_store %arg21[%591, %c0_222, %c0_223], %590 {strides = array<i32>} : memref<6x2x18xf32, #tpu.memory_space<vmem>>, vector<1x2x18xf32>,
      %cst_224 = arith.constant dense<0xFF800000> : vector<2xf32>
      %593 = vector.multi_reduction <maximumf>, %589, %cst_224 [1] : vector<2x18xf32> to vector<2xf32>
      %594 = vector.shape_cast %593 : vector<2xf32> to vector<2x1xf32>
      %595 = vector.broadcast %594 : vector<2x1xf32> to vector<2x18xf32>
      %596 = arith.cmpf oge, %589, %595 : vector<2x18xf32>
      %c18_i32 = arith.constant 18 : i32
      %597 = vector.broadcast %c18_i32 : i32 to vector<2x18xi32>
      %598 = arith.select %596, %511, %597 : vector<2x18xi1>, vector<2x18xi32>
      %cst_225 = arith.constant dense<2147483647> : vector<2xi32>
      %599 = vector.multi_reduction <minsi>, %598, %cst_225 [1] : vector<2x18xi32> to vector<2xi32>
      %600 = vector.shape_cast %599 : vector<2xi32> to vector<2x1xi32>
      %601 = vector.broadcast %600 : vector<2x1xi32> to vector<2x18xi32>
      %602 = arith.cmpi eq, %511, %601 : vector<2x18xi32>
      %603 = arith.extui %602 : vector<2x18xi1> to vector<2x18xi32>
      %604 = arith.sitofp %603 : vector<2x18xi32> to vector<2x18xf32>
      %605 = arith.index_cast %arg24 : i32 to index
      %606 = memref.load %arg0[%605] : memref<6xi32, #tpu.memory_space<smem>>
      %c0_i32_226 = arith.constant 0 : i32
      %607 = arith.cmpi sgt, %606, %c0_i32_226 : i32
      %608 = arith.extui %607 : i1 to i32
      %609 = arith.sitofp %608 : i32 to f32
      %610 = arith.index_cast %arg24 : i32 to index
      %c0_227 = arith.constant 0 : index
      %c0_228 = arith.constant 0 : index
      %611 = vector.load %arg7[%610, %c0_227, %c0_228] : memref<6x2x18xf32, #tpu.memory_space<vmem>>, vector<1x2x18xf32>
      %612 = vector.shape_cast %611 : vector<1x2x18xf32> to vector<2x18xf32>
      %613 = vector.broadcast %609 : f32 to vector<2x18xf32>
      %614 = arith.mulf %613, %612 : vector<2x18xf32>
      %cst_229 = arith.constant 1.000000e+00 : f32
      %615 = arith.subf %cst_229, %609 : f32
      %616 = vector.broadcast %615 : f32 to vector<2x18xf32>
      %617 = arith.mulf %616, %604 : vector<2x18xf32>
      %618 = arith.addf %614, %617 : vector<2x18xf32>
      scf.yield %578, %618 : vector<2x32xf32>, vector<2x18xf32>
    }
    %c5_i32_180 = arith.constant 5 : i32
    return
  }
}

</mosaic_0001>

<llo_original>
// kernel: seq2seq_forward.1
$region0: #{seq2seq_forward.1}
  #allocation0 [shape = 'u32[]', space=smem, size = 0x4, offset = 0x4, fixed_abs, tag = 'smem constant byte address 0x4 - core index']
  #allocation1 [shape = 'u32[144,128]{1,0:T(1,128)}', space=vmem, size = 0x12000, scoped, tag = 'internal scratch']
  #allocation2 [shape = 'f32[2,10,32]{2,1,0:T(8,128)}', space=vmem, size = 0x4000, scoped, tag = 'scratch operand']
  #allocation3 [shape = 'f32[2,10,32]{2,1,0:T(8,128)}', space=vmem, size = 0x4000, scoped, tag = 'scratch operand']
  %s0 = inlined_call_operand.vmem [shape: s32[6], index: 0, kind: input, shape index: {}]
  %s1 = inlined_call_operand.vmem [shape: s32[2,1], index: 1, kind: input, shape index: {}]
  %s2 = inlined_call_operand.vmem [shape: f32[10,2,96], index: 2, kind: input, shape index: {}]
  %s3 = inlined_call_operand.vmem [shape: f32[32,96], index: 3, kind: input, shape index: {}]
  %s4 = inlined_call_operand.vmem [shape: f32[1,96], index: 4, kind: input, shape index: {}]
  %s5 = inlined_call_operand.vmem [shape: f32[32,32], index: 5, kind: input, shape index: {}]
  %s6 = inlined_call_operand.vmem [shape: f32[1,32], index: 6, kind: input, shape index: {}]
  %s7 = inlined_call_operand.vmem [shape: f32[6,2,18], index: 7, kind: input, shape index: {}]
  %s8 = inlined_call_operand.vmem [shape: f32[18,16], index: 8, kind: input, shape index: {}]
  %s9 = inlined_call_operand.vmem [shape: f32[32,32], index: 9, kind: input, shape index: {}]
  %s10 = inlined_call_operand.vmem [shape: f32[1,32], index: 10, kind: input, shape index: {}]
  %s11 = inlined_call_operand.vmem [shape: f32[1,32], index: 11, kind: input, shape index: {}]
  %s12 = inlined_call_operand.vmem [shape: f32[32,128], index: 12, kind: input, shape index: {}]
  %s13 = inlined_call_operand.vmem [shape: f32[16,96], index: 13, kind: input, shape index: {}]
  %s14 = inlined_call_operand.vmem [shape: f32[32,96], index: 14, kind: input, shape index: {}]
  %s15 = inlined_call_operand.vmem [shape: f32[1,96], index: 15, kind: input, shape index: {}]
  %s16 = inlined_call_operand.vmem [shape: f32[1,96], index: 16, kind: input, shape index: {}]
  %s17 = inlined_call_operand.vmem [shape: f32[32,18], index: 17, kind: input, shape index: {}]
  %s18 = inlined_call_operand.vmem [shape: f32[32,18], index: 18, kind: input, shape index: {}]
  %s19 = inlined_call_operand.vmem [shape: f32[16,18], index: 19, kind: input, shape index: {}]
  %s20 = inlined_call_operand.vmem [shape: f32[1,18], index: 20, kind: input, shape index: {}]
  %s21 = inlined_call_operand.hbm [shape: f32[6,2,18], index: 21, kind: output, shape index: {}]
  %s22 = sld [smem:[#allocation0]]
  $region105: #{seq2seq_forward.1} parent=0
    _
  %s24 = ssub.s32 1, %s22
  %s25 = scalar_select 0, %s24, %s22
  $region1: #{seq2seq_forward.1} parent=0
    #allocation4 [shape = 'u8[512]{0}', space=smem, size = 0x200, scoped, tag = 'input window, operand 0, single buffered']
    #allocation5 [shape = 's32[1]{0}', space=sflag, size = 0x4, scoped, tag = 'scoped memory for seq2seq_forward.1']
    #allocation6 [shape = 's32[1]{0}', space=sflag, size = 0x4, scoped, tag = 'scoped memory for seq2seq_forward.1']
    #allocation7 [shape = 'u8[6144]{0}', space=vmem, size = 0x1800, scoped, tag = 'output window, operand 0, single buffered']
    %26 = vsyncpa [#allocation6], 0
    %27 = vsyncpa [#allocation5], 0
    // Predicated region
    $region2: #{seq2seq_forward.1} parent=1 // pred_check
      _
    $region3: #{seq2seq_forward.1} parent=1 // pred_check_branch
      %29 = sbr.rel (0) target = $region5
    $region4: #{seq2seq_forward.1} parent=1 // pred_region
      %s31 = ssub.s32 16, 16
      %32 = vsyncadd [#allocation6], %s31
      %s34 = sshll.u32 %s0, 4
      %s35 = int_to_ptr.vmem [resolvable:$true] %s34
      %37 = dma.vmem_to_smem %s35, 16, [#allocation4], [#allocation6]
    $region5: #{seq2seq_forward.1} parent=1 // pred_fallthru
      _
    // Predicated region
    $region6: #{seq2seq_forward.1} parent=1 // pred_check
      _
    $region7: #{seq2seq_forward.1} parent=1 // pred_check_branch
      %39 = sbr.rel (0) target = $region9
    $region8: #{seq2seq_forward.1} parent=1 // pred_region
      _
    $region9: #{seq2seq_forward.1} parent=1 // pred_fallthru
      _
    // Predicated region
    $region10: #{seq2seq_forward.1} parent=1 // pred_check
      _
    $region11: #{seq2seq_forward.1} parent=1 // pred_check_branch
      %41 = sbr.rel (0) target = $region13
    $region12: #{seq2seq_forward.1} parent=1 // pred_region
      _
    $region13: #{seq2seq_forward.1} parent=1 // pred_fallthru
      _
    // Predicated region
    $region14: #{seq2seq_forward.1} parent=1 // pred_check
      _
    $region15: #{seq2seq_forward.1} parent=1 // pred_check_branch
      %43 = sbr.rel (0) target = $region17
    $region16: #{seq2seq_forward.1} parent=1 // pred_region
      _
    $region17: #{seq2seq_forward.1} parent=1 // pred_fallthru
      _
    // Predicated region
    $region18: #{seq2seq_forward.1} parent=1 // pred_check
      _
    $region19: #{seq2seq_forward.1} parent=1 // pred_check_branch
      %45 = sbr.rel (0) target = $region21
    $region20: #{seq2seq_forward.1} parent=1 // pred_region
      _
    $region21: #{seq2seq_forward.1} parent=1 // pred_fallthru
      _
    // Predicated region
    $region22: #{seq2seq_forward.1} parent=1 // pred_check
      _
    $region23: #{seq2seq_forward.1} parent=1 // pred_check_branch
      %47 = sbr.rel (0) target = $region25
    $region24: #{seq2seq_forward.1} parent=1 // pred_region
      _
    $region25: #{seq2seq_forward.1} parent=1 // pred_fallthru
      _
    // Predicated region
    $region26: #{seq2seq_forward.1} parent=1 // pred_check
      _
    $region27: #{seq2seq_forward.1} parent=1 // pred_check_branch
      %49 = sbr.rel (0) target = $region29
    $region28: #{seq2seq_forward.1} parent=1 // pred_region
      _
    $region29: #{seq2seq_forward.1} parent=1 // pred_fallthru
      _
    // Predicated region
    $region30: #{seq2seq_forward.1} parent=1 // pred_check
      _
    $region31: #{seq2seq_forward.1} parent=1 // pred_check_branch
      %51 = sbr.rel (0) target = $region33
    $region32: #{seq2seq_forward.1} parent=1 // pred_region
      _
    $region33: #{seq2seq_forward.1} parent=1 // pred_fallthru
      _
    // Predicated region
    $region34: #{seq2seq_forward.1} parent=1 // pred_check
      _
    $region35: #{seq2seq_forward.1} parent=1 // pred_check_branch
      %53 = sbr.rel (0) target = $region37
    $region36: #{seq2seq_forward.1} parent=1 // pred_region
      _
    $region37: #{seq2seq_forward.1} parent=1 // pred_fallthru
      _
    // Predicated region
    $region38: #{seq2seq_forward.1} parent=1 // pred_check
      _
    $region39: #{seq2seq_forward.1} parent=1 // pred_check_branch
      %55 = sbr.rel (0) target = $region41
    $region40: #{seq2seq_forward.1} parent=1 // pred_region
      _
    $region41: #{seq2seq_forward.1} parent=1 // pred_fallthru
      _
    // Predicated region
    $region42: #{seq2seq_forward.1} parent=1 // pred_check
      _
    $region43: #{seq2seq_forward.1} parent=1 // pred_check_branch
      %57 = sbr.rel (0) target = $region45
    $region44: #{seq2seq_forward.1} parent=1 // pred_region
      _
    $region45: #{seq2seq_forward.1} parent=1 // pred_fallthru
      _
    // Predicated region
    $region46: #{seq2seq_forward.1} parent=1 // pred_check
      _
    $region47: #{seq2seq_forward.1} parent=1 // pred_check_branch
      %59 = sbr.rel (0) target = $region49
    $region48: #{seq2seq_forward.1} parent=1 // pred_region
      _
    $region49: #{seq2seq_forward.1} parent=1 // pred_fallthru
      _
    // Predicated region
    $region50: #{seq2seq_forward.1} parent=1 // pred_check
      _
    $region51: #{seq2seq_forward.1} parent=1 // pred_check_branch
      %61 = sbr.rel (0) target = $region53
    $region52: #{seq2seq_forward.1} parent=1 // pred_region
      _
    $region53: #{seq2seq_forward.1} parent=1 // pred_fallthru
      _
    // Predicated region
    $region54: #{seq2seq_forward.1} parent=1 // pred_check
      _
    $region55: #{seq2seq_forward.1} parent=1 // pred_check_branch
      %63 = sbr.rel (0) target = $region57
    $region56: #{seq2seq_forward.1} parent=1 // pred_region
      _
    $region57: #{seq2seq_forward.1} parent=1 // pred_fallthru
      _
    // Predicated region
    $region58: #{seq2seq_forward.1} parent=1 // pred_check
      _
    $region59: #{seq2seq_forward.1} parent=1 // pred_check_branch
      %65 = sbr.rel (0) target = $region61
    $region60: #{seq2seq_forward.1} parent=1 // pred_region
      _
    $region61: #{seq2seq_forward.1} parent=1 // pred_fallthru
      _
    // Predicated region
    $region62: #{seq2seq_forward.1} parent=1 // pred_check
      _
    $region63: #{seq2seq_forward.1} parent=1 // pred_check_branch
      %67 = sbr.rel (0) target = $region65
    $region64: #{seq2seq_forward.1} parent=1 // pred_region
      _
    $region65: #{seq2seq_forward.1} parent=1 // pred_fallthru
      _
    // Predicated region
    $region66: #{seq2seq_forward.1} parent=1 // pred_check
      _
    $region67: #{seq2seq_forward.1} parent=1 // pred_check_branch
      %69 = sbr.rel (0) target = $region69
    $region68: #{seq2seq_forward.1} parent=1 // pred_region
      _
    $region69: #{seq2seq_forward.1} parent=1 // pred_fallthru
      _
    // Predicated region
    $region70: #{seq2seq_forward.1} parent=1 // pred_check
      _
    $region71: #{seq2seq_forward.1} parent=1 // pred_check_branch
      %71 = sbr.rel (0) target = $region73
    $region72: #{seq2seq_forward.1} parent=1 // pred_region
      _
    $region73: #{seq2seq_forward.1} parent=1 // pred_fallthru
      _
    // Predicated region
    $region74: #{seq2seq_forward.1} parent=1 // pred_check
      _
    $region75: #{seq2seq_forward.1} parent=1 // pred_check_branch
      %73 = sbr.rel (0) target = $region77
    $region76: #{seq2seq_forward.1} parent=1 // pred_region
      _
    $region77: #{seq2seq_forward.1} parent=1 // pred_fallthru
      _
    // Predicated region
    $region78: #{seq2seq_forward.1} parent=1 // pred_check
      _
    $region79: #{seq2seq_forward.1} parent=1 // pred_check_branch
      %75 = sbr.rel (0) target = $region81
    $region80: #{seq2seq_forward.1} parent=1 // pred_region
      _
    $region81: #{seq2seq_forward.1} parent=1 // pred_fallthru
      _
    // Predicated region
    $region82: #{seq2seq_forward.1} parent=1 // pred_check
      _
    $region83: #{seq2seq_forward.1} parent=1 // pred_check_branch
      %77 = sbr.rel (0) target = $region85
    $region84: #{seq2seq_forward.1} parent=1 // pred_region
      _
    $region85: #{seq2seq_forward.1} parent=1 // pred_fallthru
      _
    // Predicated region
    $region86: #{seq2seq_forward.1} parent=1 // pred_check
      _
    $region87: #{seq2seq_forward.1} parent=1 // pred_check_branch
      %79 = sbr.rel (0) target = $region89
    $region88: #{seq2seq_forward.1} parent=1 // pred_region
      %80 = dma.done [#allocation6], 16
    $region89: #{seq2seq_forward.1} parent=1 // pred_fallthru
      _
    %81 = sfence
    %v82 = vld [vmem:[%s1] sm:$0x3]
    %v83 = vld [vmem:[%s3] sm:$0xff]
    %v84 = vld [vmem:[%s3 + $0x8] sm:$0xff]
    %v85 = vld [vmem:[%s3 + $0x10] sm:$0xff]
    %v86 = vld [vmem:[%s3 + $0x18] sm:$0xff]
    %v87 = vld [vmem:[%s4] sm:$0x1]
    %v88 = vlaneseq
    %v89 = vand.u32 %v88, 127
    %vm90 = vcmp.lt.s32.totalorder %v89, 16
    %v91 = vld [vmem:[%s2] sm:$0x3]
    %v93 = vlaneseq
    %v94 = vshrl.u32 %v93, 7
    %v95 = vsub.s32 0, %v94
    %v96 = vrot.slane %v87, %v95
    %vm98 = vcmask 261120
    %v100 = vsel %vm98, 0.0, 0
    %102 = vmatprep.subr.mxu0 0.0
    %103 = vmatpush1.msra.mxu0 %v83
    %104 = vmatprep.subr.mxu0 0.0
    %105 = vmatpush1.msra.mxu0 %v84
    %106 = vmatprep.subr.mxu0 0.0
    %107 = vmatpush1.msra.mxu0 %v85
    %108 = vmatprep.subr.mxu0 0.0
    %109 = vmatpush1.msra.mxu0 %v86
    %110 = vmatprep.subr.mxu0 0.0
    %111 = vmatpush1.msra.mxu0 0.0
    %112 = vmatprep.subr.mxu0 0.0
    %113 = vmatpush1.msra.mxu0 0.0
    %114 = vmatprep.subr.mxu0 0.0
    %115 = vmatpush1.msra.mxu0 0.0
    %116 = vmatprep.subr.mxu0 0.0
    %117 = vmatpush1.msra.mxu0 0.0
    %118 = vmatprep.subr.mxu0 0.0
    %119 = vmatpush1.msra.mxu0 0.0
    %120 = vmatprep.subr.mxu0 0.0
    %121 = vmatpush1.msra.mxu0 0.0
    %122 = vmatprep.subr.mxu0 0.0
    %123 = vmatpush1.msra.mxu0 0.0
    %124 = vmatprep.subr.mxu0 0.0
    %125 = vmatpush1.msra.mxu0 0.0
    %126 = vmatprep.subr.mxu0 0.0
    %127 = vmatpush1.msra.mxu0 0.0
    %128 = vmatprep.subr.mxu0 0.0
    %129 = vmatpush1.msra.mxu0 0.0
    %130 = vmatprep.subr.mxu0 0.0
    %131 = vmatpush1.msra.mxu0 0.0
    %132 = vmatprep.subr.mxu0 0.0
    %133 = vmatpush1.msra.mxu0 0.0
    %134 = vmatprep.subr.mxu0 0.0
    %135 = vmatpush1.msra.mxu0 0.0
    %136 = vmatprep.subr.mxu0 0.0
    %137 = vmatpush1.msra.mxu0 0.0
    %138 = vmatprep.subr.mxu0 0.0
    %139 = vmatpush1.msra.mxu0 0.0
    %140 = vmatprep.subr.mxu0 0.0
    %141 = vmatpush1.msra.mxu0 0.0
    %142 = vmatprep.subr.mxu0 0.0
    %143 = vmatpush1.msra.mxu0 0.0
    %144 = vmatprep.subr.mxu0 0.0
    %145 = vmatpush1.msra.mxu0 0.0
    %146 = vmatprep.subr.mxu0 0.0
    %147 = vmatpush1.msra.mxu0 0.0
    %148 = vmatprep.subr.mxu0 0.0
    %149 = vmatpush1.msra.mxu0 0.0
    %150 = vmatprep.subr.mxu0 0.0
    %151 = vmatpush1.msra.mxu0 0.0
    %152 = vmatprep.subr.mxu0 0.0
    %153 = vmatpush1.msra.mxu0 0.0
    %154 = vmatprep.subr.mxu0 0.0
    %155 = vmatpush1.msra.mxu0 0.0
    %156 = vmatprep.subr.mxu0 0.0
    %157 = vmatpush1.msra.mxu0 0.0
    %158 = vmatprep.subr.mxu0 0.0
    %159 = vmatpush1.msra.mxu0 0.0
    %160 = vmatprep.subr.mxu0 0.0
    %161 = vmatpush1.msra.mxu0 0.0
    %162 = vmatprep.subr.mxu0 0.0
    %163 = vmatpush1.msra.mxu0 0.0
    %164 = vmatprep.subr.mxu0 0.0
    %165 = vmatpush1.msra.mxu0 0.0
    %166 = vmatprep.mubr.f32.mxu0 0.0
    %167 = vmatmul.mubr.f32.gmra.mrb[0].mxu0 %v100
    %v168 = vpop.f32.mrb[0].mxu0
    %v169 = vadd.f32 %v96, %v168
    %v170 = vpop.f32.mrb[0].mxu0
    %171 = vdwg.mxu0
    %v172 = vadd.f32 %v91, %v169
    %v173 = vxor.u32 %v172, 2147483648
    %v174 = vmul.f32 %v173, 1.442695
    %v175 = vpow.pop %v174
    %v176 = vadd.f32 %v175, 1.0
    %v177 = vrcp.pop %v176
    %v178 = vmul.f32 1.0, %v177
    %180 = vrot.lane.b32.xlu0 %v169, 64
    %v181 = vpop.permute.xlu0 %180
    %v183 = vmul.f32 %v178, %v181
    %185 = vrot.lane.b32.xlu0 %v183, 64
    %v186 = vpop.permute.xlu0 %185
    %v188 = vadd.f32 %v91, %v186
    %v189 = vtanh.pop %v188
    %v190 = vsub.f32 1.0, %v178
    %192 = vrot.lane.b32.xlu0 %v189, 96
    %v193 = vpop.permute.xlu0 %192
    %v195 = vmul.f32 %v190, %v193
    %v196 = vmul.f32 %v178, 0.0
    %v197 = vadd.f32 %v195, %v196
    %v198 = vsel %vm90, 0, 9
    %199 = vset.pattern.permute.xlu0 0
    %200 = vperm.xlu0 %199, %v82
    %v201 = vpop.permute.xlu0 %200
    %vm202 = vcmp.lt.s32.totalorder %v198, %v201
    %204 = vrot.lane.b32.xlu0 %v197, 96
    %v205 = vpop.permute.xlu0 %204
    %v207 = vsel %vm202, %v205, 0.0
    %v210 = vunpack.c.l.s4 1966171168
    %v211 = vunpack.c.0.s8 %v210
    %v212 = vlaneseq
    %v213 = vshrl.u32 %v212, 7
    %v214 = vsub.s32 %v211, %v213
    %v215 = vrot.slane %v207, %v214
    %v216 = vcombine.high %v215, %v215
    %v218 = vunpack.c.l.s4 1966171168
    %v219 = vunpack.c.0.s8 %v218
    %v220 = vlaneseq
    %v221 = vshrl.u32 %v220, 7
    %v222 = vsub.s32 %v219, %v221
    %v223 = vrot.slane %v215, %v222
    %v225 = vunpack.c.l.s4 1966171168
    %v226 = vunpack.c.0.s8 %v225
    %v227 = vlaneseq
    %v228 = vshrl.u32 %v227, 7
    %v229 = vsub.s32 %v226, %v228
    %v230 = vrot.slane %v216, %v229
    %vm233 = vcmask 122880
    %234 = vst.msk [vmem:[#allocation2] sm:$0x1] %vm233, %v223
    %235 = vst.msk [vmem:[#allocation2 + $0x10] sm:$0x1] %vm233, %v230
    %vm236 = vcmask 254080
    %237 = vst.msk [vmem:[#allocation2 + $0x9] sm:$0x1] %vm236, %v223
    %238 = vst.msk [vmem:[#allocation2 + $0x19] sm:$0x1] %vm236, %v230
    %s239 = scalar_lea.vmem %s2, 2
    %v240 = vld [vmem:[%s239] sm:$0x3]
    %v241 = vsel %vm98, %v207, 0
    %243 = vmatprep.subr.mxu0 0.0
    %244 = vmatpush1.msra.mxu0 %v83
    %245 = vmatprep.subr.mxu0 0.0
    %246 = vmatpush1.msra.mxu0 %v84
    %247 = vmatprep.subr.mxu0 0.0
    %248 = vmatpush1.msra.mxu0 %v85
    %249 = vmatprep.subr.mxu0 0.0
    %250 = vmatpush1.msra.mxu0 %v86
    %251 = vmatprep.subr.mxu0 0.0
    %252 = vmatpush1.msra.mxu0 0.0
    %253 = vmatprep.subr.mxu0 0.0
    %254 = vmatpush1.msra.mxu0 0.0
    %255 = vmatprep.subr.mxu0 0.0
    %256 = vmatpush1.msra.mxu0 0.0
    %257 = vmatprep.subr.mxu0 0.0
    %258 = vmatpush1.msra.mxu0 0.0
    %259 = vmatprep.subr.mxu0 0.0
    %260 = vmatpush1.msra.mxu0 0.0
    %261 = vmatprep.subr.mxu0 0.0
    %262 = vmatpush1.msra.mxu0 0.0
    %263 = vmatprep.subr.mxu0 0.0
    %264 = vmatpush1.msra.mxu0 0.0
    %265 = vmatprep.subr.mxu0 0.0
    %266 = vmatpush1.msra.mxu0 0.0
    %267 = vmatprep.subr.mxu0 0.0
    %268 = vmatpush1.msra.mxu0 0.0
    %269 = vmatprep.subr.mxu0 0.0
    %270 = vmatpush1.msra.mxu0 0.0
    %271 = vmatprep.subr.mxu0 0.0
    %272 = vmatpush1.msra.mxu0 0.0
    %273 = vmatprep.subr.mxu0 0.0
    %274 = vmatpush1.msra.mxu0 0.0
    %275 = vmatprep.subr.mxu0 0.0
    %276 = vmatpush1.msra.mxu0 0.0
    %277 = vmatprep.subr.mxu0 0.0
    %278 = vmatpush1.msra.mxu0 0.0
    %279 = vmatprep.subr.mxu0 0.0
    %280 = vmatpush1.msra.mxu0 0.0
    %281 = vmatprep.subr.mxu0 0.0
    %282 = vmatpush1.msra.mxu0 0.0
    %283 = vmatprep.subr.mxu0 0.0
    %284 = vmatpush1.msra.mxu0 0.0
    %285 = vmatprep.subr.mxu0 0.0
    %286 = vmatpush1.msra.mxu0 0.0
    %287 = vmatprep.subr.mxu0 0.0
    %288 = vmatpush1.msra.mxu0 0.0
    %289 = vmatprep.subr.mxu0 0.0
    %290 = vmatpush1.msra.mxu0 0.0
    %291 = vmatprep.subr.mxu0 0.0
    %292 = vmatpush1.msra.mxu0 0.0
    %293 = vmatprep.subr.mxu0 0.0
    %294 = vmatpush1.msra.mxu0 0.0
    %295 = vmatprep.subr.mxu0 0.0
    %296 = vmatpush1.msra.mxu0 0.0
    %297 = vmatprep.subr.mxu0 0.0
    %298 = vmatpush1.msra.mxu0 0.0
    %299 = vmatprep.subr.mxu0 0.0
    %300 = vmatpush1.msra.mxu0 0.0
    %301 = vmatprep.subr.mxu0 0.0
    %302 = vmatpush1.msra.mxu0 0.0
    %303 = vmatprep.subr.mxu0 0.0
    %304 = vmatpush1.msra.mxu0 0.0
    %305 = vmatprep.subr.mxu0 0.0
    %306 = vmatpush1.msra.mxu0 0.0
    %307 = vmatprep.mubr.f32.mxu0 0.0
    %308 = vmatmul.mubr.f32.gmra.mrb[0].mxu0 %v241
    %v309 = vpop.f32.mrb[0].mxu0
    %v310 = vadd.f32 %v96, %v309
    %v311 = vpop.f32.mrb[0].mxu0
    %312 = vdwg.mxu0
    %v313 = vadd.f32 %v240, %v310
    %v314 = vxor.u32 %v313, 2147483648
    %v315 = vmul.f32 %v314, 1.442695
    %v316 = vpow.pop %v315
    %v317 = vadd.f32 %v316, 1.0
    %v318 = vrcp.pop %v317
    %v319 = vmul.f32 1.0, %v318
    %321 = vrot.lane.b32.xlu0 %v310, 64
    %v322 = vpop.permute.xlu0 %321
    %v324 = vmul.f32 %v319, %v322
    %326 = vrot.lane.b32.xlu0 %v324, 64
    %v327 = vpop.permute.xlu0 %326
    %v329 = vadd.f32 %v240, %v327
    %v330 = vtanh.pop %v329
    %v331 = vsub.f32 1.0, %v319
    %333 = vrot.lane.b32.xlu0 %v330, 96
    %v334 = vpop.permute.xlu0 %333
    %v336 = vmul.f32 %v331, %v334
    %337 = vrot.lane.b32.xlu0 %v207, 32
    %v338 = vpop.permute.xlu0 %337
    %v340 = vmul.f32 %v319, %v338
    %v341 = vadd.f32 %v336, %v340
    %v342 = vsel %vm90, 1, 8
    %vm343 = vcmp.lt.s32.totalorder %v342, %v201
    %345 = vrot.lane.b32.xlu0 %v341, 96
    %v346 = vpop.permute.xlu0 %345
    %v348 = vsel %vm343, %v346, %v207
    %v349 = vsel %vm343, %v346, 0.0
    %v352 = vunpack.c.l.s4 1966171168
    %v353 = vunpack.c.0.s8 %v352
    %v354 = vlaneseq
    %v355 = vshrl.u32 %v354, 7
    %v356 = vsub.s32 %v353, %v355
    %v357 = vrot.slane %v349, %v356
    %v358 = vcombine.high %v357, %v357
    %v360 = vunpack.c.l.s4 1966171168
    %v361 = vunpack.c.0.s8 %v360
    %v362 = vlaneseq
    %v363 = vshrl.u32 %v362, 7
    %v364 = vsub.s32 %v361, %v363
    %v365 = vrot.slane %v357, %v364
    %v367 = vunpack.c.l.s4 1966171168
    %v368 = vunpack.c.0.s8 %v367
    %v369 = vlaneseq
    %v370 = vshrl.u32 %v369, 7
    %v371 = vsub.s32 %v368, %v370
    %v372 = vrot.slane %v358, %v371
    %375 = vst.msk [vmem:[#allocation2 + $0x1] sm:$0x1] %vm233, %v365
    %376 = vst.msk [vmem:[#allocation2 + $0x11] sm:$0x1] %vm233, %v372
    %377 = vst.msk [vmem:[#allocation2 + $0x8] sm:$0x1] %vm236, %v365
    %378 = vst.msk [vmem:[#allocation2 + $0x18] sm:$0x1] %vm236, %v372
    %s379 = scalar_lea.vmem %s2, 4
    %v380 = vld [vmem:[%s379] sm:$0x3]
    %v382 = vsel %vm98, %v348, 0
    %384 = vmatprep.subr.mxu0 0.0
    %385 = vmatpush1.msra.mxu0 %v83
    %386 = vmatprep.subr.mxu0 0.0
    %387 = vmatpush1.msra.mxu0 %v84
    %388 = vmatprep.subr.mxu0 0.0
    %389 = vmatpush1.msra.mxu0 %v85
    %390 = vmatprep.subr.mxu0 0.0
    %391 = vmatpush1.msra.mxu0 %v86
    %392 = vmatprep.subr.mxu0 0.0
    %393 = vmatpush1.msra.mxu0 0.0
    %394 = vmatprep.subr.mxu0 0.0
    %395 = vmatpush1.msra.mxu0 0.0
    %396 = vmatprep.subr.mxu0 0.0
    %397 = vmatpush1.msra.mxu0 0.0
    %398 = vmatprep.subr.mxu0 0.0
    %399 = vmatpush1.msra.mxu0 0.0
    %400 = vmatprep.subr.mxu0 0.0
    %401 = vmatpush1.msra.mxu0 0.0
    %402 = vmatprep.subr.mxu0 0.0
    %403 = vmatpush1.msra.mxu0 0.0
    %404 = vmatprep.subr.mxu0 0.0
    %405 = vmatpush1.msra.mxu0 0.0
    %406 = vmatprep.subr.mxu0 0.0
    %407 = vmatpush1.msra.mxu0 0.0
    %408 = vmatprep.subr.mxu0 0.0
    %409 = vmatpush1.msra.mxu0 0.0
    %410 = vmatprep.subr.mxu0 0.0
    %411 = vmatpush1.msra.mxu0 0.0
    %412 = vmatprep.subr.mxu0 0.0
    %413 = vmatpush1.msra.mxu0 0.0
    %414 = vmatprep.subr.mxu0 0.0
    %415 = vmatpush1.msra.mxu0 0.0
    %416 = vmatprep.subr.mxu0 0.0
    %417 = vmatpush1.msra.mxu0 0.0
    %418 = vmatprep.subr.mxu0 0.0
    %419 = vmatpush1.msra.mxu0 0.0
    %420 = vmatprep.subr.mxu0 0.0
    %421 = vmatpush1.msra.mxu0 0.0
    %422 = vmatprep.subr.mxu0 0.0
    %423 = vmatpush1.msra.mxu0 0.0
    %424 = vmatprep.subr.mxu0 0.0
    %425 = vmatpush1.msra.mxu0 0.0
    %426 = vmatprep.subr.mxu0 0.0
    %427 = vmatpush1.msra.mxu0 0.0
    %428 = vmatprep.subr.mxu0 0.0
    %429 = vmatpush1.msra.mxu0 0.0
    %430 = vmatprep.subr.mxu0 0.0
    %431 = vmatpush1.msra.mxu0 0.0
    %432 = vmatprep.subr.mxu0 0.0
    %433 = vmatpush1.msra.mxu0 0.0
    %434 = vmatprep.subr.mxu0 0.0
    %435 = vmatpush1.msra.mxu0 0.0
    %436 = vmatprep.subr.mxu0 0.0
    %437 = vmatpush1.msra.mxu0 0.0
    %438 = vmatprep.subr.mxu0 0.0
    %439 = vmatpush1.msra.mxu0 0.0
    %440 = vmatprep.subr.mxu0 0.0
    %441 = vmatpush1.msra.mxu0 0.0
    %442 = vmatprep.subr.mxu0 0.0
    %443 = vmatpush1.msra.mxu0 0.0
    %444 = vmatprep.subr.mxu0 0.0
    %445 = vmatpush1.msra.mxu0 0.0
    %446 = vmatprep.subr.mxu0 0.0
    %447 = vmatpush1.msra.mxu0 0.0
    %448 = vmatprep.mubr.f32.mxu0 0.0
    %449 = vmatmul.mubr.f32.gmra.mrb[0].mxu0 %v382
    %v450 = vpop.f32.mrb[0].mxu0
    %v451 = vadd.f32 %v96, %v450
    %v452 = vpop.f32.mrb[0].mxu0
    %453 = vdwg.mxu0
    %v454 = vadd.f32 %v380, %v451
    %v455 = vxor.u32 %v454, 2147483648
    %v456 = vmul.f32 %v455, 1.442695
    %v457 = vpow.pop %v456
    %v458 = vadd.f32 %v457, 1.0
    %v459 = vrcp.pop %v458
    %v460 = vmul.f32 1.0, %v459
    %462 = vrot.lane.b32.xlu0 %v451, 64
    %v463 = vpop.permute.xlu0 %462
    %v465 = vmul.f32 %v460, %v463
    %467 = vrot.lane.b32.xlu0 %v465, 64
    %v468 = vpop.permute.xlu0 %467
    %v470 = vadd.f32 %v380, %v468
    %v471 = vtanh.pop %v470
    %v472 = vsub.f32 1.0, %v460
    %474 = vrot.lane.b32.xlu0 %v471, 96
    %v475 = vpop.permute.xlu0 %474
    %v477 = vmul.f32 %v472, %v475
    %478 = vrot.lane.b32.xlu0 %v348, 32
    %v479 = vpop.permute.xlu0 %478
    %v481 = vmul.f32 %v460, %v479
    %v482 = vadd.f32 %v477, %v481
    %v483 = vsel %vm90, 2, 7
    %vm484 = vcmp.lt.s32.totalorder %v483, %v201
    %486 = vrot.lane.b32.xlu0 %v482, 96
    %v487 = vpop.permute.xlu0 %486
    %v489 = vsel %vm484, %v487, %v348
    %v490 = vsel %vm484, %v487, 0.0
    %v493 = vunpack.c.l.s4 1966171168
    %v494 = vunpack.c.0.s8 %v493
    %v495 = vlaneseq
    %v496 = vshrl.u32 %v495, 7
    %v497 = vsub.s32 %v494, %v496
    %v498 = vrot.slane %v490, %v497
    %v499 = vcombine.high %v498, %v498
    %v501 = vunpack.c.l.s4 1966171168
    %v502 = vunpack.c.0.s8 %v501
    %v503 = vlaneseq
    %v504 = vshrl.u32 %v503, 7
    %v505 = vsub.s32 %v502, %v504
    %v506 = vrot.slane %v498, %v505
    %v508 = vunpack.c.l.s4 1966171168
    %v509 = vunpack.c.0.s8 %v508
    %v510 = vlaneseq
    %v511 = vshrl.u32 %v510, 7
    %v512 = vsub.s32 %v509, %v511
    %v513 = vrot.slane %v499, %v512
    %516 = vst.msk [vmem:[#allocation2 + $0x2] sm:$0x1] %vm233, %v506
    %517 = vst.msk [vmem:[#allocation2 + $0x12] sm:$0x1] %vm233, %v513
    %518 = vst.msk [vmem:[#allocation2 + $0x7] sm:$0x1] %vm236, %v506
    %519 = vst.msk [vmem:[#allocation2 + $0x17] sm:$0x1] %vm236, %v513
    %s520 = scalar_lea.vmem %s2, 6
    %v521 = vld [vmem:[%s520] sm:$0x3]
    %v523 = vsel %vm98, %v489, 0
    %525 = vmatprep.subr.mxu0 0.0
    %526 = vmatpush1.msra.mxu0 %v83
    %527 = vmatprep.subr.mxu0 0.0
    %528 = vmatpush1.msra.mxu0 %v84
    %529 = vmatprep.subr.mxu0 0.0
    %530 = vmatpush1.msra.mxu0 %v85
    %531 = vmatprep.subr.mxu0 0.0
    %532 = vmatpush1.msra.mxu0 %v86
    %533 = vmatprep.subr.mxu0 0.0
    %534 = vmatpush1.msra.mxu0 0.0
    %535 = vmatprep.subr.mxu0 0.0
    %536 = vmatpush1.msra.mxu0 0.0
    %537 = vmatprep.subr.mxu0 0.0
    %538 = vmatpush1.msra.mxu0 0.0
    %539 = vmatprep.subr.mxu0 0.0
    %540 = vmatpush1.msra.mxu0 0.0
    %541 = vmatprep.subr.mxu0 0.0
    %542 = vmatpush1.msra.mxu0 0.0
    %543 = vmatprep.subr.mxu0 0.0
    %544 = vmatpush1.msra.mxu0 0.0
    %545 = vmatprep.subr.mxu0 0.0
    %546 = vmatpush1.msra.mxu0 0.0
    %547 = vmatprep.subr.mxu0 0.0
    %548 = vmatpush1.msra.mxu0 0.0
    %549 = vmatprep.subr.mxu0 0.0
    %550 = vmatpush1.msra.mxu0 0.0
    %551 = vmatprep.subr.mxu0 0.0
    %552 = vmatpush1.msra.mxu0 0.0
    %553 = vmatprep.subr.mxu0 0.0
    %554 = vmatpush1.msra.mxu0 0.0
    %555 = vmatprep.subr.mxu0 0.0
    %556 = vmatpush1.msra.mxu0 0.0
    %557 = vmatprep.subr.mxu0 0.0
    %558 = vmatpush1.msra.mxu0 0.0
    %559 = vmatprep.subr.mxu0 0.0
    %560 = vmatpush1.msra.mxu0 0.0
    %561 = vmatprep.subr.mxu0 0.0
    %562 = vmatpush1.msra.mxu0 0.0
    %563 = vmatprep.subr.mxu0 0.0
    %564 = vmatpush1.msra.mxu0 0.0
    %565 = vmatprep.subr.mxu0 0.0
    %566 = vmatpush1.msra.mxu0 0.0
    %567 = vmatprep.subr.mxu0 0.0
    %568 = vmatpush1.msra.mxu0 0.0
    %569 = vmatprep.subr.mxu0 0.0
    %570 = vmatpush1.msra.mxu0 0.0
    %571 = vmatprep.subr.mxu0 0.0
    %572 = vmatpush1.msra.mxu0 0.0
    %573 = vmatprep.subr.mxu0 0.0
    %574 = vmatpush1.msra.mxu0 0.0
    %575 = vmatprep.subr.mxu0 0.0
    %576 = vmatpush1.msra.mxu0 0.0
    %577 = vmatprep.subr.mxu0 0.0
    %578 = vmatpush1.msra.mxu0 0.0
    %579 = vmatprep.subr.mxu0 0.0
    %580 = vmatpush1.msra.mxu0 0.0
    %581 = vmatprep.subr.mxu0 0.0
    %582 = vmatpush1.msra.mxu0 0.0
    %583 = vmatprep.subr.mxu0 0.0
    %584 = vmatpush1.msra.mxu0 0.0
    %585 = vmatprep.subr.mxu0 0.0
    %586 = vmatpush1.msra.mxu0 0.0
    %587 = vmatprep.subr.mxu0 0.0
    %588 = vmatpush1.msra.mxu0 0.0
    %589 = vmatprep.mubr.f32.mxu0 0.0
    %590 = vmatmul.mubr.f32.gmra.mrb[0].mxu0 %v523
    %v591 = vpop.f32.mrb[0].mxu0
    %v592 = vadd.f32 %v96, %v591
    %v593 = vpop.f32.mrb[0].mxu0
    %594 = vdwg.mxu0
    %v595 = vadd.f32 %v521, %v592
    %v596 = vxor.u32 %v595, 2147483648
    %v597 = vmul.f32 %v596, 1.442695
    %v598 = vpow.pop %v597
    %v599 = vadd.f32 %v598, 1.0
    %v600 = vrcp.pop %v599
    %v601 = vmul.f32 1.0, %v600
    %603 = vrot.lane.b32.xlu0 %v592, 64
    %v604 = vpop.permute.xlu0 %603
    %v606 = vmul.f32 %v601, %v604
    %608 = vrot.lane.b32.xlu0 %v606, 64
    %v609 = vpop.permute.xlu0 %608
    %v611 = vadd.f32 %v521, %v609
    %v612 = vtanh.pop %v611
    %v613 = vsub.f32 1.0, %v601
    %615 = vrot.lane.b32.xlu0 %v612, 96
    %v616 = vpop.permute.xlu0 %615
    %v618 = vmul.f32 %v613, %v616
    %619 = vrot.lane.b32.xlu0 %v489, 32
    %v620 = vpop.permute.xlu0 %619
    %v622 = vmul.f32 %v601, %v620
    %v623 = vadd.f32 %v618, %v622
    %v624 = vsel %vm90, 3, 6
    %vm625 = vcmp.lt.s32.totalorder %v624, %v201
    %627 = vrot.lane.b32.xlu0 %v623, 96
    %v628 = vpop.permute.xlu0 %627
    %v630 = vsel %vm625, %v628, %v489
    %v631 = vsel %vm625, %v628, 0.0
    %v634 = vunpack.c.l.s4 1966171168
    %v635 = vunpack.c.0.s8 %v634
    %v636 = vlaneseq
    %v637 = vshrl.u32 %v636, 7
    %v638 = vsub.s32 %v635, %v637
    %v639 = vrot.slane %v631, %v638
    %v640 = vcombine.high %v639, %v639
    %v642 = vunpack.c.l.s4 1966171168
    %v643 = vunpack.c.0.s8 %v642
    %v644 = vlaneseq
    %v645 = vshrl.u32 %v644, 7
    %v646 = vsub.s32 %v643, %v645
    %v647 = vrot.slane %v639, %v646
    %v649 = vunpack.c.l.s4 1966171168
    %v650 = vunpack.c.0.s8 %v649
    %v651 = vlaneseq
    %v652 = vshrl.u32 %v651, 7
    %v653 = vsub.s32 %v650, %v652
    %v654 = vrot.slane %v640, %v653
    %657 = vst.msk [vmem:[#allocation2 + $0x3] sm:$0x1] %vm233, %v647
    %658 = vst.msk [vmem:[#allocation2 + $0x13] sm:$0x1] %vm233, %v654
    %659 = vst.msk [vmem:[#allocation2 + $0x6] sm:$0x1] %vm236, %v647
    %660 = vst.msk [vmem:[#allocation2 + $0x16] sm:$0x1] %vm236, %v654
    %s661 = scalar_lea.vmem %s2, 8
    %v662 = vld [vmem:[%s661] sm:$0x3]
    %v664 = vsel %vm98, %v630, 0
    %666 = vmatprep.subr.mxu0 0.0
    %667 = vmatpush1.msra.mxu0 %v83
    %668 = vmatprep.subr.mxu0 0.0
    %669 = vmatpush1.msra.mxu0 %v84
    %670 = vmatprep.subr.mxu0 0.0
    %671 = vmatpush1.msra.mxu0 %v85
    %672 = vmatprep.subr.mxu0 0.0
    %673 = vmatpush1.msra.mxu0 %v86
    %674 = vmatprep.subr.mxu0 0.0
    %675 = vmatpush1.msra.mxu0 0.0
    %676 = vmatprep.subr.mxu0 0.0
    %677 = vmatpush1.msra.mxu0 0.0
    %678 = vmatprep.subr.mxu0 0.0
    %679 = vmatpush1.msra.mxu0 0.0
    %680 = vmatprep.subr.mxu0 0.0
    %681 = vmatpush1.msra.mxu0 0.0
    %682 = vmatprep.subr.mxu0 0.0
    %683 = vmatpush1.msra.mxu0 0.0
    %684 = vmatprep.subr.mxu0 0.0
    %685 = vmatpush1.msra.mxu0 0.0
    %686 = vmatprep.subr.mxu0 0.0
    %687 = vmatpush1.msra.mxu0 0.0
    %688 = vmatprep.subr.mxu0 0.0
    %689 = vmatpush1.msra.mxu0 0.0
    %690 = vmatprep.subr.mxu0 0.0
    %691 = vmatpush1.msra.mxu0 0.0
    %692 = vmatprep.subr.mxu0 0.0
    %693 = vmatpush1.msra.mxu0 0.0
    %694 = vmatprep.subr.mxu0 0.0
    %695 = vmatpush1.msra.mxu0 0.0
    %696 = vmatprep.subr.mxu0 0.0
    %697 = vmatpush1.msra.mxu0 0.0
    %698 = vmatprep.subr.mxu0 0.0
    %699 = vmatpush1.msra.mxu0 0.0
    %700 = vmatprep.subr.mxu0 0.0
    %701 = vmatpush1.msra.mxu0 0.0
    %702 = vmatprep.subr.mxu0 0.0
    %703 = vmatpush1.msra.mxu0 0.0
    %704 = vmatprep.subr.mxu0 0.0
    %705 = vmatpush1.msra.mxu0 0.0
    %706 = vmatprep.subr.mxu0 0.0
    %707 = vmatpush1.msra.mxu0 0.0
    %708 = vmatprep.subr.mxu0 0.0
    %709 = vmatpush1.msra.mxu0 0.0
    %710 = vmatprep.subr.mxu0 0.0
    %711 = vmatpush1.msra.mxu0 0.0
    %712 = vmatprep.subr.mxu0 0.0
    %713 = vmatpush1.msra.mxu0 0.0
    %714 = vmatprep.subr.mxu0 0.0
    %715 = vmatpush1.msra.mxu0 0.0
    %716 = vmatprep.subr.mxu0 0.0
    %717 = vmatpush1.msra.mxu0 0.0
    %718 = vmatprep.subr.mxu0 0.0
    %719 = vmatpush1.msra.mxu0 0.0
    %720 = vmatprep.subr.mxu0 0.0
    %721 = vmatpush1.msra.mxu0 0.0
    %722 = vmatprep.subr.mxu0 0.0
    %723 = vmatpush1.msra.mxu0 0.0
    %724 = vmatprep.subr.mxu0 0.0
    %725 = vmatpush1.msra.mxu0 0.0
    %726 = vmatprep.subr.mxu0 0.0
    %727 = vmatpush1.msra.mxu0 0.0
    %728 = vmatprep.subr.mxu0 0.0
    %729 = vmatpush1.msra.mxu0 0.0
    %730 = vmatprep.mubr.f32.mxu0 0.0
    %731 = vmatmul.mubr.f32.gmra.mrb[0].mxu0 %v664
    %v732 = vpop.f32.mrb[0].mxu0
    %v733 = vadd.f32 %v96, %v732
    %v734 = vpop.f32.mrb[0].mxu0
    %735 = vdwg.mxu0
    %v736 = vadd.f32 %v662, %v733
    %v737 = vxor.u32 %v736, 2147483648
    %v738 = vmul.f32 %v737, 1.442695
    %v739 = vpow.pop %v738
    %v740 = vadd.f32 %v739, 1.0
    %v741 = vrcp.pop %v740
    %v742 = vmul.f32 1.0, %v741
    %744 = vrot.lane.b32.xlu0 %v733, 64
    %v745 = vpop.permute.xlu0 %744
    %v747 = vmul.f32 %v742, %v745
    %749 = vrot.lane.b32.xlu0 %v747, 64
    %v750 = vpop.permute.xlu0 %749
    %v752 = vadd.f32 %v662, %v750
    %v753 = vtanh.pop %v752
    %v754 = vsub.f32 1.0, %v742
    %756 = vrot.lane.b32.xlu0 %v753, 96
    %v757 = vpop.permute.xlu0 %756
    %v759 = vmul.f32 %v754, %v757
    %760 = vrot.lane.b32.xlu0 %v630, 32
    %v761 = vpop.permute.xlu0 %760
    %v763 = vmul.f32 %v742, %v761
    %v764 = vadd.f32 %v759, %v763
    %v765 = vsel %vm90, 4, 5
    %vm766 = vcmp.lt.s32.totalorder %v765, %v201
    %768 = vrot.lane.b32.xlu0 %v764, 96
    %v769 = vpop.permute.xlu0 %768
    %v771 = vsel %vm766, %v769, %v630
    %v772 = vsel %vm766, %v769, 0.0
    %v775 = vunpack.c.l.s4 1966171168
    %v776 = vunpack.c.0.s8 %v775
    %v777 = vlaneseq
    %v778 = vshrl.u32 %v777, 7
    %v779 = vsub.s32 %v776, %v778
    %v780 = vrot.slane %v772, %v779
    %v781 = vcombine.high %v780, %v780
    %v783 = vunpack.c.l.s4 1966171168
    %v784 = vunpack.c.0.s8 %v783
    %v785 = vlaneseq
    %v786 = vshrl.u32 %v785, 7
    %v787 = vsub.s32 %v784, %v786
    %v788 = vrot.slane %v780, %v787
    %v790 = vunpack.c.l.s4 1966171168
    %v791 = vunpack.c.0.s8 %v790
    %v792 = vlaneseq
    %v793 = vshrl.u32 %v792, 7
    %v794 = vsub.s32 %v791, %v793
    %v795 = vrot.slane %v781, %v794
    %798 = vst.msk [vmem:[#allocation2 + $0x4] sm:$0x1] %vm233, %v788
    %799 = vst.msk [vmem:[#allocation2 + $0x14] sm:$0x1] %vm233, %v795
    %800 = vst.msk [vmem:[#allocation2 + $0x5] sm:$0x1] %vm236, %v788
    %801 = vst.msk [vmem:[#allocation2 + $0x15] sm:$0x1] %vm236, %v795
    %s802 = scalar_lea.vmem %s2, 10
    %v803 = vld [vmem:[%s802] sm:$0x3]
    %v805 = vsel %vm98, %v771, 0
    %807 = vmatprep.subr.mxu0 0.0
    %808 = vmatpush1.msra.mxu0 %v83
    %809 = vmatprep.subr.mxu0 0.0
    %810 = vmatpush1.msra.mxu0 %v84
    %811 = vmatprep.subr.mxu0 0.0
    %812 = vmatpush1.msra.mxu0 %v85
    %813 = vmatprep.subr.mxu0 0.0
    %814 = vmatpush1.msra.mxu0 %v86
    %815 = vmatprep.subr.mxu0 0.0
    %816 = vmatpush1.msra.mxu0 0.0
    %817 = vmatprep.subr.mxu0 0.0
    %818 = vmatpush1.msra.mxu0 0.0
    %819 = vmatprep.subr.mxu0 0.0
    %820 = vmatpush1.msra.mxu0 0.0
    %821 = vmatprep.subr.mxu0 0.0
    %822 = vmatpush1.msra.mxu0 0.0
    %823 = vmatprep.subr.mxu0 0.0
    %824 = vmatpush1.msra.mxu0 0.0
    %825 = vmatprep.subr.mxu0 0.0
    %826 = vmatpush1.msra.mxu0 0.0
    %827 = vmatprep.subr.mxu0 0.0
    %828 = vmatpush1.msra.mxu0 0.0
    %829 = vmatprep.subr.mxu0 0.0
    %830 = vmatpush1.msra.mxu0 0.0
    %831 = vmatprep.subr.mxu0 0.0
    %832 = vmatpush1.msra.mxu0 0.0
    %833 = vmatprep.subr.mxu0 0.0
    %834 = vmatpush1.msra.mxu0 0.0
    %835 = vmatprep.subr.mxu0 0.0
    %836 = vmatpush1.msra.mxu0 0.0
    %837 = vmatprep.subr.mxu0 0.0
    %838 = vmatpush1.msra.mxu0 0.0
    %839 = vmatprep.subr.mxu0 0.0
    %840 = vmatpush1.msra.mxu0 0.0
    %841 = vmatprep.subr.mxu0 0.0
    %842 = vmatpush1.msra.mxu0 0.0
    %843 = vmatprep.subr.mxu0 0.0
    %844 = vmatpush1.msra.mxu0 0.0
    %845 = vmatprep.subr.mxu0 0.0
    %846 = vmatpush1.msra.mxu0 0.0
    %847 = vmatprep.subr.mxu0 0.0
    %848 = vmatpush1.msra.mxu0 0.0
    %849 = vmatprep.subr.mxu0 0.0
    %850 = vmatpush1.msra.mxu0 0.0
    %851 = vmatprep.subr.mxu0 0.0
    %852 = vmatpush1.msra.mxu0 0.0
    %853 = vmatprep.subr.mxu0 0.0
    %854 = vmatpush1.msra.mxu0 0.0
    %855 = vmatprep.subr.mxu0 0.0
    %856 = vmatpush1.msra.mxu0 0.0
    %857 = vmatprep.subr.mxu0 0.0
    %858 = vmatpush1.msra.mxu0 0.0
    %859 = vmatprep.subr.mxu0 0.0
    %860 = vmatpush1.msra.mxu0 0.0
    %861 = vmatprep.subr.mxu0 0.0
    %862 = vmatpush1.msra.mxu0 0.0
    %863 = vmatprep.subr.mxu0 0.0
    %864 = vmatpush1.msra.mxu0 0.0
    %865 = vmatprep.subr.mxu0 0.0
    %866 = vmatpush1.msra.mxu0 0.0
    %867 = vmatprep.subr.mxu0 0.0
    %868 = vmatpush1.msra.mxu0 0.0
    %869 = vmatprep.subr.mxu0 0.0
    %870 = vmatpush1.msra.mxu0 0.0
    %871 = vmatprep.mubr.f32.mxu0 0.0
    %872 = vmatmul.mubr.f32.gmra.mrb[0].mxu0 %v805
    %v873 = vpop.f32.mrb[0].mxu0
    %v874 = vadd.f32 %v96, %v873
    %v875 = vpop.f32.mrb[0].mxu0
    %876 = vdwg.mxu0
    %v877 = vadd.f32 %v803, %v874
    %v878 = vxor.u32 %v877, 2147483648
    %v879 = vmul.f32 %v878, 1.442695
    %v880 = vpow.pop %v879
    %v881 = vadd.f32 %v880, 1.0
    %v882 = vrcp.pop %v881
    %v883 = vmul.f32 1.0, %v882
    %885 = vrot.lane.b32.xlu0 %v874, 64
    %v886 = vpop.permute.xlu0 %885
    %v888 = vmul.f32 %v883, %v886
    %890 = vrot.lane.b32.xlu0 %v888, 64
    %v891 = vpop.permute.xlu0 %890
    %v893 = vadd.f32 %v803, %v891
    %v894 = vtanh.pop %v893
    %v895 = vsub.f32 1.0, %v883
    %897 = vrot.lane.b32.xlu0 %v894, 96
    %v898 = vpop.permute.xlu0 %897
    %v900 = vmul.f32 %v895, %v898
    %901 = vrot.lane.b32.xlu0 %v771, 32
    %v902 = vpop.permute.xlu0 %901
    %v904 = vmul.f32 %v883, %v902
    %v905 = vadd.f32 %v900, %v904
    %v906 = vsel %vm90, 5, 4
    %vm907 = vcmp.lt.s32.totalorder %v906, %v201
    %909 = vrot.lane.b32.xlu0 %v905, 96
    %v910 = vpop.permute.xlu0 %909
    %v912 = vsel %vm907, %v910, %v771
    %v913 = vsel %vm907, %v910, 0.0
    %v916 = vunpack.c.l.s4 1966171168
    %v917 = vunpack.c.0.s8 %v916
    %v918 = vlaneseq
    %v919 = vshrl.u32 %v918, 7
    %v920 = vsub.s32 %v917, %v919
    %v921 = vrot.slane %v913, %v920
    %v922 = vcombine.high %v921, %v921
    %v924 = vunpack.c.l.s4 1966171168
    %v925 = vunpack.c.0.s8 %v924
    %v926 = vlaneseq
    %v927 = vshrl.u32 %v926, 7
    %v928 = vsub.s32 %v925, %v927
    %v929 = vrot.slane %v921, %v928
    %v931 = vunpack.c.l.s4 1966171168
    %v932 = vunpack.c.0.s8 %v931
    %v933 = vlaneseq
    %v934 = vshrl.u32 %v933, 7
    %v935 = vsub.s32 %v932, %v934
    %v936 = vrot.slane %v922, %v935
    %939 = vst.msk [vmem:[#allocation2 + $0x5] sm:$0x1] %vm233, %v929
    %940 = vst.msk [vmem:[#allocation2 + $0x15] sm:$0x1] %vm233, %v936
    %941 = vst.msk [vmem:[#allocation2 + $0x4] sm:$0x1] %vm236, %v929
    %942 = vst.msk [vmem:[#allocation2 + $0x14] sm:$0x1] %vm236, %v936
    %s943 = scalar_lea.vmem %s2, 12
    %v944 = vld [vmem:[%s943] sm:$0x3]
    %v946 = vsel %vm98, %v912, 0
    %948 = vmatprep.subr.mxu0 0.0
    %949 = vmatpush1.msra.mxu0 %v83
    %950 = vmatprep.subr.mxu0 0.0
    %951 = vmatpush1.msra.mxu0 %v84
    %952 = vmatprep.subr.mxu0 0.0
    %953 = vmatpush1.msra.mxu0 %v85
    %954 = vmatprep.subr.mxu0 0.0
    %955 = vmatpush1.msra.mxu0 %v86
    %956 = vmatprep.subr.mxu0 0.0
    %957 = vmatpush1.msra.mxu0 0.0
    %958 = vmatprep.subr.mxu0 0.0
    %959 = vmatpush1.msra.mxu0 0.0
    %960 = vmatprep.subr.mxu0 0.0
    %961 = vmatpush1.msra.mxu0 0.0
    %962 = vmatprep.subr.mxu0 0.0
    %963 = vmatpush1.msra.mxu0 0.0
    %964 = vmatprep.subr.mxu0 0.0
    %965 = vmatpush1.msra.mxu0 0.0
    %966 = vmatprep.subr.mxu0 0.0
    %967 = vmatpush1.msra.mxu0 0.0
    %968 = vmatprep.subr.mxu0 0.0
    %969 = vmatpush1.msra.mxu0 0.0
    %970 = vmatprep.subr.mxu0 0.0
    %971 = vmatpush1.msra.mxu0 0.0
    %972 = vmatprep.subr.mxu0 0.0
    %973 = vmatpush1.msra.mxu0 0.0
    %974 = vmatprep.subr.mxu0 0.0
    %975 = vmatpush1.msra.mxu0 0.0
    %976 = vmatprep.subr.mxu0 0.0
    %977 = vmatpush1.msra.mxu0 0.0
    %978 = vmatprep.subr.mxu0 0.0
    %979 = vmatpush1.msra.mxu0 0.0
    %980 = vmatprep.subr.mxu0 0.0
    %981 = vmatpush1.msra.mxu0 0.0
    %982 = vmatprep.subr.mxu0 0.0
    %983 = vmatpush1.msra.mxu0 0.0
    %984 = vmatprep.subr.mxu0 0.0
    %985 = vmatpush1.msra.mxu0 0.0
    %986 = vmatprep.subr.mxu0 0.0
    %987 = vmatpush1.msra.mxu0 0.0
    %988 = vmatprep.subr.mxu0 0.0
    %989 = vmatpush1.msra.mxu0 0.0
    %990 = vmatprep.subr.mxu0 0.0
    %991 = vmatpush1.msra.mxu0 0.0
    %992 = vmatprep.subr.mxu0 0.0
    %993 = vmatpush1.msra.mxu0 0.0
    %994 = vmatprep.subr.mxu0 0.0
    %995 = vmatpush1.msra.mxu0 0.0
    %996 = vmatprep.subr.mxu0 0.0
    %997 = vmatpush1.msra.mxu0 0.0
    %998 = vmatprep.subr.mxu0 0.0
    %999 = vmatpush1.msra.mxu0 0.0
    %1000 = vmatprep.subr.mxu0 0.0
    %1001 = vmatpush1.msra.mxu0 0.0
    %1002 = vmatprep.subr.mxu0 0.0
    %1003 = vmatpush1.msra.mxu0 0.0
    %1004 = vmatprep.subr.mxu0 0.0
    %1005 = vmatpush1.msra.mxu0 0.0
    %1006 = vmatprep.subr.mxu0 0.0
    %1007 = vmatpush1.msra.mxu0 0.0
    %1008 = vmatprep.subr.mxu0 0.0
    %1009 = vmatpush1.msra.mxu0 0.0
    %1010 = vmatprep.subr.mxu0 0.0
    %1011 = vmatpush1.msra.mxu0 0.0
    %1012 = vmatprep.mubr.f32.mxu0 0.0
    %1013 = vmatmul.mubr.f32.gmra.mrb[0].mxu0 %v946
    %v1014 = vpop.f32.mrb[0].mxu0
    %v1015 = vadd.f32 %v96, %v1014
    %v1016 = vpop.f32.mrb[0].mxu0
    %1017 = vdwg.mxu0
    %v1018 = vadd.f32 %v944, %v1015
    %v1019 = vxor.u32 %v1018, 2147483648
    %v1020 = vmul.f32 %v1019, 1.442695
    %v1021 = vpow.pop %v1020
    %v1022 = vadd.f32 %v1021, 1.0
    %v1023 = vrcp.pop %v1022
    %v1024 = vmul.f32 1.0, %v1023
    %1026 = vrot.lane.b32.xlu0 %v1015, 64
    %v1027 = vpop.permute.xlu0 %1026
    %v1029 = vmul.f32 %v1024, %v1027
    %1031 = vrot.lane.b32.xlu0 %v1029, 64
    %v1032 = vpop.permute.xlu0 %1031
    %v1034 = vadd.f32 %v944, %v1032
    %v1035 = vtanh.pop %v1034
    %v1036 = vsub.f32 1.0, %v1024
    %1038 = vrot.lane.b32.xlu0 %v1035, 96
    %v1039 = vpop.permute.xlu0 %1038
    %v1041 = vmul.f32 %v1036, %v1039
    %1042 = vrot.lane.b32.xlu0 %v912, 32
    %v1043 = vpop.permute.xlu0 %1042
    %v1045 = vmul.f32 %v1024, %v1043
    %v1046 = vadd.f32 %v1041, %v1045
    %v1047 = vsel %vm90, 6, 3
    %vm1048 = vcmp.lt.s32.totalorder %v1047, %v201
    %1050 = vrot.lane.b32.xlu0 %v1046, 96
    %v1051 = vpop.permute.xlu0 %1050
    %v1053 = vsel %vm1048, %v1051, %v912
    %v1054 = vsel %vm1048, %v1051, 0.0
    %v1057 = vunpack.c.l.s4 1966171168
    %v1058 = vunpack.c.0.s8 %v1057
    %v1059 = vlaneseq
    %v1060 = vshrl.u32 %v1059, 7
    %v1061 = vsub.s32 %v1058, %v1060
    %v1062 = vrot.slane %v1054, %v1061
    %v1063 = vcombine.high %v1062, %v1062
    %v1065 = vunpack.c.l.s4 1966171168
    %v1066 = vunpack.c.0.s8 %v1065
    %v1067 = vlaneseq
    %v1068 = vshrl.u32 %v1067, 7
    %v1069 = vsub.s32 %v1066, %v1068
    %v1070 = vrot.slane %v1062, %v1069
    %v1072 = vunpack.c.l.s4 1966171168
    %v1073 = vunpack.c.0.s8 %v1072
    %v1074 = vlaneseq
    %v1075 = vshrl.u32 %v1074, 7
    %v1076 = vsub.s32 %v1073, %v1075
    %v1077 = vrot.slane %v1063, %v1076
    %1080 = vst.msk [vmem:[#allocation2 + $0x6] sm:$0x1] %vm233, %v1070
    %1081 = vst.msk [vmem:[#allocation2 + $0x16] sm:$0x1] %vm233, %v1077
    %1082 = vst.msk [vmem:[#allocation2 + $0x3] sm:$0x1] %vm236, %v1070
    %1083 = vst.msk [vmem:[#allocation2 + $0x13] sm:$0x1] %vm236, %v1077
    %s1084 = scalar_lea.vmem %s2, 14
    %v1085 = vld [vmem:[%s1084] sm:$0x3]
    %v1087 = vsel %vm98, %v1053, 0
    %1089 = vmatprep.subr.mxu0 0.0
    %1090 = vmatpush1.msra.mxu0 %v83
    %1091 = vmatprep.subr.mxu0 0.0
    %1092 = vmatpush1.msra.mxu0 %v84
    %1093 = vmatprep.subr.mxu0 0.0
    %1094 = vmatpush1.msra.mxu0 %v85
    %1095 = vmatprep.subr.mxu0 0.0
    %1096 = vmatpush1.msra.mxu0 %v86
    %1097 = vmatprep.subr.mxu0 0.0
    %1098 = vmatpush1.msra.mxu0 0.0
    %1099 = vmatprep.subr.mxu0 0.0
    %1100 = vmatpush1.msra.mxu0 0.0
    %1101 = vmatprep.subr.mxu0 0.0
    %1102 = vmatpush1.msra.mxu0 0.0
    %1103 = vmatprep.subr.mxu0 0.0
    %1104 = vmatpush1.msra.mxu0 0.0
    %1105 = vmatprep.subr.mxu0 0.0
    %1106 = vmatpush1.msra.mxu0 0.0
    %1107 = vmatprep.subr.mxu0 0.0
    %1108 = vmatpush1.msra.mxu0 0.0
    %1109 = vmatprep.subr.mxu0 0.0
    %1110 = vmatpush1.msra.mxu0 0.0
    %1111 = vmatprep.subr.mxu0 0.0
    %1112 = vmatpush1.msra.mxu0 0.0
    %1113 = vmatprep.subr.mxu0 0.0
    %1114 = vmatpush1.msra.mxu0 0.0
    %1115 = vmatprep.subr.mxu0 0.0
    %1116 = vmatpush1.msra.mxu0 0.0
    %1117 = vmatprep.subr.mxu0 0.0
    %1118 = vmatpush1.msra.mxu0 0.0
    %1119 = vmatprep.subr.mxu0 0.0
    %1120 = vmatpush1.msra.mxu0 0.0
    %1121 = vmatprep.subr.mxu0 0.0
    %1122 = vmatpush1.msra.mxu0 0.0
    %1123 = vmatprep.subr.mxu0 0.0
    %1124 = vmatpush1.msra.mxu0 0.0
    %1125 = vmatprep.subr.mxu0 0.0
    %1126 = vmatpush1.msra.mxu0 0.0
    %1127 = vmatprep.subr.mxu0 0.0
    %1128 = vmatpush1.msra.mxu0 0.0
    %1129 = vmatprep.subr.mxu0 0.0
    %1130 = vmatpush1.msra.mxu0 0.0
    %1131 = vmatprep.subr.mxu0 0.0
    %1132 = vmatpush1.msra.mxu0 0.0
    %1133 = vmatprep.subr.mxu0 0.0
    %1134 = vmatpush1.msra.mxu0 0.0
    %1135 = vmatprep.subr.mxu0 0.0
    %1136 = vmatpush1.msra.mxu0 0.0
    %1137 = vmatprep.subr.mxu0 0.0
    %1138 = vmatpush1.msra.mxu0 0.0
    %1139 = vmatprep.subr.mxu0 0.0
    %1140 = vmatpush1.msra.mxu0 0.0
    %1141 = vmatprep.subr.mxu0 0.0
    %1142 = vmatpush1.msra.mxu0 0.0
    %1143 = vmatprep.subr.mxu0 0.0
    %1144 = vmatpush1.msra.mxu0 0.0
    %1145 = vmatprep.subr.mxu0 0.0
    %1146 = vmatpush1.msra.mxu0 0.0
    %1147 = vmatprep.subr.mxu0 0.0
    %1148 = vmatpush1.msra.mxu0 0.0
    %1149 = vmatprep.subr.mxu0 0.0
    %1150 = vmatpush1.msra.mxu0 0.0
    %1151 = vmatprep.subr.mxu0 0.0
    %1152 = vmatpush1.msra.mxu0 0.0
    %1153 = vmatprep.mubr.f32.mxu0 0.0
    %1154 = vmatmul.mubr.f32.gmra.mrb[0].mxu0 %v1087
    %v1155 = vpop.f32.mrb[0].mxu0
    %v1156 = vadd.f32 %v96, %v1155
    %v1157 = vpop.f32.mrb[0].mxu0
    %1158 = vdwg.mxu0
    %v1159 = vadd.f32 %v1085, %v1156
    %v1160 = vxor.u32 %v1159, 2147483648
    %v1161 = vmul.f32 %v1160, 1.442695
    %v1162 = vpow.pop %v1161
    %v1163 = vadd.f32 %v1162, 1.0
    %v1164 = vrcp.pop %v1163
    %v1165 = vmul.f32 1.0, %v1164
    %1167 = vrot.lane.b32.xlu0 %v1156, 64
    %v1168 = vpop.permute.xlu0 %1167
    %v1170 = vmul.f32 %v1165, %v1168
    %1172 = vrot.lane.b32.xlu0 %v1170, 64
    %v1173 = vpop.permute.xlu0 %1172
    %v1175 = vadd.f32 %v1085, %v1173
    %v1176 = vtanh.pop %v1175
    %v1177 = vsub.f32 1.0, %v1165
    %1179 = vrot.lane.b32.xlu0 %v1176, 96
    %v1180 = vpop.permute.xlu0 %1179
    %v1182 = vmul.f32 %v1177, %v1180
    %1183 = vrot.lane.b32.xlu0 %v1053, 32
    %v1184 = vpop.permute.xlu0 %1183
    %v1186 = vmul.f32 %v1165, %v1184
    %v1187 = vadd.f32 %v1182, %v1186
    %v1188 = vsel %vm90, 7, 2
    %vm1189 = vcmp.lt.s32.totalorder %v1188, %v201
    %1191 = vrot.lane.b32.xlu0 %v1187, 96
    %v1192 = vpop.permute.xlu0 %1191
    %v1194 = vsel %vm1189, %v1192, %v1053
    %v1195 = vsel %vm1189, %v1192, 0.0
    %v1198 = vunpack.c.l.s4 1966171168
    %v1199 = vunpack.c.0.s8 %v1198
    %v1200 = vlaneseq
    %v1201 = vshrl.u32 %v1200, 7
    %v1202 = vsub.s32 %v1199, %v1201
    %v1203 = vrot.slane %v1195, %v1202
    %v1204 = vcombine.high %v1203, %v1203
    %v1206 = vunpack.c.l.s4 1966171168
    %v1207 = vunpack.c.0.s8 %v1206
    %v1208 = vlaneseq
    %v1209 = vshrl.u32 %v1208, 7
    %v1210 = vsub.s32 %v1207, %v1209
    %v1211 = vrot.slane %v1203, %v1210
    %v1213 = vunpack.c.l.s4 1966171168
    %v1214 = vunpack.c.0.s8 %v1213
    %v1215 = vlaneseq
    %v1216 = vshrl.u32 %v1215, 7
    %v1217 = vsub.s32 %v1214, %v1216
    %v1218 = vrot.slane %v1204, %v1217
    %1221 = vst.msk [vmem:[#allocation2 + $0x7] sm:$0x1] %vm233, %v1211
    %1222 = vst.msk [vmem:[#allocation2 + $0x17] sm:$0x1] %vm233, %v1218
    %1223 = vst.msk [vmem:[#allocation2 + $0x2] sm:$0x1] %vm236, %v1211
    %1224 = vst.msk [vmem:[#allocation2 + $0x12] sm:$0x1] %vm236, %v1218
    %s1225 = scalar_lea.vmem %s2, 16
    %v1226 = vld [vmem:[%s1225] sm:$0x3]
    %v1228 = vsel %vm98, %v1194, 0
    %1230 = vmatprep.subr.mxu0 0.0
    %1231 = vmatpush1.msra.mxu0 %v83
    %1232 = vmatprep.subr.mxu0 0.0
    %1233 = vmatpush1.msra.mxu0 %v84
    %1234 = vmatprep.subr.mxu0 0.0
    %1235 = vmatpush1.msra.mxu0 %v85
    %1236 = vmatprep.subr.mxu0 0.0
    %1237 = vmatpush1.msra.mxu0 %v86
    %1238 = vmatprep.subr.mxu0 0.0
    %1239 = vmatpush1.msra.mxu0 0.0
    %1240 = vmatprep.subr.mxu0 0.0
    %1241 = vmatpush1.msra.mxu0 0.0
    %1242 = vmatprep.subr.mxu0 0.0
    %1243 = vmatpush1.msra.mxu0 0.0
    %1244 = vmatprep.subr.mxu0 0.0
    %1245 = vmatpush1.msra.mxu0 0.0
    %1246 = vmatprep.subr.mxu0 0.0
    %1247 = vmatpush1.msra.mxu0 0.0
    %1248 = vmatprep.subr.mxu0 0.0
    %1249 = vmatpush1.msra.mxu0 0.0
    %1250 = vmatprep.subr.mxu0 0.0
    %1251 = vmatpush1.msra.mxu0 0.0
    %1252 = vmatprep.subr.mxu0 0.0
    %1253 = vmatpush1.msra.mxu0 0.0
    %1254 = vmatprep.subr.mxu0 0.0
    %1255 = vmatpush1.msra.mxu0 0.0
    %1256 = vmatprep.subr.mxu0 0.0
    %1257 = vmatpush1.msra.mxu0 0.0
    %1258 = vmatprep.subr.mxu0 0.0
    %1259 = vmatpush1.msra.mxu0 0.0
    %1260 = vmatprep.subr.mxu0 0.0
    %1261 = vmatpush1.msra.mxu0 0.0
    %1262 = vmatprep.subr.mxu0 0.0
    %1263 = vmatpush1.msra.mxu0 0.0
    %1264 = vmatprep.subr.mxu0 0.0
    %1265 = vmatpush1.msra.mxu0 0.0
    %1266 = vmatprep.subr.mxu0 0.0
    %1267 = vmatpush1.msra.mxu0 0.0
    %1268 = vmatprep.subr.mxu0 0.0
    %1269 = vmatpush1.msra.mxu0 0.0
    %1270 = vmatprep.subr.mxu0 0.0
    %1271 = vmatpush1.msra.mxu0 0.0
    %1272 = vmatprep.subr.mxu0 0.0
    %1273 = vmatpush1.msra.mxu0 0.0
    %1274 = vmatprep.subr.mxu0 0.0
    %1275 = vmatpush1.msra.mxu0 0.0
    %1276 = vmatprep.subr.mxu0 0.0
    %1277 = vmatpush1.msra.mxu0 0.0
    %1278 = vmatprep.subr.mxu0 0.0
    %1279 = vmatpush1.msra.mxu0 0.0
    %1280 = vmatprep.subr.mxu0 0.0
    %1281 = vmatpush1.msra.mxu0 0.0
    %1282 = vmatprep.subr.mxu0 0.0
    %1283 = vmatpush1.msra.mxu0 0.0
    %1284 = vmatprep.subr.mxu0 0.0
    %1285 = vmatpush1.msra.mxu0 0.0
    %1286 = vmatprep.subr.mxu0 0.0
    %1287 = vmatpush1.msra.mxu0 0.0
    %1288 = vmatprep.subr.mxu0 0.0
    %1289 = vmatpush1.msra.mxu0 0.0
    %1290 = vmatprep.subr.mxu0 0.0
    %1291 = vmatpush1.msra.mxu0 0.0
    %1292 = vmatprep.subr.mxu0 0.0
    %1293 = vmatpush1.msra.mxu0 0.0
    %1294 = vmatprep.mubr.f32.mxu0 0.0
    %1295 = vmatmul.mubr.f32.gmra.mrb[0].mxu0 %v1228
    %v1296 = vpop.f32.mrb[0].mxu0
    %v1297 = vadd.f32 %v96, %v1296
    %v1298 = vpop.f32.mrb[0].mxu0
    %1299 = vdwg.mxu0
    %v1300 = vadd.f32 %v1226, %v1297
    %v1301 = vxor.u32 %v1300, 2147483648
    %v1302 = vmul.f32 %v1301, 1.442695
    %v1303 = vpow.pop %v1302
    %v1304 = vadd.f32 %v1303, 1.0
    %v1305 = vrcp.pop %v1304
    %v1306 = vmul.f32 1.0, %v1305
    %1308 = vrot.lane.b32.xlu0 %v1297, 64
    %v1309 = vpop.permute.xlu0 %1308
    %v1311 = vmul.f32 %v1306, %v1309
    %1313 = vrot.lane.b32.xlu0 %v1311, 64
    %v1314 = vpop.permute.xlu0 %1313
    %v1316 = vadd.f32 %v1226, %v1314
    %v1317 = vtanh.pop %v1316
    %v1318 = vsub.f32 1.0, %v1306
    %1320 = vrot.lane.b32.xlu0 %v1317, 96
    %v1321 = vpop.permute.xlu0 %1320
    %v1323 = vmul.f32 %v1318, %v1321
    %1324 = vrot.lane.b32.xlu0 %v1194, 32
    %v1325 = vpop.permute.xlu0 %1324
    %v1327 = vmul.f32 %v1306, %v1325
    %v1328 = vadd.f32 %v1323, %v1327
    %v1329 = vsel %vm90, 8, 1
    %vm1330 = vcmp.lt.s32.totalorder %v1329, %v201
    %1332 = vrot.lane.b32.xlu0 %v1328, 96
    %v1333 = vpop.permute.xlu0 %1332
    %v1335 = vsel %vm1330, %v1333, %v1194
    %v1336 = vsel %vm1330, %v1333, 0.0
    %v1339 = vunpack.c.l.s4 1966171168
    %v1340 = vunpack.c.0.s8 %v1339
    %v1341 = vlaneseq
    %v1342 = vshrl.u32 %v1341, 7
    %v1343 = vsub.s32 %v1340, %v1342
    %v1344 = vrot.slane %v1336, %v1343
    %v1345 = vcombine.high %v1344, %v1344
    %v1347 = vunpack.c.l.s4 1966171168
    %v1348 = vunpack.c.0.s8 %v1347
    %v1349 = vlaneseq
    %v1350 = vshrl.u32 %v1349, 7
    %v1351 = vsub.s32 %v1348, %v1350
    %v1352 = vrot.slane %v1344, %v1351
    %v1354 = vunpack.c.l.s4 1966171168
    %v1355 = vunpack.c.0.s8 %v1354
    %v1356 = vlaneseq
    %v1357 = vshrl.u32 %v1356, 7
    %v1358 = vsub.s32 %v1355, %v1357
    %v1359 = vrot.slane %v1345, %v1358
    %1362 = vst.msk [vmem:[#allocation2 + $0x8] sm:$0x1] %vm233, %v1352
    %1363 = vst.msk [vmem:[#allocation2 + $0x18] sm:$0x1] %vm233, %v1359
    %1364 = vst.msk [vmem:[#allocation2 + $0x1] sm:$0x1] %vm236, %v1352
    %1365 = vst.msk [vmem:[#allocation2 + $0x11] sm:$0x1] %vm236, %v1359
    %s1366 = scalar_lea.vmem %s2, 18
    %v1367 = vld [vmem:[%s1366] sm:$0x3]
    %v1369 = vsel %vm98, %v1335, 0
    %1371 = vmatprep.subr.mxu0 0.0
    %1372 = vmatpush1.msra.mxu0 %v83
    %1373 = vmatprep.subr.mxu0 0.0
    %1374 = vmatpush1.msra.mxu0 %v84
    %1375 = vmatprep.subr.mxu0 0.0
    %1376 = vmatpush1.msra.mxu0 %v85
    %1377 = vmatprep.subr.mxu0 0.0
    %1378 = vmatpush1.msra.mxu0 %v86
    %1379 = vmatprep.subr.mxu0 0.0
    %1380 = vmatpush1.msra.mxu0 0.0
    %1381 = vmatprep.subr.mxu0 0.0
    %1382 = vmatpush1.msra.mxu0 0.0
    %1383 = vmatprep.subr.mxu0 0.0
    %1384 = vmatpush1.msra.mxu0 0.0
    %1385 = vmatprep.subr.mxu0 0.0
    %1386 = vmatpush1.msra.mxu0 0.0
    %1387 = vmatprep.subr.mxu0 0.0
    %1388 = vmatpush1.msra.mxu0 0.0
    %1389 = vmatprep.subr.mxu0 0.0
    %1390 = vmatpush1.msra.mxu0 0.0
    %1391 = vmatprep.subr.mxu0 0.0
    %1392 = vmatpush1.msra.mxu0 0.0
    %1393 = vmatprep.subr.mxu0 0.0
    %1394 = vmatpush1.msra.mxu0 0.0
    %1395 = vmatprep.subr.mxu0 0.0
    %1396 = vmatpush1.msra.mxu0 0.0
    %1397 = vmatprep.subr.mxu0 0.0
    %1398 = vmatpush1.msra.mxu0 0.0
    %1399 = vmatprep.subr.mxu0 0.0
    %1400 = vmatpush1.msra.mxu0 0.0
    %1401 = vmatprep.subr.mxu0 0.0
    %1402 = vmatpush1.msra.mxu0 0.0
    %1403 = vmatprep.subr.mxu0 0.0
    %1404 = vmatpush1.msra.mxu0 0.0
    %1405 = vmatprep.subr.mxu0 0.0
    %1406 = vmatpush1.msra.mxu0 0.0
    %1407 = vmatprep.subr.mxu0 0.0
    %1408 = vmatpush1.msra.mxu0 0.0
    %1409 = vmatprep.subr.mxu0 0.0
    %1410 = vmatpush1.msra.mxu0 0.0
    %1411 = vmatprep.subr.mxu0 0.0
    %1412 = vmatpush1.msra.mxu0 0.0
    %1413 = vmatprep.subr.mxu0 0.0
    %1414 = vmatpush1.msra.mxu0 0.0
    %1415 = vmatprep.subr.mxu0 0.0
    %1416 = vmatpush1.msra.mxu0 0.0
    %1417 = vmatprep.subr.mxu0 0.0
    %1418 = vmatpush1.msra.mxu0 0.0
    %1419 = vmatprep.subr.mxu0 0.0
    %1420 = vmatpush1.msra.mxu0 0.0
    %1421 = vmatprep.subr.mxu0 0.0
    %1422 = vmatpush1.msra.mxu0 0.0
    %1423 = vmatprep.subr.mxu0 0.0
    %1424 = vmatpush1.msra.mxu0 0.0
    %1425 = vmatprep.subr.mxu0 0.0
    %1426 = vmatpush1.msra.mxu0 0.0
    %1427 = vmatprep.subr.mxu0 0.0
    %1428 = vmatpush1.msra.mxu0 0.0
    %1429 = vmatprep.subr.mxu0 0.0
    %1430 = vmatpush1.msra.mxu0 0.0
    %1431 = vmatprep.subr.mxu0 0.0
    %1432 = vmatpush1.msra.mxu0 0.0
    %1433 = vmatprep.subr.mxu0 0.0
    %1434 = vmatpush1.msra.mxu0 0.0
    %1435 = vmatprep.mubr.f32.mxu0 0.0
    %1436 = vmatmul.mubr.f32.gmra.mrb[0].mxu0 %v1369
    %v1437 = vpop.f32.mrb[0].mxu0
    %v1438 = vadd.f32 %v96, %v1437
    %v1439 = vpop.f32.mrb[0].mxu0
    %1440 = vdwg.mxu0
    %v1441 = vadd.f32 %v1367, %v1438
    %v1442 = vxor.u32 %v1441, 2147483648
    %v1443 = vmul.f32 %v1442, 1.442695
    %v1444 = vpow.pop %v1443
    %v1445 = vadd.f32 %v1444, 1.0
    %v1446 = vrcp.pop %v1445
    %v1447 = vmul.f32 1.0, %v1446
    %1449 = vrot.lane.b32.xlu0 %v1438, 64
    %v1450 = vpop.permute.xlu0 %1449
    %v1452 = vmul.f32 %v1447, %v1450
    %1454 = vrot.lane.b32.xlu0 %v1452, 64
    %v1455 = vpop.permute.xlu0 %1454
    %v1457 = vadd.f32 %v1367, %v1455
    %v1458 = vtanh.pop %v1457
    %v1459 = vsub.f32 1.0, %v1447
    %1461 = vrot.lane.b32.xlu0 %v1458, 96
    %v1462 = vpop.permute.xlu0 %1461
    %v1464 = vmul.f32 %v1459, %v1462
    %1465 = vrot.lane.b32.xlu0 %v1335, 32
    %v1466 = vpop.permute.xlu0 %1465
    %v1468 = vmul.f32 %v1447, %v1466
    %v1469 = vadd.f32 %v1464, %v1468
    %v1470 = vsel %vm90, 9, 0
    %vm1471 = vcmp.lt.s32.totalorder %v1470, %v201
    %1473 = vrot.lane.b32.xlu0 %v1469, 96
    %v1474 = vpop.permute.xlu0 %1473
    %v1476 = vsel %vm1471, %v1474, %v1335
    %v1477 = vsel %vm1471, %v1474, 0.0
    %v1480 = vunpack.c.l.s4 1966171168
    %v1481 = vunpack.c.0.s8 %v1480
    %v1482 = vlaneseq
    %v1483 = vshrl.u32 %v1482, 7
    %v1484 = vsub.s32 %v1481, %v1483
    %v1485 = vrot.slane %v1477, %v1484
    %v1486 = vcombine.high %v1485, %v1485
    %v1488 = vunpack.c.l.s4 1966171168
    %v1489 = vunpack.c.0.s8 %v1488
    %v1490 = vlaneseq
    %v1491 = vshrl.u32 %v1490, 7
    %v1492 = vsub.s32 %v1489, %v1491
    %v1493 = vrot.slane %v1485, %v1492
    %v1495 = vunpack.c.l.s4 1966171168
    %v1496 = vunpack.c.0.s8 %v1495
    %v1497 = vlaneseq
    %v1498 = vshrl.u32 %v1497, 7
    %v1499 = vsub.s32 %v1496, %v1498
    %v1500 = vrot.slane %v1486, %v1499
    %1503 = vst.msk [vmem:[#allocation2 + $0x9] sm:$0x1] %vm233, %v1493
    %1504 = vst.msk [vmem:[#allocation2 + $0x19] sm:$0x1] %vm233, %v1500
    %1505 = vst.msk [vmem:[#allocation2] sm:$0x1] %vm236, %v1493
    %1506 = vst.msk [vmem:[#allocation2 + $0x10] sm:$0x1] %vm236, %v1500
    %v1507 = vld [vmem:[%s5] sm:$0xff]
    %v1508 = vld [vmem:[%s5 + $0x8] sm:$0xff]
    %v1509 = vld [vmem:[%s5 + $0x10] sm:$0xff]
    %v1510 = vld [vmem:[%s5 + $0x18] sm:$0xff]
    %v1511 = vld [vmem:[%s6] sm:$0x1]
    %v1513 = vlaneseq
    %v1514 = vshrl.u32 %v1513, 7
    %v1515 = vsub.s32 0, %v1514
    %v1516 = vrot.slane %v1511, %v1515
    %v1519 = vsel %vm98, %v1476, 0
    %1521 = vmatprep.subr.mxu0 0.0
    %1522 = vmatpush1.msra.mxu0 %v1507
    %1523 = vmatprep.subr.mxu0 0.0
    %1524 = vmatpush1.msra.mxu0 %v1508
    %1525 = vmatprep.subr.mxu0 0.0
    %1526 = vmatpush1.msra.mxu0 %v1509
    %1527 = vmatprep.subr.mxu0 0.0
    %1528 = vmatpush1.msra.mxu0 %v1510
    %1529 = vmatprep.subr.mxu0 0.0
    %1530 = vmatpush1.msra.mxu0 0.0
    %1531 = vmatprep.subr.mxu0 0.0
    %1532 = vmatpush1.msra.mxu0 0.0
    %1533 = vmatprep.subr.mxu0 0.0
    %1534 = vmatpush1.msra.mxu0 0.0
    %1535 = vmatprep.subr.mxu0 0.0
    %1536 = vmatpush1.msra.mxu0 0.0
    %1537 = vmatprep.subr.mxu0 0.0
    %1538 = vmatpush1.msra.mxu0 0.0
    %1539 = vmatprep.subr.mxu0 0.0
    %1540 = vmatpush1.msra.mxu0 0.0
    %1541 = vmatprep.subr.mxu0 0.0
    %1542 = vmatpush1.msra.mxu0 0.0
    %1543 = vmatprep.subr.mxu0 0.0
    %1544 = vmatpush1.msra.mxu0 0.0
    %1545 = vmatprep.subr.mxu0 0.0
    %1546 = vmatpush1.msra.mxu0 0.0
    %1547 = vmatprep.subr.mxu0 0.0
    %1548 = vmatpush1.msra.mxu0 0.0
    %1549 = vmatprep.subr.mxu0 0.0
    %1550 = vmatpush1.msra.mxu0 0.0
    %1551 = vmatprep.subr.mxu0 0.0
    %1552 = vmatpush1.msra.mxu0 0.0
    %1553 = vmatprep.subr.mxu0 0.0
    %1554 = vmatpush1.msra.mxu0 0.0
    %1555 = vmatprep.subr.mxu0 0.0
    %1556 = vmatpush1.msra.mxu0 0.0
    %1557 = vmatprep.subr.mxu0 0.0
    %1558 = vmatpush1.msra.mxu0 0.0
    %1559 = vmatprep.subr.mxu0 0.0
    %1560 = vmatpush1.msra.mxu0 0.0
    %1561 = vmatprep.subr.mxu0 0.0
    %1562 = vmatpush1.msra.mxu0 0.0
    %1563 = vmatprep.subr.mxu0 0.0
    %1564 = vmatpush1.msra.mxu0 0.0
    %1565 = vmatprep.subr.mxu0 0.0
    %1566 = vmatpush1.msra.mxu0 0.0
    %1567 = vmatprep.subr.mxu0 0.0
    %1568 = vmatpush1.msra.mxu0 0.0
    %1569 = vmatprep.subr.mxu0 0.0
    %1570 = vmatpush1.msra.mxu0 0.0
    %1571 = vmatprep.subr.mxu0 0.0
    %1572 = vmatpush1.msra.mxu0 0.0
    %1573 = vmatprep.subr.mxu0 0.0
    %1574 = vmatpush1.msra.mxu0 0.0
    %1575 = vmatprep.subr.mxu0 0.0
    %1576 = vmatpush1.msra.mxu0 0.0
    %1577 = vmatprep.subr.mxu0 0.0
    %1578 = vmatpush1.msra.mxu0 0.0
    %1579 = vmatprep.subr.mxu0 0.0
    %1580 = vmatpush1.msra.mxu0 0.0
    %1581 = vmatprep.subr.mxu0 0.0
    %1582 = vmatpush1.msra.mxu0 0.0
    %1583 = vmatprep.subr.mxu0 0.0
    %1584 = vmatpush1.msra.mxu0 0.0
    %1585 = vmatprep.mubr.f32.mxu0 0.0
    %1586 = vmatmul.mubr.f32.gmra.mrb[0].mxu0 %v1519
    %v1587 = vpop.f32.mrb[0].mxu0
    %v1588 = vadd.f32 %v1516, %v1587
    %v1589 = vpop.f32.mrb[0].mxu0
    %1590 = vdwg.mxu0
    %v1591 = vtanh.pop %v1588
    %v1592 = vld [vmem:[%s9] sm:$0xff]
    %v1593 = vld [vmem:[%s9 + $0x8] sm:$0xff]
    %v1594 = vld [vmem:[%s9 + $0x10] sm:$0xff]
    %v1595 = vld [vmem:[%s9 + $0x18] sm:$0xff]
    %v1596 = vld [vmem:[%s10] sm:$0x1]
    %v1597 = vld [vmem:[#allocation2] sm:$0xff]
    %v1598 = vld [vmem:[#allocation2 + $0x8] sm:$0x3]
    %v1600 = vlaneseq
    %v1601 = vshrl.u32 %v1600, 7
    %v1602 = vsub.s32 0, %v1601
    %v1603 = vrot.slane %v1596, %v1602
    %v1606 = vsel %vm98, %v1597, 0
    %v1609 = vsel %vm98, %v1598, 0
    %1611 = vmatprep.subr.mxu0 0.0
    %1612 = vmatpush1.msra.mxu0 %v1592
    %1613 = vmatprep.subr.mxu0 0.0
    %1614 = vmatpush1.msra.mxu0 %v1593
    %1615 = vmatprep.subr.mxu0 0.0
    %1616 = vmatpush1.msra.mxu0 %v1594
    %1617 = vmatprep.subr.mxu0 0.0
    %1618 = vmatpush1.msra.mxu0 %v1595
    %1619 = vmatprep.subr.mxu0 0.0
    %1620 = vmatpush1.msra.mxu0 0.0
    %1621 = vmatprep.subr.mxu0 0.0
    %1622 = vmatpush1.msra.mxu0 0.0
    %1623 = vmatprep.subr.mxu0 0.0
    %1624 = vmatpush1.msra.mxu0 0.0
    %1625 = vmatprep.subr.mxu0 0.0
    %1626 = vmatpush1.msra.mxu0 0.0
    %1627 = vmatprep.subr.mxu0 0.0
    %1628 = vmatpush1.msra.mxu0 0.0
    %1629 = vmatprep.subr.mxu0 0.0
    %1630 = vmatpush1.msra.mxu0 0.0
    %1631 = vmatprep.subr.mxu0 0.0
    %1632 = vmatpush1.msra.mxu0 0.0
    %1633 = vmatprep.subr.mxu0 0.0
    %1634 = vmatpush1.msra.mxu0 0.0
    %1635 = vmatprep.subr.mxu0 0.0
    %1636 = vmatpush1.msra.mxu0 0.0
    %1637 = vmatprep.subr.mxu0 0.0
    %1638 = vmatpush1.msra.mxu0 0.0
    %1639 = vmatprep.subr.mxu0 0.0
    %1640 = vmatpush1.msra.mxu0 0.0
    %1641 = vmatprep.subr.mxu0 0.0
    %1642 = vmatpush1.msra.mxu0 0.0
    %1643 = vmatprep.subr.mxu0 0.0
    %1644 = vmatpush1.msra.mxu0 0.0
    %1645 = vmatprep.subr.mxu0 0.0
    %1646 = vmatpush1.msra.mxu0 0.0
    %1647 = vmatprep.subr.mxu0 0.0
    %1648 = vmatpush1.msra.mxu0 0.0
    %1649 = vmatprep.subr.mxu0 0.0
    %1650 = vmatpush1.msra.mxu0 0.0
    %1651 = vmatprep.subr.mxu0 0.0
    %1652 = vmatpush1.msra.mxu0 0.0
    %1653 = vmatprep.subr.mxu0 0.0
    %1654 = vmatpush1.msra.mxu0 0.0
    %1655 = vmatprep.subr.mxu0 0.0
    %1656 = vmatpush1.msra.mxu0 0.0
    %1657 = vmatprep.subr.mxu0 0.0
    %1658 = vmatpush1.msra.mxu0 0.0
    %1659 = vmatprep.subr.mxu0 0.0
    %1660 = vmatpush1.msra.mxu0 0.0
    %1661 = vmatprep.subr.mxu0 0.0
    %1662 = vmatpush1.msra.mxu0 0.0
    %1663 = vmatprep.subr.mxu0 0.0
    %1664 = vmatpush1.msra.mxu0 0.0
    %1665 = vmatprep.subr.mxu0 0.0
    %1666 = vmatpush1.msra.mxu0 0.0
    %1667 = vmatprep.subr.mxu0 0.0
    %1668 = vmatpush1.msra.mxu0 0.0
    %1669 = vmatprep.subr.mxu0 0.0
    %1670 = vmatpush1.msra.mxu0 0.0
    %1671 = vmatprep.subr.mxu0 0.0
    %1672 = vmatpush1.msra.mxu0 0.0
    %1673 = vmatprep.subr.mxu0 0.0
    %1674 = vmatpush1.msra.mxu0 0.0
    %1675 = vmatprep.mubr.f32.mxu0 0.0
    %1676 = vmatmul.mubr.f32.gmra.mrb[0].mxu0 %v1606
    %v1677 = vpop.f32.mrb[0].mxu0
    %v1678 = vadd.f32 %v1603, %v1677
    %v1679 = vpop.f32.mrb[0].mxu0
    %1680 = vmatprep.mubr.f32.mxu0 0.0
    %1681 = vmatmul.mubr.f32.gmra.mrb[0].mxu0 %v1609
    %v1682 = vpop.f32.mrb[0].mxu0
    %v1683 = vadd.f32 %v1603, %v1682
    %v1684 = vpop.f32.mrb[0].mxu0
    %1685 = vdwg.mxu0
    %1686 = vst.msk [vmem:[#allocation3] sm:$0xff] %vm98, %v1678
    %vm1687 = vcmask 254976
    %1688 = vst.msk [vmem:[#allocation3 + $0x8] sm:$0x3] %vm1687, %v1683
    %s1689 = scalar_lea.vmem [#allocation2], 16
    %v1690 = vld [vmem:[%s1689] sm:$0xff]
    %v1691 = vld [vmem:[%s1689 + $0x8] sm:$0x3]
    %v1693 = vsel %vm98, %v1690, 0
    %v1696 = vsel %vm98, %v1691, 0
    %1698 = vmatprep.subr.mxu0 0.0
    %1699 = vmatpush1.msra.mxu0 %v1592
    %1700 = vmatprep.subr.mxu0 0.0
    %1701 = vmatpush1.msra.mxu0 %v1593
    %1702 = vmatprep.subr.mxu0 0.0
    %1703 = vmatpush1.msra.mxu0 %v1594
    %1704 = vmatprep.subr.mxu0 0.0
    %1705 = vmatpush1.msra.mxu0 %v1595
    %1706 = vmatprep.subr.mxu0 0.0
    %1707 = vmatpush1.msra.mxu0 0.0
    %1708 = vmatprep.subr.mxu0 0.0
    %1709 = vmatpush1.msra.mxu0 0.0
    %1710 = vmatprep.subr.mxu0 0.0
    %1711 = vmatpush1.msra.mxu0 0.0
    %1712 = vmatprep.subr.mxu0 0.0
    %1713 = vmatpush1.msra.mxu0 0.0
    %1714 = vmatprep.subr.mxu0 0.0
    %1715 = vmatpush1.msra.mxu0 0.0
    %1716 = vmatprep.subr.mxu0 0.0
    %1717 = vmatpush1.msra.mxu0 0.0
    %1718 = vmatprep.subr.mxu0 0.0
    %1719 = vmatpush1.msra.mxu0 0.0
    %1720 = vmatprep.subr.mxu0 0.0
    %1721 = vmatpush1.msra.mxu0 0.0
    %1722 = vmatprep.subr.mxu0 0.0
    %1723 = vmatpush1.msra.mxu0 0.0
    %1724 = vmatprep.subr.mxu0 0.0
    %1725 = vmatpush1.msra.mxu0 0.0
    %1726 = vmatprep.subr.mxu0 0.0
    %1727 = vmatpush1.msra.mxu0 0.0
    %1728 = vmatprep.subr.mxu0 0.0
    %1729 = vmatpush1.msra.mxu0 0.0
    %1730 = vmatprep.subr.mxu0 0.0
    %1731 = vmatpush1.msra.mxu0 0.0
    %1732 = vmatprep.subr.mxu0 0.0
    %1733 = vmatpush1.msra.mxu0 0.0
    %1734 = vmatprep.subr.mxu0 0.0
    %1735 = vmatpush1.msra.mxu0 0.0
    %1736 = vmatprep.subr.mxu0 0.0
    %1737 = vmatpush1.msra.mxu0 0.0
    %1738 = vmatprep.subr.mxu0 0.0
    %1739 = vmatpush1.msra.mxu0 0.0
    %1740 = vmatprep.subr.mxu0 0.0
    %1741 = vmatpush1.msra.mxu0 0.0
    %1742 = vmatprep.subr.mxu0 0.0
    %1743 = vmatpush1.msra.mxu0 0.0
    %1744 = vmatprep.subr.mxu0 0.0
    %1745 = vmatpush1.msra.mxu0 0.0
    %1746 = vmatprep.subr.mxu0 0.0
    %1747 = vmatpush1.msra.mxu0 0.0
    %1748 = vmatprep.subr.mxu0 0.0
    %1749 = vmatpush1.msra.mxu0 0.0
    %1750 = vmatprep.subr.mxu0 0.0
    %1751 = vmatpush1.msra.mxu0 0.0
    %1752 = vmatprep.subr.mxu0 0.0
    %1753 = vmatpush1.msra.mxu0 0.0
    %1754 = vmatprep.subr.mxu0 0.0
    %1755 = vmatpush1.msra.mxu0 0.0
    %1756 = vmatprep.subr.mxu0 0.0
    %1757 = vmatpush1.msra.mxu0 0.0
    %1758 = vmatprep.subr.mxu0 0.0
    %1759 = vmatpush1.msra.mxu0 0.0
    %1760 = vmatprep.subr.mxu0 0.0
    %1761 = vmatpush1.msra.mxu0 0.0
    %1762 = vmatprep.mubr.f32.mxu0 0.0
    %1763 = vmatmul.mubr.f32.gmra.mrb[0].mxu0 %v1693
    %v1764 = vpop.f32.mrb[0].mxu0
    %v1765 = vadd.f32 %v1603, %v1764
    %v1766 = vpop.f32.mrb[0].mxu0
    %1767 = vmatprep.mubr.f32.mxu0 0.0
    %1768 = vmatmul.mubr.f32.gmra.mrb[0].mxu0 %v1696
    %v1769 = vpop.f32.mrb[0].mxu0
    %v1770 = vadd.f32 %v1603, %v1769
    %v1771 = vpop.f32.mrb[0].mxu0
    %1772 = vdwg.mxu0
    %s1773 = scalar_lea.vmem [#allocation3], 16
    %1774 = vst.msk [vmem:[%s1773] sm:$0xff] %vm98, %v1765
    %1775 = vst.msk [vmem:[%s1773 + $0x8] sm:$0x3] %vm1687, %v1770
    %vm1776 = vcmask 140288
    %1777 = vst.msk [vmem:[#allocation7] sm:$0x3] %vm1776, 0.0
    %1778 = vst.msk [vmem:[#allocation7 + $0x2] sm:$0x3] %vm1776, 0.0
    %1779 = vst.msk [vmem:[#allocation7 + $0x4] sm:$0x3] %vm1776, 0.0
    %1780 = vst.msk [vmem:[#allocation7 + $0x6] sm:$0x3] %vm1776, 0.0
    %1781 = vst.msk [vmem:[#allocation7 + $0x8] sm:$0x3] %vm1776, 0.0
    %1782 = vst.msk [vmem:[#allocation7 + $0xa] sm:$0x3] %vm1776, 0.0
    %v1784 = vunpack.c.l.s4 1966171168
    %v1785 = vunpack.c.0.s8 %v1784
    %v1786 = vlaneseq
    %v1787 = vshrl.u32 %v1786, 7
    %v1788 = vsub.s32 %v1785, %v1787
    %v1789 = vrot.slane %v82, %v1788
    %v1790 = vcombine.high %v1789, %v1789
    %v1792 = vunpack.c.l.s4 1966171168
    %v1793 = vunpack.c.0.s8 %v1792
    %v1794 = vlaneseq
    %v1795 = vshrl.u32 %v1794, 7
    %v1796 = vsub.s32 %v1793, %v1795
    %v1797 = vrot.slane %v1789, %v1796
    %v1799 = vunpack.c.l.s4 1966171168
    %v1800 = vunpack.c.0.s8 %v1799
    %v1801 = vlaneseq
    %v1802 = vshrl.u32 %v1801, 7
    %v1803 = vsub.s32 %v1800, %v1802
    %v1804 = vrot.slane %v1790, %v1803
    %1805 = vset.pattern.permute.xlu0 0
    %1806 = vperm.xlu0 %1805, %v1797
    %v1807 = vpop.permute.xlu0 %1806
    %v1808 = vlaneseq
    %v1809 = vshrl.u32 %v1808, 7
    %v1810 = vsub.s32 0, %v1809
    %v1811 = vrot.slane %v1807, %v1810
    %1812 = vset.pattern.permute.xlu0 0
    %1813 = vperm.xlu0 %1812, %v1804
    %v1814 = vpop.permute.xlu0 %1813
    %v1815 = vlaneseq
    %v1816 = vshrl.u32 %v1815, 7
    %v1817 = vsub.s32 0, %v1816
    %v1818 = vrot.slane %v1814, %v1817
    %vm1819 = vcmp.lt.s32.totalorder %v89, %v1811
    %vm1820 = vcmp.lt.s32.totalorder %v89, %v1818
    %v1821 = vld [vmem:[%s11] sm:$0x1]
    %v1822 = vld [vmem:[%s7] sm:$0x3]
    loop: start=1, step=1, limit=6
    $region90: #{seq2seq_forward.1} parent=1 // loop_pre_header
      _
    $region91: #{seq2seq_forward.1} parent=1 // loop_header
      %s1824 = sphi 1, %s1828
      %p1825 = scmp.ge.s32.totalorder %s1824, 6
      %v1829 = vphi %v1591, %v2658
      %v1830 = vphi %v1822, %v2849
    $region92: #{seq2seq_forward.1} parent=1 // loop_header_branch
      %1827 = sbr.rel (%p1825) target = $region96
    $region93: #{seq2seq_forward.1} parent=1 // loop_body
      %v1831 = vld [vmem:[%s8] sm:$0xff]
      %v1832 = vld [vmem:[%s8 + $0x8] sm:$0xff]
      %v1833 = vld [vmem:[%s8 + $0x10] sm:$0x3]
      %vm1834 = vcmask 146432
      %v1836 = vsel %vm1834, %v1830, 0
      %vm1838 = vcmask 1041408
      %v1840 = vsel %vm1838, %v1833, 0
      %1842 = vmatprep.subr.mxu0 0.0
      %1843 = vmatpush1.msra.mxu0 %v1831
      %1844 = vmatprep.subr.mxu0 0.0
      %1845 = vmatpush1.msra.mxu0 %v1832
      %1846 = vmatprep.subr.mxu0 0.0
      %1847 = vmatpush1.msra.mxu0 %v1840
      %1848 = vmatprep.subr.mxu0 0.0
      %1849 = vmatpush1.msra.mxu0 0.0
      %1850 = vmatprep.subr.mxu0 0.0
      %1851 = vmatpush1.msra.mxu0 0.0
      %1852 = vmatprep.subr.mxu0 0.0
      %1853 = vmatpush1.msra.mxu0 0.0
      %1854 = vmatprep.subr.mxu0 0.0
      %1855 = vmatpush1.msra.mxu0 0.0
      %1856 = vmatprep.subr.mxu0 0.0
      %1857 = vmatpush1.msra.mxu0 0.0
      %1858 = vmatprep.subr.mxu0 0.0
      %1859 = vmatpush1.msra.mxu0 0.0
      %1860 = vmatprep.subr.mxu0 0.0
      %1861 = vmatpush1.msra.mxu0 0.0
      %1862 = vmatprep.subr.mxu0 0.0
      %1863 = vmatpush1.msra.mxu0 0.0
      %1864 = vmatprep.subr.mxu0 0.0
      %1865 = vmatpush1.msra.mxu0 0.0
      %1866 = vmatprep.subr.mxu0 0.0
      %1867 = vmatpush1.msra.mxu0 0.0
      %1868 = vmatprep.subr.mxu0 0.0
      %1869 = vmatpush1.msra.mxu0 0.0
      %1870 = vmatprep.subr.mxu0 0.0
      %1871 = vmatpush1.msra.mxu0 0.0
      %1872 = vmatprep.subr.mxu0 0.0
      %1873 = vmatpush1.msra.mxu0 0.0
      %1874 = vmatprep.subr.mxu0 0.0
      %1875 = vmatpush1.msra.mxu0 0.0
      %1876 = vmatprep.subr.mxu0 0.0
      %1877 = vmatpush1.msra.mxu0 0.0
      %1878 = vmatprep.subr.mxu0 0.0
      %1879 = vmatpush1.msra.mxu0 0.0
      %1880 = vmatprep.subr.mxu0 0.0
      %1881 = vmatpush1.msra.mxu0 0.0
      %1882 = vmatprep.subr.mxu0 0.0
      %1883 = vmatpush1.msra.mxu0 0.0
      %1884 = vmatprep.subr.mxu0 0.0
      %1885 = vmatpush1.msra.mxu0 0.0
      %1886 = vmatprep.subr.mxu0 0.0
      %1887 = vmatpush1.msra.mxu0 0.0
      %1888 = vmatprep.subr.mxu0 0.0
      %1889 = vmatpush1.msra.mxu0 0.0
      %1890 = vmatprep.subr.mxu0 0.0
      %1891 = vmatpush1.msra.mxu0 0.0
      %1892 = vmatprep.subr.mxu0 0.0
      %1893 = vmatpush1.msra.mxu0 0.0
      %1894 = vmatprep.subr.mxu0 0.0
      %1895 = vmatpush1.msra.mxu0 0.0
      %1896 = vmatprep.subr.mxu0 0.0
      %1897 = vmatpush1.msra.mxu0 0.0
      %1898 = vmatprep.subr.mxu0 0.0
      %1899 = vmatpush1.msra.mxu0 0.0
      %1900 = vmatprep.subr.mxu0 0.0
      %1901 = vmatpush1.msra.mxu0 0.0
      %1902 = vmatprep.subr.mxu0 0.0
      %1903 = vmatpush1.msra.mxu0 0.0
      %1904 = vmatprep.subr.mxu0 0.0
      %1905 = vmatpush1.msra.mxu0 0.0
      %1906 = vmatprep.mubr.f32.mxu0 0.0
      %1907 = vmatmul.mubr.f32.gmra.mrb[0].mxu0 %v1836
      %v1908 = vpop.f32.mrb[0].mxu0
      %v1909 = vadd.f32 0.0, %v1908
      %v1910 = vpop.f32.mrb[0].mxu0
      %1911 = vdwg.mxu0
      %v1912 = vld [vmem:[%s12] sm:$0xff]
      %v1913 = vld [vmem:[%s12 + $0x8] sm:$0xff]
      %v1914 = vld [vmem:[%s12 + $0x10] sm:$0xff]
      %v1915 = vld [vmem:[%s12 + $0x18] sm:$0xff]
      %v1917 = vsel %vm98, %v1829, 0
      %1919 = vmatprep.subr.mxu0 0.0
      %1920 = vmatpush1.msra.mxu0 %v1912
      %1921 = vmatprep.subr.mxu0 0.0
      %1922 = vmatpush1.msra.mxu0 %v1913
      %1923 = vmatprep.subr.mxu0 0.0
      %1924 = vmatpush1.msra.mxu0 %v1914
      %1925 = vmatprep.subr.mxu0 0.0
      %1926 = vmatpush1.msra.mxu0 %v1915
      %1927 = vmatprep.subr.mxu0 0.0
      %1928 = vmatpush1.msra.mxu0 0.0
      %1929 = vmatprep.subr.mxu0 0.0
      %1930 = vmatpush1.msra.mxu0 0.0
      %1931 = vmatprep.subr.mxu0 0.0
      %1932 = vmatpush1.msra.mxu0 0.0
      %1933 = vmatprep.subr.mxu0 0.0
      %1934 = vmatpush1.msra.mxu0 0.0
      %1935 = vmatprep.subr.mxu0 0.0
      %1936 = vmatpush1.msra.mxu0 0.0
      %1937 = vmatprep.subr.mxu0 0.0
      %1938 = vmatpush1.msra.mxu0 0.0
      %1939 = vmatprep.subr.mxu0 0.0
      %1940 = vmatpush1.msra.mxu0 0.0
      %1941 = vmatprep.subr.mxu0 0.0
      %1942 = vmatpush1.msra.mxu0 0.0
      %1943 = vmatprep.subr.mxu0 0.0
      %1944 = vmatpush1.msra.mxu0 0.0
      %1945 = vmatprep.subr.mxu0 0.0
      %1946 = vmatpush1.msra.mxu0 0.0
      %1947 = vmatprep.subr.mxu0 0.0
      %1948 = vmatpush1.msra.mxu0 0.0
      %1949 = vmatprep.subr.mxu0 0.0
      %1950 = vmatpush1.msra.mxu0 0.0
      %1951 = vmatprep.subr.mxu0 0.0
      %1952 = vmatpush1.msra.mxu0 0.0
      %1953 = vmatprep.subr.mxu0 0.0
      %1954 = vmatpush1.msra.mxu0 0.0
      %1955 = vmatprep.subr.mxu0 0.0
      %1956 = vmatpush1.msra.mxu0 0.0
      %1957 = vmatprep.subr.mxu0 0.0
      %1958 = vmatpush1.msra.mxu0 0.0
      %1959 = vmatprep.subr.mxu0 0.0
      %1960 = vmatpush1.msra.mxu0 0.0
      %1961 = vmatprep.subr.mxu0 0.0
      %1962 = vmatpush1.msra.mxu0 0.0
      %1963 = vmatprep.subr.mxu0 0.0
      %1964 = vmatpush1.msra.mxu0 0.0
      %1965 = vmatprep.subr.mxu0 0.0
      %1966 = vmatpush1.msra.mxu0 0.0
      %1967 = vmatprep.subr.mxu0 0.0
      %1968 = vmatpush1.msra.mxu0 0.0
      %1969 = vmatprep.subr.mxu0 0.0
      %1970 = vmatpush1.msra.mxu0 0.0
      %1971 = vmatprep.subr.mxu0 0.0
      %1972 = vmatpush1.msra.mxu0 0.0
      %1973 = vmatprep.subr.mxu0 0.0
      %1974 = vmatpush1.msra.mxu0 0.0
      %1975 = vmatprep.subr.mxu0 0.0
      %1976 = vmatpush1.msra.mxu0 0.0
      %1977 = vmatprep.subr.mxu0 0.0
      %1978 = vmatpush1.msra.mxu0 0.0
      %1979 = vmatprep.subr.mxu0 0.0
      %1980 = vmatpush1.msra.mxu0 0.0
      %1981 = vmatprep.subr.mxu0 0.0
      %1982 = vmatpush1.msra.mxu0 0.0
      %1983 = vmatprep.mubr.f32.mxu0 0.0
      %1984 = vmatmul.mubr.f32.gmra.mrb[0].mxu0 %v1917
      %v1985 = vpop.f32.mrb[0].mxu0
      %v1986 = vadd.f32 0.0, %v1985
      %v1987 = vpop.f32.mrb[0].mxu0
      %1988 = vdwg.mxu0
      %v1989 = vld [vmem:[%s16] sm:$0x1]
      %v1991 = vlaneseq
      %v1992 = vshrl.u32 %v1991, 7
      %v1993 = vsub.s32 0, %v1992
      %v1994 = vrot.slane %v1989, %v1993
      %1995 = vrot.lane.b32.xlu0 %v1994, 32
      %v1996 = vpop.permute.xlu0 %1995
      %v1998 = vadd.f32 %v1986, %v1996
      %v1999 = vld [vmem:[#allocation3] sm:$0xff]
      %v2000 = vld [vmem:[#allocation3 + $0x8] sm:$0x3]
      %v2001 = vld [vmem:[#allocation3 + $0x10] sm:$0xff]
      %v2002 = vld [vmem:[#allocation3 + $0x18] sm:$0x3]
      %v2005 = vunpack.c.l.s4 1966171168
      %v2006 = vunpack.c.0.s8 %v2005
      %v2007 = vlaneseq
      %v2008 = vshrl.u32 %v2007, 7
      %v2009 = vsub.s32 %v2006, %v2008
      %v2010 = vrot.slane %v1986, %v2009
      %v2011 = vcombine.high %v2010, %v2010
      %v2013 = vunpack.c.l.s4 1966171168
      %v2014 = vunpack.c.0.s8 %v2013
      %v2015 = vlaneseq
      %v2016 = vshrl.u32 %v2015, 7
      %v2017 = vsub.s32 %v2014, %v2016
      %v2018 = vrot.slane %v2010, %v2017
      %v2020 = vunpack.c.l.s4 1966171168
      %v2021 = vunpack.c.0.s8 %v2020
      %v2022 = vlaneseq
      %v2023 = vshrl.u32 %v2022, 7
      %v2024 = vsub.s32 %v2021, %v2023
      %v2025 = vrot.slane %v2011, %v2024
      %v2026 = vlaneseq
      %v2027 = vshrl.u32 %v2026, 7
      %v2028 = vsub.s32 0, %v2027
      %v2029 = vrot.slane %v2018, %v2028
      %v2030 = vlaneseq
      %v2031 = vshrl.u32 %v2030, 7
      %v2032 = vsub.s32 0, %v2031
      %v2033 = vrot.slane %v2025, %v2032
      %v2036 = vadd.f32 %v1999, %v2029
      %v2037 = vadd.f32 %v2000, %v2029
      %v2038 = vadd.f32 %v2001, %v2033
      %v2039 = vadd.f32 %v2002, %v2033
      %v2040 = vtanh.pop %v2036
      %v2041 = vtanh.pop %v2037
      %v2042 = vtanh.pop %v2038
      %v2043 = vtanh.pop %v2039
      %v2045 = vsel %vm98, %v1821, 0
      %v2048 = vsel %vm98, %v2040, 0
      %v2051 = vsel %vm98, %v2041, 0
      %2053 = vmatprep.subr.mxu0 0.0
      %2054 = vmatpush1.xpose.msra.mxu0 %v2048
      %2055 = vmatprep.subr.mxu0 0.0
      %2056 = vmatpush1.xpose.msra.mxu0 %v2051
      %2057 = vmatprep.subr.mxu0 0.0
      %2058 = vmatpush1.xpose.msra.mxu0 0.0
      %2059 = vmatprep.subr.mxu0 0.0
      %2060 = vmatpush1.xpose.msra.mxu0 0.0
      %2061 = vmatprep.subr.mxu0 0.0
      %2062 = vmatpush1.xpose.msra.mxu0 0.0
      %2063 = vmatprep.subr.mxu0 0.0
      %2064 = vmatpush1.xpose.msra.mxu0 0.0
      %2065 = vmatprep.subr.mxu0 0.0
      %2066 = vmatpush1.xpose.msra.mxu0 0.0
      %2067 = vmatprep.subr.mxu0 0.0
      %2068 = vmatpush1.xpose.msra.mxu0 0.0
      %2069 = vmatprep.subr.mxu0 0.0
      %2070 = vmatpush1.xpose.msra.mxu0 0.0
      %2071 = vmatprep.subr.mxu0 0.0
      %2072 = vmatpush1.xpose.msra.mxu0 0.0
      %2073 = vmatprep.subr.mxu0 0.0
      %2074 = vmatpush1.xpose.msra.mxu0 0.0
      %2075 = vmatprep.subr.mxu0 0.0
      %2076 = vmatpush1.xpose.msra.mxu0 0.0
      %2077 = vmatprep.subr.mxu0 0.0
      %2078 = vmatpush1.xpose.msra.mxu0 0.0
      %2079 = vmatprep.subr.mxu0 0.0
      %2080 = vmatpush1.xpose.msra.mxu0 0.0
      %2081 = vmatprep.subr.mxu0 0.0
      %2082 = vmatpush1.xpose.msra.mxu0 0.0
      %2083 = vmatprep.subr.mxu0 0.0
      %2084 = vmatpush1.xpose.msra.mxu0 0.0
      %2085 = vmatprep.subr.mxu0 0.0
      %2086 = vmatpush1.xpose.msra.mxu0 0.0
      %2087 = vmatprep.subr.mxu0 0.0
      %2088 = vmatpush1.xpose.msra.mxu0 0.0
      %2089 = vmatprep.subr.mxu0 0.0
      %2090 = vmatpush1.xpose.msra.mxu0 0.0
      %2091 = vmatprep.subr.mxu0 0.0
      %2092 = vmatpush1.xpose.msra.mxu0 0.0
      %2093 = vmatprep.subr.mxu0 0.0
      %2094 = vmatpush1.xpose.msra.mxu0 0.0
      %2095 = vmatprep.subr.mxu0 0.0
      %2096 = vmatpush1.xpose.msra.mxu0 0.0
      %2097 = vmatprep.subr.mxu0 0.0
      %2098 = vmatpush1.xpose.msra.mxu0 0.0
      %2099 = vmatprep.subr.mxu0 0.0
      %2100 = vmatpush1.xpose.msra.mxu0 0.0
      %2101 = vmatprep.subr.mxu0 0.0
      %2102 = vmatpush1.xpose.msra.mxu0 0.0
      %2103 = vmatprep.subr.mxu0 0.0
      %2104 = vmatpush1.xpose.msra.mxu0 0.0
      %2105 = vmatprep.subr.mxu0 0.0
      %2106 = vmatpush1.xpose.msra.mxu0 0.0
      %2107 = vmatprep.subr.mxu0 0.0
      %2108 = vmatpush1.xpose.msra.mxu0 0.0
      %2109 = vmatprep.subr.mxu0 0.0
      %2110 = vmatpush1.xpose.msra.mxu0 0.0
      %2111 = vmatprep.subr.mxu0 0.0
      %2112 = vmatpush1.xpose.msra.mxu0 0.0
      %2113 = vmatprep.subr.mxu0 0.0
      %2114 = vmatpush1.xpose.msra.mxu0 0.0
      %2115 = vmatprep.subr.mxu0 0.0
      %2116 = vmatpush1.xpose.msra.mxu0 0.0
      %2117 = vmatprep.mubr.f32.mxu0 0.0
      %2118 = vmatmul.mubr.f32.gmra.mrb[0].mxu0 %v2045
      %v2119 = vpop.f32.mrb[0].mxu0
      %v2120 = vadd.f32 0.0, %v2119
      %v2121 = vpop.f32.mrb[0].mxu0
      %2122 = vdwg.mxu0
      %v2124 = vsel %vm98, %v2042, 0
      %v2127 = vsel %vm98, %v2043, 0
      %2129 = vmatprep.subr.mxu0 0.0
      %2130 = vmatpush1.xpose.msra.mxu0 %v2124
      %2131 = vmatprep.subr.mxu0 0.0
      %2132 = vmatpush1.xpose.msra.mxu0 %v2127
      %2133 = vmatprep.subr.mxu0 0.0
      %2134 = vmatpush1.xpose.msra.mxu0 0.0
      %2135 = vmatprep.subr.mxu0 0.0
      %2136 = vmatpush1.xpose.msra.mxu0 0.0
      %2137 = vmatprep.subr.mxu0 0.0
      %2138 = vmatpush1.xpose.msra.mxu0 0.0
      %2139 = vmatprep.subr.mxu0 0.0
      %2140 = vmatpush1.xpose.msra.mxu0 0.0
      %2141 = vmatprep.subr.mxu0 0.0
      %2142 = vmatpush1.xpose.msra.mxu0 0.0
      %2143 = vmatprep.subr.mxu0 0.0
      %2144 = vmatpush1.xpose.msra.mxu0 0.0
      %2145 = vmatprep.subr.mxu0 0.0
      %2146 = vmatpush1.xpose.msra.mxu0 0.0
      %2147 = vmatprep.subr.mxu0 0.0
      %2148 = vmatpush1.xpose.msra.mxu0 0.0
      %2149 = vmatprep.subr.mxu0 0.0
      %2150 = vmatpush1.xpose.msra.mxu0 0.0
      %2151 = vmatprep.subr.mxu0 0.0
      %2152 = vmatpush1.xpose.msra.mxu0 0.0
      %2153 = vmatprep.subr.mxu0 0.0
      %2154 = vmatpush1.xpose.msra.mxu0 0.0
      %2155 = vmatprep.subr.mxu0 0.0
      %2156 = vmatpush1.xpose.msra.mxu0 0.0
      %2157 = vmatprep.subr.mxu0 0.0
      %2158 = vmatpush1.xpose.msra.mxu0 0.0
      %2159 = vmatprep.subr.mxu0 0.0
      %2160 = vmatpush1.xpose.msra.mxu0 0.0
      %2161 = vmatprep.subr.mxu0 0.0
      %2162 = vmatpush1.xpose.msra.mxu0 0.0
      %2163 = vmatprep.subr.mxu0 0.0
      %2164 = vmatpush1.xpose.msra.mxu0 0.0
      %2165 = vmatprep.subr.mxu0 0.0
      %2166 = vmatpush1.xpose.msra.mxu0 0.0
      %2167 = vmatprep.subr.mxu0 0.0
      %2168 = vmatpush1.xpose.msra.mxu0 0.0
      %2169 = vmatprep.subr.mxu0 0.0
      %2170 = vmatpush1.xpose.msra.mxu0 0.0
      %2171 = vmatprep.subr.mxu0 0.0
      %2172 = vmatpush1.xpose.msra.mxu0 0.0
      %2173 = vmatprep.subr.mxu0 0.0
      %2174 = vmatpush1.xpose.msra.mxu0 0.0
      %2175 = vmatprep.subr.mxu0 0.0
      %2176 = vmatpush1.xpose.msra.mxu0 0.0
      %2177 = vmatprep.subr.mxu0 0.0
      %2178 = vmatpush1.xpose.msra.mxu0 0.0
      %2179 = vmatprep.subr.mxu0 0.0
      %2180 = vmatpush1.xpose.msra.mxu0 0.0
      %2181 = vmatprep.subr.mxu0 0.0
      %2182 = vmatpush1.xpose.msra.mxu0 0.0
      %2183 = vmatprep.subr.mxu0 0.0
      %2184 = vmatpush1.xpose.msra.mxu0 0.0
      %2185 = vmatprep.subr.mxu0 0.0
      %2186 = vmatpush1.xpose.msra.mxu0 0.0
      %2187 = vmatprep.subr.mxu0 0.0
      %2188 = vmatpush1.xpose.msra.mxu0 0.0
      %2189 = vmatprep.subr.mxu0 0.0
      %2190 = vmatpush1.xpose.msra.mxu0 0.0
      %2191 = vmatprep.subr.mxu0 0.0
      %2192 = vmatpush1.xpose.msra.mxu0 0.0
      %2193 = vmatprep.mubr.f32.mxu0 0.0
      %2194 = vmatmul.mubr.f32.gmra.mrb[0].mxu0 %v2045
      %v2195 = vpop.f32.mrb[0].mxu0
      %v2196 = vadd.f32 0.0, %v2195
      %v2197 = vpop.f32.mrb[0].mxu0
      %2198 = vdwg.mxu0
      %v2199 = vsel %vm1819, %v2120, -1e+10
      %v2200 = vsel %vm1820, %v2196, -1e+10
      %vm2201 = vcmask 73728
      %v2202 = vsel %vm2201, %v2199, -inf
      %2203 = vmax.xlane.f32.xlu0 %v2202
      %v2204 = vpop.xlane.xlu0 %2203
      %v2205 = vsel %vm2201, %v2200, -inf
      %2206 = vmax.xlane.f32.xlu0 %v2205
      %v2207 = vpop.xlane.xlu0 %2206
      %v2208 = vsub.f32 %v2199, %v2204
      %v2209 = vsub.f32 %v2200, %v2207
      %v2210 = vmul.f32 %v2208, 1.442695
      %v2211 = vpow.pop %v2210
      %v2212 = vmul.f32 %v2209, 1.442695
      %v2213 = vpow.pop %v2212
      %v2214 = vsel %vm2201, %v2211, 0.0
      %2215 = vadd.xlane.f32.xlu0 %v2214
      %v2216 = vpop.xlane.xlu0 %2215
      %v2217 = vsel %vm2201, %v2213, 0.0
      %2218 = vadd.xlane.f32.xlu0 %v2217
      %v2219 = vpop.xlane.xlu0 %2218
      %v2220 = vrcp.pop %v2216
      %v2221 = vmul.f32 %v2211, %v2220
      %v2222 = vrcp.pop %v2219
      %v2223 = vmul.f32 %v2213, %v2222
      %v2224 = vld [vmem:[#allocation2] sm:$0xff]
      %v2225 = vld [vmem:[#allocation2 + $0x8] sm:$0x3]
      %v2226 = vld [vmem:[#allocation2 + $0x10] sm:$0xff]
      %v2227 = vld [vmem:[#allocation2 + $0x18] sm:$0x3]
      %vm2228 = vcmask 80896
      %v2230 = vsel %vm2228, %v2221, 0
      %v2233 = vsel %vm1838, %v2225, 0
      %2235 = vmatprep.subr.mxu0 0.0
      %2236 = vmatpush1.msra.mxu0 %v2224
      %2237 = vmatprep.subr.mxu0 0.0
      %2238 = vmatpush1.msra.mxu0 %v2233
      %2239 = vmatprep.subr.mxu0 0.0
      %2240 = vmatpush1.msra.mxu0 0.0
      %2241 = vmatprep.subr.mxu0 0.0
      %2242 = vmatpush1.msra.mxu0 0.0
      %2243 = vmatprep.subr.mxu0 0.0
      %2244 = vmatpush1.msra.mxu0 0.0
      %2245 = vmatprep.subr.mxu0 0.0
      %2246 = vmatpush1.msra.mxu0 0.0
      %2247 = vmatprep.subr.mxu0 0.0
      %2248 = vmatpush1.msra.mxu0 0.0
      %2249 = vmatprep.subr.mxu0 0.0
      %2250 = vmatpush1.msra.mxu0 0.0
      %2251 = vmatprep.subr.mxu0 0.0
      %2252 = vmatpush1.msra.mxu0 0.0
      %2253 = vmatprep.subr.mxu0 0.0
      %2254 = vmatpush1.msra.mxu0 0.0
      %2255 = vmatprep.subr.mxu0 0.0
      %2256 = vmatpush1.msra.mxu0 0.0
      %2257 = vmatprep.subr.mxu0 0.0
      %2258 = vmatpush1.msra.mxu0 0.0
      %2259 = vmatprep.subr.mxu0 0.0
      %2260 = vmatpush1.msra.mxu0 0.0
      %2261 = vmatprep.subr.mxu0 0.0
      %2262 = vmatpush1.msra.mxu0 0.0
      %2263 = vmatprep.subr.mxu0 0.0
      %2264 = vmatpush1.msra.mxu0 0.0
      %2265 = vmatprep.subr.mxu0 0.0
      %2266 = vmatpush1.msra.mxu0 0.0
      %2267 = vmatprep.subr.mxu0 0.0
      %2268 = vmatpush1.msra.mxu0 0.0
      %2269 = vmatprep.subr.mxu0 0.0
      %2270 = vmatpush1.msra.mxu0 0.0
      %2271 = vmatprep.subr.mxu0 0.0
      %2272 = vmatpush1.msra.mxu0 0.0
      %2273 = vmatprep.subr.mxu0 0.0
      %2274 = vmatpush1.msra.mxu0 0.0
      %2275 = vmatprep.subr.mxu0 0.0
      %2276 = vmatpush1.msra.mxu0 0.0
      %2277 = vmatprep.subr.mxu0 0.0
      %2278 = vmatpush1.msra.mxu0 0.0
      %2279 = vmatprep.subr.mxu0 0.0
      %2280 = vmatpush1.msra.mxu0 0.0
      %2281 = vmatprep.subr.mxu0 0.0
      %2282 = vmatpush1.msra.mxu0 0.0
      %2283 = vmatprep.subr.mxu0 0.0
      %2284 = vmatpush1.msra.mxu0 0.0
      %2285 = vmatprep.subr.mxu0 0.0
      %2286 = vmatpush1.msra.mxu0 0.0
      %2287 = vmatprep.subr.mxu0 0.0
      %2288 = vmatpush1.msra.mxu0 0.0
      %2289 = vmatprep.subr.mxu0 0.0
      %2290 = vmatpush1.msra.mxu0 0.0
      %2291 = vmatprep.subr.mxu0 0.0
      %2292 = vmatpush1.msra.mxu0 0.0
      %2293 = vmatprep.subr.mxu0 0.0
      %2294 = vmatpush1.msra.mxu0 0.0
      %2295 = vmatprep.subr.mxu0 0.0
      %2296 = vmatpush1.msra.mxu0 0.0
      %2297 = vmatprep.subr.mxu0 0.0
      %2298 = vmatpush1.msra.mxu0 0.0
      %2299 = vmatprep.mubr.f32.mxu0 0.0
      %2300 = vmatmul.mubr.f32.gmra.mrb[0].mxu0 %v2230
      %v2301 = vpop.f32.mrb[0].mxu0
      %v2302 = vadd.f32 0.0, %v2301
      %v2303 = vpop.f32.mrb[0].mxu0
      %2304 = vdwg.mxu0
      %v2306 = vsel %vm2228, %v2223, 0
      %v2309 = vsel %vm1838, %v2227, 0
      %2311 = vmatprep.subr.mxu0 0.0
      %2312 = vmatpush1.msra.mxu0 %v2226
      %2313 = vmatprep.subr.mxu0 0.0
      %2314 = vmatpush1.msra.mxu0 %v2309
      %2315 = vmatprep.subr.mxu0 0.0
      %2316 = vmatpush1.msra.mxu0 0.0
      %2317 = vmatprep.subr.mxu0 0.0
      %2318 = vmatpush1.msra.mxu0 0.0
      %2319 = vmatprep.subr.mxu0 0.0
      %2320 = vmatpush1.msra.mxu0 0.0
      %2321 = vmatprep.subr.mxu0 0.0
      %2322 = vmatpush1.msra.mxu0 0.0
      %2323 = vmatprep.subr.mxu0 0.0
      %2324 = vmatpush1.msra.mxu0 0.0
      %2325 = vmatprep.subr.mxu0 0.0
      %2326 = vmatpush1.msra.mxu0 0.0
      %2327 = vmatprep.subr.mxu0 0.0
      %2328 = vmatpush1.msra.mxu0 0.0
      %2329 = vmatprep.subr.mxu0 0.0
      %2330 = vmatpush1.msra.mxu0 0.0
      %2331 = vmatprep.subr.mxu0 0.0
      %2332 = vmatpush1.msra.mxu0 0.0
      %2333 = vmatprep.subr.mxu0 0.0
      %2334 = vmatpush1.msra.mxu0 0.0
      %2335 = vmatprep.subr.mxu0 0.0
      %2336 = vmatpush1.msra.mxu0 0.0
      %2337 = vmatprep.subr.mxu0 0.0
      %2338 = vmatpush1.msra.mxu0 0.0
      %2339 = vmatprep.subr.mxu0 0.0
      %2340 = vmatpush1.msra.mxu0 0.0
      %2341 = vmatprep.subr.mxu0 0.0
      %2342 = vmatpush1.msra.mxu0 0.0
      %2343 = vmatprep.subr.mxu0 0.0
      %2344 = vmatpush1.msra.mxu0 0.0
      %2345 = vmatprep.subr.mxu0 0.0
      %2346 = vmatpush1.msra.mxu0 0.0
      %2347 = vmatprep.subr.mxu0 0.0
      %2348 = vmatpush1.msra.mxu0 0.0
      %2349 = vmatprep.subr.mxu0 0.0
      %2350 = vmatpush1.msra.mxu0 0.0
      %2351 = vmatprep.subr.mxu0 0.0
      %2352 = vmatpush1.msra.mxu0 0.0
      %2353 = vmatprep.subr.mxu0 0.0
      %2354 = vmatpush1.msra.mxu0 0.0
      %2355 = vmatprep.subr.mxu0 0.0
      %2356 = vmatpush1.msra.mxu0 0.0
      %2357 = vmatprep.subr.mxu0 0.0
      %2358 = vmatpush1.msra.mxu0 0.0
      %2359 = vmatprep.subr.mxu0 0.0
      %2360 = vmatpush1.msra.mxu0 0.0
      %2361 = vmatprep.subr.mxu0 0.0
      %2362 = vmatpush1.msra.mxu0 0.0
      %2363 = vmatprep.subr.mxu0 0.0
      %2364 = vmatpush1.msra.mxu0 0.0
      %2365 = vmatprep.subr.mxu0 0.0
      %2366 = vmatpush1.msra.mxu0 0.0
      %2367 = vmatprep.subr.mxu0 0.0
      %2368 = vmatpush1.msra.mxu0 0.0
      %2369 = vmatprep.subr.mxu0 0.0
      %2370 = vmatpush1.msra.mxu0 0.0
      %2371 = vmatprep.subr.mxu0 0.0
      %2372 = vmatpush1.msra.mxu0 0.0
      %2373 = vmatprep.subr.mxu0 0.0
      %2374 = vmatpush1.msra.mxu0 0.0
      %2375 = vmatprep.mubr.f32.mxu0 0.0
      %2376 = vmatmul.mubr.f32.gmra.mrb[0].mxu0 %v2306
      %v2377 = vpop.f32.mrb[0].mxu0
      %v2378 = vadd.f32 0.0, %v2377
      %v2379 = vpop.f32.mrb[0].mxu0
      %2380 = vdwg.mxu0
      %v2381 = vld [vmem:[%s13] sm:$0xff]
      %v2382 = vld [vmem:[%s13 + $0x8] sm:$0xff]
      %v2383 = vld [vmem:[%s14] sm:$0xff]
      %v2384 = vld [vmem:[%s14 + $0x8] sm:$0xff]
      %v2385 = vld [vmem:[%s14 + $0x10] sm:$0xff]
      %v2386 = vld [vmem:[%s14 + $0x18] sm:$0xff]
      %v2389 = vrot.slane %v2378, 7
      %vm2390 = vcmask 1041409
      %v2391 = vsel %vm2390, %v2389, %v2302
      %v2392 = vsel %vm98, %v2391, 0
      %2394 = vmatprep.subr.mxu0 0.0
      %2395 = vmatpush1.msra.mxu0 %v2383
      %2396 = vmatprep.subr.mxu0 0.0
      %2397 = vmatpush1.msra.mxu0 %v2384
      %2398 = vmatprep.subr.mxu0 0.0
      %2399 = vmatpush1.msra.mxu0 %v2385
      %2400 = vmatprep.subr.mxu0 0.0
      %2401 = vmatpush1.msra.mxu0 %v2386
      %2402 = vmatprep.subr.mxu0 0.0
      %2403 = vmatpush1.msra.mxu0 0.0
      %2404 = vmatprep.subr.mxu0 0.0
      %2405 = vmatpush1.msra.mxu0 0.0
      %2406 = vmatprep.subr.mxu0 0.0
      %2407 = vmatpush1.msra.mxu0 0.0
      %2408 = vmatprep.subr.mxu0 0.0
      %2409 = vmatpush1.msra.mxu0 0.0
      %2410 = vmatprep.subr.mxu0 0.0
      %2411 = vmatpush1.msra.mxu0 0.0
      %2412 = vmatprep.subr.mxu0 0.0
      %2413 = vmatpush1.msra.mxu0 0.0
      %2414 = vmatprep.subr.mxu0 0.0
      %2415 = vmatpush1.msra.mxu0 0.0
      %2416 = vmatprep.subr.mxu0 0.0
      %2417 = vmatpush1.msra.mxu0 0.0
      %2418 = vmatprep.subr.mxu0 0.0
      %2419 = vmatpush1.msra.mxu0 0.0
      %2420 = vmatprep.subr.mxu0 0.0
      %2421 = vmatpush1.msra.mxu0 0.0
      %2422 = vmatprep.subr.mxu0 0.0
      %2423 = vmatpush1.msra.mxu0 0.0
      %2424 = vmatprep.subr.mxu0 0.0
      %2425 = vmatpush1.msra.mxu0 0.0
      %2426 = vmatprep.subr.mxu0 0.0
      %2427 = vmatpush1.msra.mxu0 0.0
      %2428 = vmatprep.subr.mxu0 0.0
      %2429 = vmatpush1.msra.mxu0 0.0
      %2430 = vmatprep.subr.mxu0 0.0
      %2431 = vmatpush1.msra.mxu0 0.0
      %2432 = vmatprep.subr.mxu0 0.0
      %2433 = vmatpush1.msra.mxu0 0.0
      %2434 = vmatprep.subr.mxu0 0.0
      %2435 = vmatpush1.msra.mxu0 0.0
      %2436 = vmatprep.subr.mxu0 0.0
      %2437 = vmatpush1.msra.mxu0 0.0
      %2438 = vmatprep.subr.mxu0 0.0
      %2439 = vmatpush1.msra.mxu0 0.0
      %2440 = vmatprep.subr.mxu0 0.0
      %2441 = vmatpush1.msra.mxu0 0.0
      %2442 = vmatprep.subr.mxu0 0.0
      %2443 = vmatpush1.msra.mxu0 0.0
      %2444 = vmatprep.subr.mxu0 0.0
      %2445 = vmatpush1.msra.mxu0 0.0
      %2446 = vmatprep.subr.mxu0 0.0
      %2447 = vmatpush1.msra.mxu0 0.0
      %2448 = vmatprep.subr.mxu0 0.0
      %2449 = vmatpush1.msra.mxu0 0.0
      %2450 = vmatprep.subr.mxu0 0.0
      %2451 = vmatpush1.msra.mxu0 0.0
      %2452 = vmatprep.subr.mxu0 0.0
      %2453 = vmatpush1.msra.mxu0 0.0
      %2454 = vmatprep.subr.mxu0 0.0
      %2455 = vmatpush1.msra.mxu0 0.0
      %2456 = vmatprep.subr.mxu0 0.0
      %2457 = vmatpush1.msra.mxu0 0.0
      %2458 = vmatprep.mubr.f32.mxu0 0.0
      %2459 = vmatmul.mubr.f32.gmra.mrb[0].mxu0 %v2392
      %v2460 = vpop.f32.mrb[0].mxu0
      %v2461 = vadd.f32 0.0, %v2460
      %v2462 = vpop.f32.mrb[0].mxu0
      %2463 = vdwg.mxu0
      %vm2464 = vcmask 130048
      %v2466 = vsel %vm2464, %v1909, 0
      %2468 = vmatprep.subr.mxu0 0.0
      %2469 = vmatpush1.msra.mxu0 %v2381
      %2470 = vmatprep.subr.mxu0 0.0
      %2471 = vmatpush1.msra.mxu0 %v2382
      %2472 = vmatprep.subr.mxu0 0.0
      %2473 = vmatpush1.msra.mxu0 0.0
      %2474 = vmatprep.subr.mxu0 0.0
      %2475 = vmatpush1.msra.mxu0 0.0
      %2476 = vmatprep.subr.mxu0 0.0
      %2477 = vmatpush1.msra.mxu0 0.0
      %2478 = vmatprep.subr.mxu0 0.0
      %2479 = vmatpush1.msra.mxu0 0.0
      %2480 = vmatprep.subr.mxu0 0.0
      %2481 = vmatpush1.msra.mxu0 0.0
      %2482 = vmatprep.subr.mxu0 0.0
      %2483 = vmatpush1.msra.mxu0 0.0
      %2484 = vmatprep.subr.mxu0 0.0
      %2485 = vmatpush1.msra.mxu0 0.0
      %2486 = vmatprep.subr.mxu0 0.0
      %2487 = vmatpush1.msra.mxu0 0.0
      %2488 = vmatprep.subr.mxu0 0.0
      %2489 = vmatpush1.msra.mxu0 0.0
      %2490 = vmatprep.subr.mxu0 0.0
      %2491 = vmatpush1.msra.mxu0 0.0
      %2492 = vmatprep.subr.mxu0 0.0
      %2493 = vmatpush1.msra.mxu0 0.0
      %2494 = vmatprep.subr.mxu0 0.0
      %2495 = vmatpush1.msra.mxu0 0.0
      %2496 = vmatprep.subr.mxu0 0.0
      %2497 = vmatpush1.msra.mxu0 0.0
      %2498 = vmatprep.subr.mxu0 0.0
      %2499 = vmatpush1.msra.mxu0 0.0
      %2500 = vmatprep.subr.mxu0 0.0
      %2501 = vmatpush1.msra.mxu0 0.0
      %2502 = vmatprep.subr.mxu0 0.0
      %2503 = vmatpush1.msra.mxu0 0.0
      %2504 = vmatprep.subr.mxu0 0.0
      %2505 = vmatpush1.msra.mxu0 0.0
      %2506 = vmatprep.subr.mxu0 0.0
      %2507 = vmatpush1.msra.mxu0 0.0
      %2508 = vmatprep.subr.mxu0 0.0
      %2509 = vmatpush1.msra.mxu0 0.0
      %2510 = vmatprep.subr.mxu0 0.0
      %2511 = vmatpush1.msra.mxu0 0.0
      %2512 = vmatprep.subr.mxu0 0.0
      %2513 = vmatpush1.msra.mxu0 0.0
      %2514 = vmatprep.subr.mxu0 0.0
      %2515 = vmatpush1.msra.mxu0 0.0
      %2516 = vmatprep.subr.mxu0 0.0
      %2517 = vmatpush1.msra.mxu0 0.0
      %2518 = vmatprep.subr.mxu0 0.0
      %2519 = vmatpush1.msra.mxu0 0.0
      %2520 = vmatprep.subr.mxu0 0.0
      %2521 = vmatpush1.msra.mxu0 0.0
      %2522 = vmatprep.subr.mxu0 0.0
      %2523 = vmatpush1.msra.mxu0 0.0
      %2524 = vmatprep.subr.mxu0 0.0
      %2525 = vmatpush1.msra.mxu0 0.0
      %2526 = vmatprep.subr.mxu0 0.0
      %2527 = vmatpush1.msra.mxu0 0.0
      %2528 = vmatprep.subr.mxu0 0.0
      %2529 = vmatpush1.msra.mxu0 0.0
      %2530 = vmatprep.subr.mxu0 0.0
      %2531 = vmatpush1.msra.mxu0 0.0
      %2532 = vmatprep.mubr.f32.mxu0 0.0
      %2533 = vmatmul.mubr.f32.gmra.mrb[0].mxu0 %v2466
      %v2534 = vpop.f32.mrb[0].mxu0
      %v2535 = vadd.f32 %v2461, %v2534
      %v2536 = vpop.f32.mrb[0].mxu0
      %2537 = vdwg.mxu0
      %v2538 = vld [vmem:[%s15] sm:$0x1]
      %v2540 = vlaneseq
      %v2541 = vshrl.u32 %v2540, 7
      %v2542 = vsub.s32 0, %v2541
      %v2543 = vrot.slane %v2538, %v2542
      %v2545 = vadd.f32 %v2535, %v2543
      %2547 = vrot.lane.b32.xlu0 %v1998, 96
      %v2548 = vpop.permute.xlu0 %2547
      %v2550 = vadd.f32 %v2545, %v2548
      %v2551 = vxor.u32 %v2550, 2147483648
      %v2552 = vmul.f32 %v2551, 1.442695
      %v2553 = vpow.pop %v2552
      %v2554 = vadd.f32 %v2553, 1.0
      %v2555 = vrcp.pop %v2554
      %v2556 = vmul.f32 1.0, %v2555
      %2557 = vrot.lane.b32.xlu0 %v1998, 32
      %v2558 = vpop.permute.xlu0 %2557
      %v2560 = vmul.f32 %v2556, %v2558
      %2562 = vrot.lane.b32.xlu0 %v2560, 64
      %v2563 = vpop.permute.xlu0 %2562
      %v2565 = vadd.f32 %v2545, %v2563
      %v2566 = vtanh.pop %v2565
      %v2567 = vsub.f32 1.0, %v2556
      %2569 = vrot.lane.b32.xlu0 %v2566, 96
      %v2570 = vpop.permute.xlu0 %2569
      %v2572 = vmul.f32 %v2567, %v2570
      %2573 = vrot.lane.b32.xlu0 %v1829, 32
      %v2574 = vpop.permute.xlu0 %2573
      %v2576 = vmul.f32 %v2556, %v2574
      %v2577 = vadd.f32 %v2572, %v2576
      %v2578 = vld [vmem:[%s17] sm:$0xff]
      %v2579 = vld [vmem:[%s17 + $0x8] sm:$0xff]
      %v2580 = vld [vmem:[%s17 + $0x10] sm:$0xff]
      %v2581 = vld [vmem:[%s17 + $0x18] sm:$0xff]
      %v2582 = vld [vmem:[%s18] sm:$0xff]
      %v2583 = vld [vmem:[%s18 + $0x8] sm:$0xff]
      %v2584 = vld [vmem:[%s18 + $0x10] sm:$0xff]
      %v2585 = vld [vmem:[%s18 + $0x18] sm:$0xff]
      %2586 = vmatprep.subr.mxu0 0.0
      %2587 = vmatpush1.msra.mxu0 %v2582
      %2588 = vmatprep.subr.mxu0 0.0
      %2589 = vmatpush1.msra.mxu0 %v2583
      %2590 = vmatprep.subr.mxu0 0.0
      %2591 = vmatpush1.msra.mxu0 %v2584
      %2592 = vmatprep.subr.mxu0 0.0
      %2593 = vmatpush1.msra.mxu0 %v2585
      %2594 = vmatprep.subr.mxu0 0.0
      %2595 = vmatpush1.msra.mxu0 0.0
      %2596 = vmatprep.subr.mxu0 0.0
      %2597 = vmatpush1.msra.mxu0 0.0
      %2598 = vmatprep.subr.mxu0 0.0
      %2599 = vmatpush1.msra.mxu0 0.0
      %2600 = vmatprep.subr.mxu0 0.0
      %2601 = vmatpush1.msra.mxu0 0.0
      %2602 = vmatprep.subr.mxu0 0.0
      %2603 = vmatpush1.msra.mxu0 0.0
      %2604 = vmatprep.subr.mxu0 0.0
      %2605 = vmatpush1.msra.mxu0 0.0
      %2606 = vmatprep.subr.mxu0 0.0
      %2607 = vmatpush1.msra.mxu0 0.0
      %2608 = vmatprep.subr.mxu0 0.0
      %2609 = vmatpush1.msra.mxu0 0.0
      %2610 = vmatprep.subr.mxu0 0.0
      %2611 = vmatpush1.msra.mxu0 0.0
      %2612 = vmatprep.subr.mxu0 0.0
      %2613 = vmatpush1.msra.mxu0 0.0
      %2614 = vmatprep.subr.mxu0 0.0
      %2615 = vmatpush1.msra.mxu0 0.0
      %2616 = vmatprep.subr.mxu0 0.0
      %2617 = vmatpush1.msra.mxu0 0.0
      %2618 = vmatprep.subr.mxu0 0.0
      %2619 = vmatpush1.msra.mxu0 0.0
      %2620 = vmatprep.subr.mxu0 0.0
      %2621 = vmatpush1.msra.mxu0 0.0
      %2622 = vmatprep.subr.mxu0 0.0
      %2623 = vmatpush1.msra.mxu0 0.0
      %2624 = vmatprep.subr.mxu0 0.0
      %2625 = vmatpush1.msra.mxu0 0.0
      %2626 = vmatprep.subr.mxu0 0.0
      %2627 = vmatpush1.msra.mxu0 0.0
      %2628 = vmatprep.subr.mxu0 0.0
      %2629 = vmatpush1.msra.mxu0 0.0
      %2630 = vmatprep.subr.mxu0 0.0
      %2631 = vmatpush1.msra.mxu0 0.0
      %2632 = vmatprep.subr.mxu0 0.0
      %2633 = vmatpush1.msra.mxu0 0.0
      %2634 = vmatprep.subr.mxu0 0.0
      %2635 = vmatpush1.msra.mxu0 0.0
      %2636 = vmatprep.subr.mxu0 0.0
      %2637 = vmatpush1.msra.mxu0 0.0
      %2638 = vmatprep.subr.mxu0 0.0
      %2639 = vmatpush1.msra.mxu0 0.0
      %2640 = vmatprep.subr.mxu0 0.0
      %2641 = vmatpush1.msra.mxu0 0.0
      %2642 = vmatprep.subr.mxu0 0.0
      %2643 = vmatpush1.msra.mxu0 0.0
      %2644 = vmatprep.subr.mxu0 0.0
      %2645 = vmatpush1.msra.mxu0 0.0
      %2646 = vmatprep.subr.mxu0 0.0
      %2647 = vmatpush1.msra.mxu0 0.0
      %2648 = vmatprep.subr.mxu0 0.0
      %2649 = vmatpush1.msra.mxu0 0.0
      %2650 = vmatprep.mubr.f32.mxu0 0.0
      %2651 = vmatmul.mubr.f32.gmra.mrb[0].mxu0 %v2392
      %v2652 = vpop.f32.mrb[0].mxu0
      %v2653 = vadd.f32 0.0, %v2652
      %v2654 = vpop.f32.mrb[0].mxu0
      %2655 = vdwg.mxu0
      %2657 = vrot.lane.b32.xlu0 %v2577, 96
      %v2658 = vpop.permute.xlu0 %2657
      %v2659 = vsel %vm98, %v2658, 0
      %2661 = vmatprep.subr.mxu0 0.0
      %2662 = vmatpush1.msra.mxu0 %v2578
      %2663 = vmatprep.subr.mxu0 0.0
      %2664 = vmatpush1.msra.mxu0 %v2579
      %2665 = vmatprep.subr.mxu0 0.0
      %2666 = vmatpush1.msra.mxu0 %v2580
      %2667 = vmatprep.subr.mxu0 0.0
      %2668 = vmatpush1.msra.mxu0 %v2581
      %2669 = vmatprep.subr.mxu0 0.0
      %2670 = vmatpush1.msra.mxu0 0.0
      %2671 = vmatprep.subr.mxu0 0.0
      %2672 = vmatpush1.msra.mxu0 0.0
      %2673 = vmatprep.subr.mxu0 0.0
      %2674 = vmatpush1.msra.mxu0 0.0
      %2675 = vmatprep.subr.mxu0 0.0
      %2676 = vmatpush1.msra.mxu0 0.0
      %2677 = vmatprep.subr.mxu0 0.0
      %2678 = vmatpush1.msra.mxu0 0.0
      %2679 = vmatprep.subr.mxu0 0.0
      %2680 = vmatpush1.msra.mxu0 0.0
      %2681 = vmatprep.subr.mxu0 0.0
      %2682 = vmatpush1.msra.mxu0 0.0
      %2683 = vmatprep.subr.mxu0 0.0
      %2684 = vmatpush1.msra.mxu0 0.0
      %2685 = vmatprep.subr.mxu0 0.0
      %2686 = vmatpush1.msra.mxu0 0.0
      %2687 = vmatprep.subr.mxu0 0.0
      %2688 = vmatpush1.msra.mxu0 0.0
      %2689 = vmatprep.subr.mxu0 0.0
      %2690 = vmatpush1.msra.mxu0 0.0
      %2691 = vmatprep.subr.mxu0 0.0
      %2692 = vmatpush1.msra.mxu0 0.0
      %2693 = vmatprep.subr.mxu0 0.0
      %2694 = vmatpush1.msra.mxu0 0.0
      %2695 = vmatprep.subr.mxu0 0.0
      %2696 = vmatpush1.msra.mxu0 0.0
      %2697 = vmatprep.subr.mxu0 0.0
      %2698 = vmatpush1.msra.mxu0 0.0
      %2699 = vmatprep.subr.mxu0 0.0
      %2700 = vmatpush1.msra.mxu0 0.0
      %2701 = vmatprep.subr.mxu0 0.0
      %2702 = vmatpush1.msra.mxu0 0.0
      %2703 = vmatprep.subr.mxu0 0.0
      %2704 = vmatpush1.msra.mxu0 0.0
      %2705 = vmatprep.subr.mxu0 0.0
      %2706 = vmatpush1.msra.mxu0 0.0
      %2707 = vmatprep.subr.mxu0 0.0
      %2708 = vmatpush1.msra.mxu0 0.0
      %2709 = vmatprep.subr.mxu0 0.0
      %2710 = vmatpush1.msra.mxu0 0.0
      %2711 = vmatprep.subr.mxu0 0.0
      %2712 = vmatpush1.msra.mxu0 0.0
      %2713 = vmatprep.subr.mxu0 0.0
      %2714 = vmatpush1.msra.mxu0 0.0
      %2715 = vmatprep.subr.mxu0 0.0
      %2716 = vmatpush1.msra.mxu0 0.0
      %2717 = vmatprep.subr.mxu0 0.0
      %2718 = vmatpush1.msra.mxu0 0.0
      %2719 = vmatprep.subr.mxu0 0.0
      %2720 = vmatpush1.msra.mxu0 0.0
      %2721 = vmatprep.subr.mxu0 0.0
      %2722 = vmatpush1.msra.mxu0 0.0
      %2723 = vmatprep.subr.mxu0 0.0
      %2724 = vmatpush1.msra.mxu0 0.0
      %2725 = vmatprep.mubr.f32.mxu0 0.0
      %2726 = vmatmul.mubr.f32.gmra.mrb[0].mxu0 %v2659
      %v2727 = vpop.f32.mrb[0].mxu0
      %v2728 = vadd.f32 %v2653, %v2727
      %v2729 = vpop.f32.mrb[0].mxu0
      %2730 = vdwg.mxu0
      %v2731 = vld [vmem:[%s19] sm:$0xff]
      %v2732 = vld [vmem:[%s19 + $0x8] sm:$0xff]
      %2733 = vmatprep.subr.mxu0 0.0
      %2734 = vmatpush1.msra.mxu0 %v2731
      %2735 = vmatprep.subr.mxu0 0.0
      %2736 = vmatpush1.msra.mxu0 %v2732
      %2737 = vmatprep.subr.mxu0 0.0
      %2738 = vmatpush1.msra.mxu0 0.0
      %2739 = vmatprep.subr.mxu0 0.0
      %2740 = vmatpush1.msra.mxu0 0.0
      %2741 = vmatprep.subr.mxu0 0.0
      %2742 = vmatpush1.msra.mxu0 0.0
      %2743 = vmatprep.subr.mxu0 0.0
      %2744 = vmatpush1.msra.mxu0 0.0
      %2745 = vmatprep.subr.mxu0 0.0
      %2746 = vmatpush1.msra.mxu0 0.0
      %2747 = vmatprep.subr.mxu0 0.0
      %2748 = vmatpush1.msra.mxu0 0.0
      %2749 = vmatprep.subr.mxu0 0.0
      %2750 = vmatpush1.msra.mxu0 0.0
      %2751 = vmatprep.subr.mxu0 0.0
      %2752 = vmatpush1.msra.mxu0 0.0
      %2753 = vmatprep.subr.mxu0 0.0
      %2754 = vmatpush1.msra.mxu0 0.0
      %2755 = vmatprep.subr.mxu0 0.0
      %2756 = vmatpush1.msra.mxu0 0.0
      %2757 = vmatprep.subr.mxu0 0.0
      %2758 = vmatpush1.msra.mxu0 0.0
      %2759 = vmatprep.subr.mxu0 0.0
      %2760 = vmatpush1.msra.mxu0 0.0
      %2761 = vmatprep.subr.mxu0 0.0
      %2762 = vmatpush1.msra.mxu0 0.0
      %2763 = vmatprep.subr.mxu0 0.0
      %2764 = vmatpush1.msra.mxu0 0.0
      %2765 = vmatprep.subr.mxu0 0.0
      %2766 = vmatpush1.msra.mxu0 0.0
      %2767 = vmatprep.subr.mxu0 0.0
      %2768 = vmatpush1.msra.mxu0 0.0
      %2769 = vmatprep.subr.mxu0 0.0
      %2770 = vmatpush1.msra.mxu0 0.0
      %2771 = vmatprep.subr.mxu0 0.0
      %2772 = vmatpush1.msra.mxu0 0.0
      %2773 = vmatprep.subr.mxu0 0.0
      %2774 = vmatpush1.msra.mxu0 0.0
      %2775 = vmatprep.subr.mxu0 0.0
      %2776 = vmatpush1.msra.mxu0 0.0
      %2777 = vmatprep.subr.mxu0 0.0
      %2778 = vmatpush1.msra.mxu0 0.0
      %2779 = vmatprep.subr.mxu0 0.0
      %2780 = vmatpush1.msra.mxu0 0.0
      %2781 = vmatprep.subr.mxu0 0.0
      %2782 = vmatpush1.msra.mxu0 0.0
      %2783 = vmatprep.subr.mxu0 0.0
      %2784 = vmatpush1.msra.mxu0 0.0
      %2785 = vmatprep.subr.mxu0 0.0
      %2786 = vmatpush1.msra.mxu0 0.0
      %2787 = vmatprep.subr.mxu0 0.0
      %2788 = vmatpush1.msra.mxu0 0.0
      %2789 = vmatprep.subr.mxu0 0.0
      %2790 = vmatpush1.msra.mxu0 0.0
      %2791 = vmatprep.subr.mxu0 0.0
      %2792 = vmatpush1.msra.mxu0 0.0
      %2793 = vmatprep.subr.mxu0 0.0
      %2794 = vmatpush1.msra.mxu0 0.0
      %2795 = vmatprep.subr.mxu0 0.0
      %2796 = vmatpush1.msra.mxu0 0.0
      %2797 = vmatprep.mubr.f32.mxu0 0.0
      %2798 = vmatmul.mubr.f32.gmra.mrb[0].mxu0 %v2466
      %v2799 = vpop.f32.mrb[0].mxu0
      %v2800 = vadd.f32 0.0, %v2799
      %v2801 = vpop.f32.mrb[0].mxu0
      %2802 = vdwg.mxu0
      %v2803 = vadd.f32 %v2728, %v2800
      %v2804 = vld [vmem:[%s20] sm:$0x1]
      %v2806 = vlaneseq
      %v2807 = vshrl.u32 %v2806, 7
      %v2808 = vsub.s32 0, %v2807
      %v2809 = vrot.slane %v2804, %v2808
      %v2811 = vadd.f32 %v2803, %v2809
      %s2812 = smul.u32 %s1824, 2
      %s2813 = scalar_lea.vmem [#allocation7], %s2812
      %2814 = vst.msk [vmem:[%s2813] sm:$0x3] %vm1776, %v2811
      %v2815 = vsel %vm1776, %v2811, -inf
      %2816 = vmax.xlane.f32.xlu0 %v2815
      %v2817 = vpop.xlane.xlu0 %2816
      %vm2818 = vcmp.ge.f32.partialorder %v2811, %v2817
      %v2819 = vsel %vm2818, %v89, 18
      %v2820 = vsel %vm1776, %v2819, 2147483647
      %v2821 = vand.u32 %v2820, 65535
      %v2822 = vshra.s32 %v2820, 16
      %v2823 = vcvt.s32.f32 %v2821
      %v2824 = vcvt.s32.f32 %v2822
      %2825 = vmin.xlane.f32.xlu0 %v2824
      %v2826 = vpop.xlane.xlu0 %2825
      %vm2827 = vcmp.eq.f32.partialorder %v2824, %v2826
      %v2828 = vsel %vm2827, %v2823, inf
      %2829 = vmin.xlane.f32.xlu0 %v2828
      %v2830 = vpop.xlane.xlu0 %2829
      %v2831 = vcvt.f32.s32 %v2830
      %v2832 = vcvt.f32.s32 %v2826
      %v2833 = vshll.u32 %v2832, 16
      %v2834 = vadd.s32 %v2833, %v2831
      %vm2835 = vcmp.eq.s32.totalorder %v89, %v2834
      %v2836 = vsel %vm2835, 1, 0
      %v2837 = vcvt.s32.f32 %v2836
      %s2838 = sld [smem:[#allocation4 + %s1824]]
      %p2839 = scmp.gt.s32.totalorder %s2838, 0
      %s2840 = scalar_select %p2839, 1, 0
      %s2841 = scvt.s32.f32 %s2840
      %s2842 = scalar_lea.vmem %s7, %s2812
      %v2843 = vld [vmem:[%s2842] sm:$0x3]
      %v2844 = vstv %s2841
      %v2845 = vmul.f32 %v2844, %v2843
      %s2846 = ssub.f32 1.0, %s2841
      %v2847 = vstv %s2846
      %v2848 = vmul.f32 %v2847, %v2837
      %v2849 = vadd.f32 %v2845, %v2848
    $region94: #{seq2seq_forward.1} parent=1 // loop_footer
      %s1828 = sadd.s32 1, %s1824
    $region95: #{seq2seq_forward.1} parent=1 // loop_footer_branch
      %1823 = sbr.rel target = $region91
    $region96: #{seq2seq_forward.1} parent=1 // loop_exit
      _
    // Predicated region
    $region97: #{seq2seq_forward.1} parent=1 // pred_check
      _
    $region98: #{seq2seq_forward.1} parent=1 // pred_check_branch
      %2852 = sbr.rel (0) target = $region100
    $region99: #{seq2seq_forward.1} parent=1 // pred_region
      %s2854 = ssub.s32 192, 192
      %2855 = vsyncadd [#allocation5], %s2854
      %s2856 = sshll.u32 [#allocation7], 4
      %s2857 = int_to_ptr.vmem [resolvable:$true] %s2856
      %2862 = dma.vmem_to_hbm [thread:$0]  %s2857, 192, %s21, [#allocation5], 32, 32, 2
    $region100: #{seq2seq_forward.1} parent=1 // pred_fallthru
      _
    // Predicated region
    $region101: #{seq2seq_forward.1} parent=1 // pred_check
      _
    $region102: #{seq2seq_forward.1} parent=1 // pred_check_branch
      %2864 = sbr.rel (0) target = $region104
    $region103: #{seq2seq_forward.1} parent=1 // pred_region
      %2865 = dma.done [#allocation5], 192
    $region104: #{seq2seq_forward.1} parent=1 // pred_fallthru
      _
    %2866 = vsyncpa [#allocation5], 1
    %2867 = vsyncpa [#allocation6], 1

</llo_original>
